<compile_context>
chip_gen: v7x
topology: tpu7x:2x2x1
jax: 0.10.0
libtpu: 0.0.40
codegen_flags: <defaults>
</compile_context>

<pallas_src>
import functools
import math

import jax
import jax.numpy as jnp
from jax.experimental import pallas as pl
from jax.experimental.pallas import tpu as pltpu


def _round_up(x, m):
    return (x + m - 1) // m * m


# ---------------------------------------------------------------------------
# Hardware / sizing helpers
# ---------------------------------------------------------------------------
def _vmem_capacity_bytes():
    """Per-core VMEM capacity; falls back to the smallest current part (v7x)."""
    try:
        info = pltpu.get_tpu_info()
        cap = int(getattr(info, "vmem_capacity_bytes", 0) or 0)
        if cap > 0:
            return cap
    except Exception:
        pass
    return 64 * 1024 * 1024


def _vmem_tile_bytes(shape, dtype):
    """Approximate VMEM footprint of one buffered block ((8,128) tiling)."""
    dt = jnp.dtype(dtype)
    shape = tuple(int(d) for d in shape)
    if len(shape) == 1:
        shape = (1,) + shape
    lead = 1
    for d in shape[:-2]:
        lead *= d
    sub, lane = shape[-2], shape[-1]
    pack = max(1, 4 // dt.itemsize)          # sub-32-bit dtypes pack sublanes
    return lead * _round_up(sub, 8 * pack) * _round_up(lane, 128) * dt.itemsize


def _estimate_compute_temps(TOH, OW, C, KH, KW, OCp, cdt, fuse_taps):
    m = TOH * OW
    acc = 2 * _vmem_tile_bytes((m, OCp), jnp.float32)
    if fuse_taps:
        lhs = 2 * _vmem_tile_bytes((m, KH * KW * C), cdt)
    else:
        lhs = 2 * _vmem_tile_bytes((m, C), cdt)
    return acc + lhs + (1 << 20)             # +1 MiB slack for compiler scratch


def _estimate_vmem_image(Hp, Wp, C, KH, KW, OCp, TOH, OW, cdt, fuse_taps):
    est = 2 * _vmem_tile_bytes((1, Hp, Wp, C), cdt)           # x, double buffered
    est += 2 * _vmem_tile_bytes((KH * KW, C, OCp), cdt)       # weights
    est += 2 * _vmem_tile_bytes((1, OCp), jnp.float32)        # bias
    est += 2 * _vmem_tile_bytes((TOH, OW, OCp), jnp.float32)  # out block
    est += _estimate_compute_temps(TOH, OW, C, KH, KW, OCp, cdt, fuse_taps)
    return est


def _estimate_vmem_slab(HS, Wp, C, KH, KW, OCp, TOH, OW, cdt, fuse_taps):
    est = 2 * _vmem_tile_bytes((HS, Wp, C), cdt)              # manual slab buffers
    est += 2 * _vmem_tile_bytes((KH * KW, C, OCp), cdt)
    est += 2 * _vmem_tile_bytes((1, OCp), jnp.float32)
    est += 2 * _vmem_tile_bytes((TOH, OW, OCp), jnp.float32)
    est += _estimate_compute_temps(TOH, OW, C, KH, KW, OCp, cdt, fuse_taps)
    return est


def _vmem_limit_for(est, cap):
    """Never set the scoped limit below what the kernel needs."""
    if est <= 12 * 1024 * 1024:
        return None                                           # default is enough
    return int(min(max(int(est * 1.5), 32 * 1024 * 1024), cap - 2 * 1024 * 1024))


def _pick_toh(N, OH, OW, OCp, *, budget_bytes=512 * 1024):
    """Output-row tile height: TOH | OH, f32 out tile <= ~512 KiB, TOH*OW
    sublane aligned when possible, and >= 2 total grid steps (v7x has 2 TCs)."""
    divs = [t for t in range(1, OH + 1) if OH % t == 0]

    def best(cands):
        fit = [t for t in cands if t * OW * OCp * 4 <= budget_bytes]
        if not fit:
            return min(cands)
        aligned = [t for t in fit if (t * OW) % 8 == 0]
        return max(aligned) if aligned else max(fit)

    toh = best(divs)
    if N * (OH // toh) < 2 and OH > 1:
        halves = [t for t in divs if t <= OH // 2]
        if halves:
            toh = best(halves)
    return toh


# ---------------------------------------------------------------------------
# Shared in-kernel compute: fused im2col taps -> MXU matmul(s) -> bias -> out.
# No VMEM accumulator: partials live in SSA values, o_ref is written once.
# ---------------------------------------------------------------------------
def _conv_body(get_tap, w_ref, b_ref, o_ref, *, KH, KW, fuse_taps):
    _, TOH, OW, OCp = o_ref.shape
    C = w_ref.shape[1]
    M = TOH * OW
    if fuse_taps:
        # C is lane aligned: concatenating the taps along the lane dim is a
        # cheap 128-aligned block concat -> ONE matmul with K = KH*KW*C.
        taps = [get_tap(kh, kw) for kh in range(KH) for kw in range(KW)]
        lhs = jnp.concatenate(taps, axis=-1).reshape(M, KH * KW * C)
        acc = jnp.dot(lhs, w_ref[...].reshape(KH * KW * C, OCp),
                      preferred_element_type=jnp.float32)
        acc = acc + b_ref[...]
    else:
        # Small / unaligned C: per-tap K=C matmuls, accumulated in SSA values
        # (no per-tap VMEM read-modify-write), bias folded into the init.
        acc = jnp.broadcast_to(b_ref[...], (M, OCp)).astype(jnp.float32)
        for kh in range(KH):
            for kw in range(KW):
                xs = get_tap(kh, kw).reshape(M, C)
                acc = acc + jnp.dot(xs, w_ref[kh * KW + kw],
                                    preferred_element_type=jnp.float32)
    # Output stays f32 for parity with the PyTorch module (could be the
    # compute dtype if the consumer accepts it, halving writeback bytes).
    o_ref[...] = acc.reshape(1, TOH, OW, OCp).astype(o_ref.dtype)


# ---------------------------------------------------------------------------
# Variant A: whole padded image resident in VMEM (BlockSpec auto-pipelined).
# ---------------------------------------------------------------------------
def _image_conv_kernel(x_ref, w_ref, b_ref, o_ref, *, KH, KW, fuse_taps):
    TOH, OW = o_ref.shape[1], o_ref.shape[2]
    j = pl.program_id(1)
    h0 = pl.multiple_of(j * TOH, TOH)

    def get_tap(kh, kw):
        return x_ref[0, pl.ds(h0 + kh, TOH), pl.ds(kw, OW), :]

    _conv_body(get_tap, w_ref, b_ref, o_ref, KH=KH, KW=KW, fuse_taps=fuse_taps)


def _fused_conv_image(xp, w_taps, b, *, KH, KW, OH, OW, TOH, fuse_taps,
                      vmem_limit):
    N, Hp, Wp, C = xp.shape
    OCp = w_taps.shape[-1]
    kernel = functools.partial(_image_conv_kernel, KH=KH, KW=KW,
                               fuse_taps=fuse_taps)
    cp = dict(dimension_semantics=("parallel", "parallel"))
    if vmem_limit is not None:
        cp["vmem_limit_bytes"] = int(vmem_limit)
    bytes_accessed = int(xp.size * xp.dtype.itemsize
                         + w_taps.size * w_taps.dtype.itemsize
                         + b.size * 4 + N * OH * OW * OCp * 4)
    return pl.pallas_call(
        kernel,
        out_shape=jax.ShapeDtypeStruct((N, OH, OW, OCp), jnp.float32),
        grid_spec=pltpu.PrefetchScalarGridSpec(
            num_scalar_prefetch=0,
            grid=(N, OH // TOH),
            in_specs=[
                pl.BlockSpec((1, Hp, Wp, C), lambda n, j: (n, 0, 0, 0)),
                pl.BlockSpec((KH * KW, C, OCp), lambda n, j: (0, 0, 0)),
                pl.BlockSpec((1, OCp), lambda n, j: (0, 0)),
            ],
            out_specs=pl.BlockSpec((1, TOH, OW, OCp), lambda n, j: (n, j, 0, 0)),
        ),
        compiler_params=pltpu.CompilerParams(**cp),
        cost_estimate=pl.CostEstimate(
            flops=int(2 * N * OH * OW * KH * KW * C * OCp),
            transcendentals=0, bytes_accessed=bytes_accessed),
    )(xp, w_taps, b)


# ---------------------------------------------------------------------------
# Variant B: x stays in HBM; output-row slabs (with KH-1 halo) are fetched
# with manual, double-buffered DMAs.  Used when the image does not fit VMEM.
# ---------------------------------------------------------------------------
def _slab_conv_kernel(x_hbm, w_ref, b_ref, o_ref, xbuf, sem, *, KH, KW,
                      fuse_taps):
    TOH, OW = o_ref.shape[1], o_ref.shape[2]
    HS = xbuf.shape[1]
    n = pl.program_id(0)
    j = pl.program_id(1)
    nj = pl.num_programs(1)
    slot = j % 2

    def slab_copy(jj, s):
        return pltpu.make_async_copy(x_hbm.at[n, pl.ds(jj * TOH, HS)],
                                     xbuf.at[s], sem.at[s])

    @pl.when(j == 0)                 # prime the pipeline once per image
    def _():
        slab_copy(0, 0).start()

    slab_copy(j, slot).wait()        # slab for this step

    @pl.when(j + 1 < nj)             # prefetch the next slab of the same image
    def _():
        slab_copy(j + 1, 1 - slot).start()

    def get_tap(kh, kw):
        return xbuf[slot, pl.ds(kh, TOH), pl.ds(kw, OW), :]

    _conv_body(get_tap, w_ref, b_ref, o_ref, KH=KH, KW=KW, fuse_taps=fuse_taps)


def _fused_conv_slab(xp, w_taps, b, *, KH, KW, OH, OW, TOH, fuse_taps,
                     vmem_limit):
    N, Hp, Wp, C = xp.shape
    OCp = w_taps.shape[-1]
    HS = TOH + KH - 1
    kernel = functools.partial(_slab_conv_kernel, KH=KH, KW=KW,
                               fuse_taps=fuse_taps)
    cp = dict(dimension_semantics=("parallel", "arbitrary"))
    if vmem_limit is not None:
        cp["vmem_limit_bytes"] = int(vmem_limit)
    bytes_accessed = int(xp.size * xp.dtype.itemsize
                         + w_taps.size * w_taps.dtype.itemsize
                         + b.size * 4 + N * OH * OW * OCp * 4)
    return pl.pallas_call(
        kernel,
        out_shape=jax.ShapeDtypeStruct((N, OH, OW, OCp), jnp.float32),
        grid_spec=pltpu.PrefetchScalarGridSpec(
            num_scalar_prefetch=0,
            grid=(N, OH // TOH),
            in_specs=[
                pl.BlockSpec(memory_space=pl.ANY),   # x stays in HBM
                pl.BlockSpec((KH * KW, C, OCp), lambda n, j: (0, 0, 0)),
                pl.BlockSpec((1, OCp), lambda n, j: (0, 0)),
            ],
            out_specs=pl.BlockSpec((1, TOH, OW, OCp), lambda n, j: (n, j, 0, 0)),
            scratch_shapes=[pltpu.VMEM((2, HS, Wp, C), xp.dtype),
                            pltpu.SemaphoreType.DMA((2,))],
        ),
        compiler_params=pltpu.CompilerParams(**cp),
        cost_estimate=pl.CostEstimate(
            flops=int(2 * N * OH * OW * KH * KW * C * OCp),
            transcendentals=0, bytes_accessed=bytes_accessed),
    )(xp, w_taps, b)


# ---------------------------------------------------------------------------
# Fallback for stride != 1: XLA im2col + tiled Pallas matmul (K-tiled when big).
# ---------------------------------------------------------------------------
def _matmul_bias_kernel(a_ref, b_ref, bias_ref, o_ref, acc_ref):
    k = pl.program_id(1)

    @pl.when(k == 0)
    def _():
        acc_ref[...] = jnp.broadcast_to(bias_ref[...],
                                        acc_ref.shape).astype(jnp.float32)

    acc_ref[...] += jnp.dot(a_ref[...], b_ref[...],
                            preferred_element_type=jnp.float32)

    @pl.when(k == pl.num_programs(1) - 1)
    def _():
        o_ref[...] = acc_ref[...].astype(o_ref.dtype)


def _pallas_matmul_bias(a, b, bias2d, *, vmem_cap):
    """a:(M,K) @ b:(K,Np) + bias:(1,Np) -> (M,Np) float32.  Np is lane dense."""
    M, K = a.shape
    Np = b.shape[1]
    it = a.dtype.itemsize

    if M <= 1024:
        tm, Mp = M, M
    else:
        tm = 512
        Mp = _round_up(M, tm)
        if Mp != M:
            a = jnp.pad(a, ((0, Mp - M), (0, 0)))

    # Keep K whole while the resident tiles stay well under the VMEM budget,
    # otherwise add a K reduction axis (important on v7x's 64 MiB VMEM).
    if K <= 2048 or 2 * (tm + Np) * K * it <= vmem_cap // 3:
        tk, Kp = K, K
    else:
        tk = 512
        Kp = _round_up(K, tk)
        if Kp != K:
            a = jnp.pad(a, ((0, 0), (0, Kp - K)))
            b = jnp.pad(b, ((0, Kp - K), (0, 0)))

    out = pl.pallas_call(
        _matmul_bias_kernel,
        out_shape=jax.ShapeDtypeStruct((Mp, Np), jnp.float32),
        grid_spec=pltpu.PrefetchScalarGridSpec(
            num_scalar_prefetch=0,
            grid=(Mp // tm, Kp // tk),
            in_specs=[
                pl.BlockSpec((tm, tk), lambda i, k: (i, k)),
                pl.BlockSpec((tk, Np), lambda i, k: (k, 0)),
                pl.BlockSpec((1, Np), lambda i, k: (0, 0)),
            ],
            out_specs=pl.BlockSpec((tm, Np), lambda i, k: (i, 0)),
            scratch_shapes=[pltpu.VMEM((tm, Np), jnp.float32)],
        ),
        compiler_params=pltpu.CompilerParams(
            dimension_semantics=("parallel", "arbitrary")),
        cost_estimate=pl.CostEstimate(
            flops=int(2 * Mp * Kp * Np), transcendentals=0,
            bytes_accessed=int(a.size * it + b.size * it + Mp * Np * 4)),
    )(a, b, bias2d)
    return out[:M] if Mp != M else out


# ---------------------------------------------------------------------------
# Forward pass
# ---------------------------------------------------------------------------
@functools.partial(jax.jit, static_argnames=("scale", "stride", "padding",
                                              "compute_dtype", "force_path"))
def _equal_conv2d_forward(x, weight, bias, *, scale, stride, padding,
                          compute_dtype, force_path=None):
    N, C, H, W = x.shape
    OC, IC, KH, KW = weight.shape
    assert C == IC, (C, IC)
    s, p = stride, padding
    OH = (H + 2 * p - KH) // s + 1
    OW = (W + 2 * p - KW) // s + 1
    OCp = _round_up(OC, 128)                  # lane-dense output channels
    cdt = jnp.dtype(compute_dtype)

    # NCHW -> NHWC once, cast to compute dtype, pad spatially.
    # TODO(synk): in an NHWC model chain these transposes / the spatial pad /
    # the final transpose back to NCHW would be dropped or fused into the
    # kernel; kept here for API parity with the PyTorch module.
    xp = jnp.transpose(x, (0, 2, 3, 1)).astype(cdt)
    if p:
        xp = jnp.pad(xp, ((0, 0), (p, p), (p, p), (0, 0)))
    Hp, Wp = H + 2 * p, W + 2 * p

    # Scaled weight, tap-major (KH*KW, C, OCp): row (kh*KW+kw, c) matches the
    # lane order of the in-kernel im2col.
    w = (weight * scale).astype(cdt)                          # (OC, C, KH, KW)
    w_taps = jnp.transpose(w, (2, 3, 1, 0)).reshape(KH * KW, C, OC)
    w_taps = jnp.pad(w_taps, ((0, 0), (0, 0), (0, OCp - OC)))
    b = bias if bias is not None else jnp.zeros((OC,), jnp.float32)
    b = jnp.pad(b.astype(jnp.float32), (0, OCp - OC)).reshape(1, OCp)

    cap = _vmem_capacity_bytes()
    fuse_taps = (C % 128 == 0)                # aligned lane concat -> one matmul

    path = force_path
    if s != 1:
        path = "im2col"

    TOH = 1
    est_image = est_slab = 0
    if path is None or path in ("image", "slab"):
        TOH = _pick_toh(N, OH, OW, OCp)
        est_image = _estimate_vmem_image(Hp, Wp, C, KH, KW, OCp, TOH, OW,
                                         cdt, fuse_taps)
        est_slab = _estimate_vmem_slab(TOH + KH - 1, Wp, C, KH, KW, OCp, TOH,
                                       OW, cdt, fuse_taps)
        if path is None:
            if est_image <= int(0.7 * cap):
                path = "image"
            elif est_slab <= int(0.7 * cap):
                path = "slab"
            else:
                path = "im2col"

    if path == "image":
        out = _fused_conv_image(
            xp, w_taps, b, KH=KH, KW=KW, OH=OH, OW=OW, TOH=TOH,
            fuse_taps=fuse_taps, vmem_limit=_vmem_limit_for(est_image, cap))
    elif path == "slab":
        out = _fused_conv_slab(
            xp, w_taps, b, KH=KH, KW=KW, OH=OH, OW=OW, TOH=TOH,
            fuse_taps=fuse_taps, vmem_limit=_vmem_limit_for(est_slab, cap))
    else:
        # TODO(synk): stride > 1 could use the fused path with strided slices.
        cols = [xp[:, kh:kh + (OH - 1) * s + 1:s, kw:kw + (OW - 1) * s + 1:s, :]
                for kh in range(KH) for kw in range(KW)]
        a2 = jnp.concatenate(cols, axis=-1).reshape(N * OH * OW, KH * KW * C)
        out = _pallas_matmul_bias(a2, w_taps.reshape(KH * KW * C, OCp), b,
                                  vmem_cap=cap)
        out = out.reshape(N, OH, OW, OCp)

    return jnp.transpose(out[..., :OC], (0, 3, 1, 2)).astype(x.dtype)


class EqualConv2d:
    """JAX/Pallas re-implementation of the PyTorch EqualConv2d forward pass."""

    def __init__(self, in_channel, out_channel, kernel_size, stride=1,
                 padding=0, bias=True, *, key, compute_dtype=jnp.float32):
        # nn.Parameter(torch.randn(...)) -> deterministic normal init here.
        self.weight = jax.random.normal(
            key, (out_channel, in_channel, kernel_size, kernel_size),
            dtype=jnp.float32)
        self.scale = 1.0 / math.sqrt(in_channel * kernel_size ** 2)
        self.stride = stride
        self.padding = padding
        self.bias = jnp.zeros((out_channel,), jnp.float32) if bias else None
        # bf16 compute (f32 accumulation) is the fast path on v5e/v6e/v7x MXUs;
        # f32 (default) keeps exact numerical parity with the PyTorch module.
        self.compute_dtype = compute_dtype

    def __call__(self, x, *, force_path=None):
        return _equal_conv2d_forward(
            x, self.weight, self.bias, scale=self.scale, stride=self.stride,
            padding=self.padding, compute_dtype=self.compute_dtype,
            force_path=force_path)


if __name__ == "__main__":
    root = jax.random.PRNGKey(0)

    def reference(x, conv):
        out = jax.lax.conv_general_dilated(
            x, conv.weight * conv.scale,
            window_strides=(conv.stride, conv.stride),
            padding=[(conv.padding, conv.padding)] * 2,
            dimension_numbers=("NCHW", "OIHW", "NCHW"),
            precision=jax.lax.Precision.HIGHEST)
        if conv.bias is not None:
            out = out + conv.bias[None, :, None, None]
        return jax.block_until_ready(out)

    def check(name, got, want, atol, rtol):
        got = jax.block_until_ready(got)
        assert got.shape == want.shape, (name, got.shape, want.shape)
        got32 = got.astype(jnp.float32)
        err = float(jnp.max(jnp.abs(got32 - want)))
        assert jnp.allclose(got32, want, atol=atol, rtol=rtol), (name, err)

    # 1) Main case: 3x3, stride 1, pad 1, small C (per-tap branch, image path).
    k_w, k_x = jax.random.split(root)
    x = jax.random.normal(k_x, (2, 4, 16, 16), dtype=jnp.float32)
    conv = EqualConv2d(4, 8, 3, stride=1, padding=1, bias=True, key=k_w)
    check("f32/image", conv(x), reference(x, conv), 1e-3, 1e-3)

    # 2) Same module with bf16 compute (f32 accumulation).
    conv_bf16 = EqualConv2d(4, 8, 3, stride=1, padding=1, bias=True, key=k_w,
                            compute_dtype=jnp.bfloat16)
    check("bf16/image", conv_bf16(x), reference(x, conv), 6e-2, 6e-2)

    # 3) Row-slab (halo) variant with manual double-buffered DMA, forced so the
    #    small test image exercises the multi-slab prime/prefetch chain.
    k_w3, k_x3 = jax.random.split(jax.random.fold_in(root, 3))
    x3 = jax.random.normal(k_x3, (1, 4, 32, 16), dtype=jnp.float32)
    conv3 = EqualConv2d(4, 8, 3, stride=1, padding=1, bias=True, key=k_w3)
    check("f32/slab", conv3(x3, force_path="slab"), reference(x3, conv3),
          1e-3, 1e-3)

    # 4) Lane-aligned C: single fused-K (K = KH*KW*C) matmul branch.
    k_w4, k_x4 = jax.random.split(jax.random.fold_in(root, 4))
    x4 = jax.random.normal(k_x4, (1, 128, 8, 8), dtype=jnp.float32)
    conv4 = EqualConv2d(128, 16, 3, stride=1, padding=1, bias=True, key=k_w4)
    check("f32/fusedK", conv4(x4), reference(x4, conv4), 2e-3, 2e-3)

    # 5) stride=2, bias=False -> im2col + Pallas matmul fallback.
    k_w5, k_x5 = jax.random.split(jax.random.fold_in(root, 5))
    x5 = jax.random.normal(k_x5, (2, 4, 16, 16), dtype=jnp.float32)
    conv5 = EqualConv2d(4, 8, 3, stride=2, padding=1, bias=False, key=k_w5)
    check("f32/stride2", conv5(x5), reference(x5, conv5), 1e-3, 1e-3)

    print("KERNEL_OK")
</pallas_src>

<mosaic_0001>
module attributes {stable_mosaic.version = 11 : i64} {
  func.func @_image_conv_kernel(%arg0: i32, %arg1: i32, %arg2: memref<1x18x18x4xf32, #tpu.memory_space<vmem>>, %arg3: memref<9x4x128xf32, #tpu.memory_space<vmem>>, %arg4: memref<1x128xf32, #tpu.memory_space<vmem>>, %arg5: memref<1x16x16x128xf32, #tpu.memory_space<vmem>>) attributes {dimension_semantics = [#tpu.dimension_semantics<parallel>, #tpu.dimension_semantics<parallel>], iteration_bounds = array<i64: 2, 1>, scalar_prefetch = 0 : i64, scratch_operands = 0 : i64, tpu.core_type = #tpu.core_type<tc>, window_params = [{transform_indices = @transform_0, window_bounds = array<i64: 1, 18, 18, 4>}, {pipeline_mode = #tpu.pipeline_mode<synchronous>, transform_indices = @transform_1, window_bounds = array<i64: 9, 4, 128>}, {pipeline_mode = #tpu.pipeline_mode<synchronous>, transform_indices = @transform_2, window_bounds = array<i64: 1, 128>}, {transform_indices = @transform_3, window_bounds = array<i64: 1, 16, 16, 128>}]} {
    %c16_i32 = arith.constant 16 : i32
    %0 = arith.muli %arg1, %c16_i32 : i32
    %1 = tpu.assume_multiple %0, 16 : i32
    %c0 = arith.constant 0 : index
    %c0_0 = arith.constant 0 : index
    %2 = vector.load %arg4[%c0, %c0_0] : memref<1x128xf32, #tpu.memory_space<vmem>>, vector<1x128xf32>
    %3 = vector.shape_cast %2 : vector<1x128xf32> to vector<1x128xf32>
    %4 = vector.broadcast %3 : vector<1x128xf32> to vector<256x128xf32>
    %c0_i32 = arith.constant 0 : i32
    %5 = arith.addi %1, %c0_i32 : i32
    %c0_1 = arith.constant 0 : index
    %6 = arith.index_cast %5 : i32 to index
    %c0_2 = arith.constant 0 : index
    %c0_3 = arith.constant 0 : index
    %7 = vector.load %arg2[%c0_1, %6, %c0_2, %c0_3] : memref<1x18x18x4xf32, #tpu.memory_space<vmem>>, vector<1x16x16x4xf32>
    %8 = vector.shape_cast %7 : vector<1x16x16x4xf32> to vector<16x16x4xf32>
    %9 = vector.shape_cast %8 : vector<16x16x4xf32> to vector<256x4xf32>
    %c0_4 = arith.constant 0 : index
    %c0_5 = arith.constant 0 : index
    %c0_6 = arith.constant 0 : index
    %10 = vector.load %arg3[%c0_4, %c0_5, %c0_6] : memref<9x4x128xf32, #tpu.memory_space<vmem>>, vector<1x4x128xf32>
    %11 = vector.shape_cast %10 : vector<1x4x128xf32> to vector<4x128xf32>
    %cst = arith.constant dense<0.000000e+00> : vector<256x128xf32>
    %12 = tpu.matmul %9, %11, %cst {dimension_numbers = #tpu.dot_dimension_numbers<[1], [0], [0], [1], [0, 0, 1, 1], [], []>} : vector<256x4xf32>, vector<4x128xf32>, vector<256x128xf32> -> vector<256x128xf32>
    %13 = arith.addf %4, %12 : vector<256x128xf32>
    %c0_i32_7 = arith.constant 0 : i32
    %14 = arith.addi %1, %c0_i32_7 : i32
    %c0_8 = arith.constant 0 : index
    %15 = arith.index_cast %14 : i32 to index
    %c1 = arith.constant 1 : index
    %c0_9 = arith.constant 0 : index
    %16 = vector.load %arg2[%c0_8, %15, %c1, %c0_9] : memref<1x18x18x4xf32, #tpu.memory_space<vmem>>, vector<1x16x16x4xf32>
    %17 = vector.shape_cast %16 : vector<1x16x16x4xf32> to vector<16x16x4xf32>
    %18 = vector.shape_cast %17 : vector<16x16x4xf32> to vector<256x4xf32>
    %c1_10 = arith.constant 1 : index
    %c0_11 = arith.constant 0 : index
    %c0_12 = arith.constant 0 : index
    %19 = vector.load %arg3[%c1_10, %c0_11, %c0_12] : memref<9x4x128xf32, #tpu.memory_space<vmem>>, vector<1x4x128xf32>
    %20 = vector.shape_cast %19 : vector<1x4x128xf32> to vector<4x128xf32>
    %cst_13 = arith.constant dense<0.000000e+00> : vector<256x128xf32>
    %21 = tpu.matmul %18, %20, %cst_13 {dimension_numbers = #tpu.dot_dimension_numbers<[1], [0], [0], [1], [0, 0, 1, 1], [], []>} : vector<256x4xf32>, vector<4x128xf32>, vector<256x128xf32> -> vector<256x128xf32>
    %22 = arith.addf %13, %21 : vector<256x128xf32>
    %c0_i32_14 = arith.constant 0 : i32
    %23 = arith.addi %1, %c0_i32_14 : i32
    %c0_15 = arith.constant 0 : index
    %24 = arith.index_cast %23 : i32 to index
    %c2 = arith.constant 2 : index
    %c0_16 = arith.constant 0 : index
    %25 = vector.load %arg2[%c0_15, %24, %c2, %c0_16] : memref<1x18x18x4xf32, #tpu.memory_space<vmem>>, vector<1x16x16x4xf32>
    %26 = vector.shape_cast %25 : vector<1x16x16x4xf32> to vector<16x16x4xf32>
    %27 = vector.shape_cast %26 : vector<16x16x4xf32> to vector<256x4xf32>
    %c2_17 = arith.constant 2 : index
    %c0_18 = arith.constant 0 : index
    %c0_19 = arith.constant 0 : index
    %28 = vector.load %arg3[%c2_17, %c0_18, %c0_19] : memref<9x4x128xf32, #tpu.memory_space<vmem>>, vector<1x4x128xf32>
    %29 = vector.shape_cast %28 : vector<1x4x128xf32> to vector<4x128xf32>
    %cst_20 = arith.constant dense<0.000000e+00> : vector<256x128xf32>
    %30 = tpu.matmul %27, %29, %cst_20 {dimension_numbers = #tpu.dot_dimension_numbers<[1], [0], [0], [1], [0, 0, 1, 1], [], []>} : vector<256x4xf32>, vector<4x128xf32>, vector<256x128xf32> -> vector<256x128xf32>
    %31 = arith.addf %22, %30 : vector<256x128xf32>
    %c1_i32 = arith.constant 1 : i32
    %32 = arith.addi %1, %c1_i32 : i32
    %c0_21 = arith.constant 0 : index
    %33 = arith.index_cast %32 : i32 to index
    %c0_22 = arith.constant 0 : index
    %c0_23 = arith.constant 0 : index
    %34 = vector.load %arg2[%c0_21, %33, %c0_22, %c0_23] : memref<1x18x18x4xf32, #tpu.memory_space<vmem>>, vector<1x16x16x4xf32>
    %35 = vector.shape_cast %34 : vector<1x16x16x4xf32> to vector<16x16x4xf32>
    %36 = vector.shape_cast %35 : vector<16x16x4xf32> to vector<256x4xf32>
    %c3 = arith.constant 3 : index
    %c0_24 = arith.constant 0 : index
    %c0_25 = arith.constant 0 : index
    %37 = vector.load %arg3[%c3, %c0_24, %c0_25] : memref<9x4x128xf32, #tpu.memory_space<vmem>>, vector<1x4x128xf32>
    %38 = vector.shape_cast %37 : vector<1x4x128xf32> to vector<4x128xf32>
    %cst_26 = arith.constant dense<0.000000e+00> : vector<256x128xf32>
    %39 = tpu.matmul %36, %38, %cst_26 {dimension_numbers = #tpu.dot_dimension_numbers<[1], [0], [0], [1], [0, 0, 1, 1], [], []>} : vector<256x4xf32>, vector<4x128xf32>, vector<256x128xf32> -> vector<256x128xf32>
    %40 = arith.addf %31, %39 : vector<256x128xf32>
    %c1_i32_27 = arith.constant 1 : i32
    %41 = arith.addi %1, %c1_i32_27 : i32
    %c0_28 = arith.constant 0 : index
    %42 = arith.index_cast %41 : i32 to index
    %c1_29 = arith.constant 1 : index
    %c0_30 = arith.constant 0 : index
    %43 = vector.load %arg2[%c0_28, %42, %c1_29, %c0_30] : memref<1x18x18x4xf32, #tpu.memory_space<vmem>>, vector<1x16x16x4xf32>
    %44 = vector.shape_cast %43 : vector<1x16x16x4xf32> to vector<16x16x4xf32>
    %45 = vector.shape_cast %44 : vector<16x16x4xf32> to vector<256x4xf32>
    %c4 = arith.constant 4 : index
    %c0_31 = arith.constant 0 : index
    %c0_32 = arith.constant 0 : index
    %46 = vector.load %arg3[%c4, %c0_31, %c0_32] : memref<9x4x128xf32, #tpu.memory_space<vmem>>, vector<1x4x128xf32>
    %47 = vector.shape_cast %46 : vector<1x4x128xf32> to vector<4x128xf32>
    %cst_33 = arith.constant dense<0.000000e+00> : vector<256x128xf32>
    %48 = tpu.matmul %45, %47, %cst_33 {dimension_numbers = #tpu.dot_dimension_numbers<[1], [0], [0], [1], [0, 0, 1, 1], [], []>} : vector<256x4xf32>, vector<4x128xf32>, vector<256x128xf32> -> vector<256x128xf32>
    %49 = arith.addf %40, %48 : vector<256x128xf32>
    %c1_i32_34 = arith.constant 1 : i32
    %50 = arith.addi %1, %c1_i32_34 : i32
    %c0_35 = arith.constant 0 : index
    %51 = arith.index_cast %50 : i32 to index
    %c2_36 = arith.constant 2 : index
    %c0_37 = arith.constant 0 : index
    %52 = vector.load %arg2[%c0_35, %51, %c2_36, %c0_37] : memref<1x18x18x4xf32, #tpu.memory_space<vmem>>, vector<1x16x16x4xf32>
    %53 = vector.shape_cast %52 : vector<1x16x16x4xf32> to vector<16x16x4xf32>
    %54 = vector.shape_cast %53 : vector<16x16x4xf32> to vector<256x4xf32>
    %c5 = arith.constant 5 : index
    %c0_38 = arith.constant 0 : index
    %c0_39 = arith.constant 0 : index
    %55 = vector.load %arg3[%c5, %c0_38, %c0_39] : memref<9x4x128xf32, #tpu.memory_space<vmem>>, vector<1x4x128xf32>
    %56 = vector.shape_cast %55 : vector<1x4x128xf32> to vector<4x128xf32>
    %cst_40 = arith.constant dense<0.000000e+00> : vector<256x128xf32>
    %57 = tpu.matmul %54, %56, %cst_40 {dimension_numbers = #tpu.dot_dimension_numbers<[1], [0], [0], [1], [0, 0, 1, 1], [], []>} : vector<256x4xf32>, vector<4x128xf32>, vector<256x128xf32> -> vector<256x128xf32>
    %58 = arith.addf %49, %57 : vector<256x128xf32>
    %c2_i32 = arith.constant 2 : i32
    %59 = arith.addi %1, %c2_i32 : i32
    %c0_41 = arith.constant 0 : index
    %60 = arith.index_cast %59 : i32 to index
    %c0_42 = arith.constant 0 : index
    %c0_43 = arith.constant 0 : index
    %61 = vector.load %arg2[%c0_41, %60, %c0_42, %c0_43] : memref<1x18x18x4xf32, #tpu.memory_space<vmem>>, vector<1x16x16x4xf32>
    %62 = vector.shape_cast %61 : vector<1x16x16x4xf32> to vector<16x16x4xf32>
    %63 = vector.shape_cast %62 : vector<16x16x4xf32> to vector<256x4xf32>
    %c6 = arith.constant 6 : index
    %c0_44 = arith.constant 0 : index
    %c0_45 = arith.constant 0 : index
    %64 = vector.load %arg3[%c6, %c0_44, %c0_45] : memref<9x4x128xf32, #tpu.memory_space<vmem>>, vector<1x4x128xf32>
    %65 = vector.shape_cast %64 : vector<1x4x128xf32> to vector<4x128xf32>
    %cst_46 = arith.constant dense<0.000000e+00> : vector<256x128xf32>
    %66 = tpu.matmul %63, %65, %cst_46 {dimension_numbers = #tpu.dot_dimension_numbers<[1], [0], [0], [1], [0, 0, 1, 1], [], []>} : vector<256x4xf32>, vector<4x128xf32>, vector<256x128xf32> -> vector<256x128xf32>
    %67 = arith.addf %58, %66 : vector<256x128xf32>
    %c2_i32_47 = arith.constant 2 : i32
    %68 = arith.addi %1, %c2_i32_47 : i32
    %c0_48 = arith.constant 0 : index
    %69 = arith.index_cast %68 : i32 to index
    %c1_49 = arith.constant 1 : index
    %c0_50 = arith.constant 0 : index
    %70 = vector.load %arg2[%c0_48, %69, %c1_49, %c0_50] : memref<1x18x18x4xf32, #tpu.memory_space<vmem>>, vector<1x16x16x4xf32>
    %71 = vector.shape_cast %70 : vector<1x16x16x4xf32> to vector<16x16x4xf32>
    %72 = vector.shape_cast %71 : vector<16x16x4xf32> to vector<256x4xf32>
    %c7 = arith.constant 7 : index
    %c0_51 = arith.constant 0 : index
    %c0_52 = arith.constant 0 : index
    %73 = vector.load %arg3[%c7, %c0_51, %c0_52] : memref<9x4x128xf32, #tpu.memory_space<vmem>>, vector<1x4x128xf32>
    %74 = vector.shape_cast %73 : vector<1x4x128xf32> to vector<4x128xf32>
    %cst_53 = arith.constant dense<0.000000e+00> : vector<256x128xf32>
    %75 = tpu.matmul %72, %74, %cst_53 {dimension_numbers = #tpu.dot_dimension_numbers<[1], [0], [0], [1], [0, 0, 1, 1], [], []>} : vector<256x4xf32>, vector<4x128xf32>, vector<256x128xf32> -> vector<256x128xf32>
    %76 = arith.addf %67, %75 : vector<256x128xf32>
    %c2_i32_54 = arith.constant 2 : i32
    %77 = arith.addi %1, %c2_i32_54 : i32
    %c0_55 = arith.constant 0 : index
    %78 = arith.index_cast %77 : i32 to index
    %c2_56 = arith.constant 2 : index
    %c0_57 = arith.constant 0 : index
    %79 = vector.load %arg2[%c0_55, %78, %c2_56, %c0_57] : memref<1x18x18x4xf32, #tpu.memory_space<vmem>>, vector<1x16x16x4xf32>
    %80 = vector.shape_cast %79 : vector<1x16x16x4xf32> to vector<16x16x4xf32>
    %81 = vector.shape_cast %80 : vector<16x16x4xf32> to vector<256x4xf32>
    %c8 = arith.constant 8 : index
    %c0_58 = arith.constant 0 : index
    %c0_59 = arith.constant 0 : index
    %82 = vector.load %arg3[%c8, %c0_58, %c0_59] : memref<9x4x128xf32, #tpu.memory_space<vmem>>, vector<1x4x128xf32>
    %83 = vector.shape_cast %82 : vector<1x4x128xf32> to vector<4x128xf32>
    %cst_60 = arith.constant dense<0.000000e+00> : vector<256x128xf32>
    %84 = tpu.matmul %81, %83, %cst_60 {dimension_numbers = #tpu.dot_dimension_numbers<[1], [0], [0], [1], [0, 0, 1, 1], [], []>} : vector<256x4xf32>, vector<4x128xf32>, vector<256x128xf32> -> vector<256x128xf32>
    %85 = arith.addf %76, %84 : vector<256x128xf32>
    %86 = vector.shape_cast %85 : vector<256x128xf32> to vector<1x16x16x128xf32>
    %c0_61 = arith.constant 0 : index
    %c0_62 = arith.constant 0 : index
    %c0_63 = arith.constant 0 : index
    %c0_64 = arith.constant 0 : index
    %87 = vector.load %arg5[%c0_61, %c0_62, %c0_63, %c0_64] : memref<1x16x16x128xf32, #tpu.memory_space<vmem>>, vector<1x16x16x128xf32>
    tpu.vector_store %arg5[%c0_61, %c0_62, %c0_63, %c0_64], %86 {strides = array<i32>} : memref<1x16x16x128xf32, #tpu.memory_space<vmem>>, vector<1x16x16x128xf32>,
    return
  }
  func.func @transform_0(%arg0: i32, %arg1: i32) -> (i32, i32, i32, i32) {
    %c0_i32 = arith.constant 0 : i32
    %c0_i32_0 = arith.constant 0 : i32
    %c0_i32_1 = arith.constant 0 : i32
    %c0_i32_2 = arith.constant 0 : i32
    return %arg0, %c0_i32, %c0_i32_0, %c0_i32_1 : i32, i32, i32, i32
  }
  func.func @transform_1(%arg0: i32, %arg1: i32) -> (i32, i32, i32) {
    %c0_i32 = arith.constant 0 : i32
    %c0_i32_0 = arith.constant 0 : i32
    %c0_i32_1 = arith.constant 0 : i32
    %c0_i32_2 = arith.constant 0 : i32
    return %c0_i32, %c0_i32_0, %c0_i32_1 : i32, i32, i32
  }
  func.func @transform_2(%arg0: i32, %arg1: i32) -> (i32, i32) {
    %c0_i32 = arith.constant 0 : i32
    %c0_i32_0 = arith.constant 0 : i32
    %c0_i32_1 = arith.constant 0 : i32
    return %c0_i32, %c0_i32_0 : i32, i32
  }
  func.func @transform_3(%arg0: i32, %arg1: i32) -> (i32, i32, i32, i32) {
    %c0_i32 = arith.constant 0 : i32
    %c0_i32_0 = arith.constant 0 : i32
    %c0_i32_1 = arith.constant 0 : i32
    return %arg0, %arg1, %c0_i32, %c0_i32_0 : i32, i32, i32, i32
  }
}

</mosaic_0001>

<llo_original>
// kernel: _equal_conv2d_forward.1
$region0: #{_equal_conv2d_forward.1}
  #allocation0 [shape = 'u32[]', space=smem, size = 0x4, offset = 0x4, fixed_abs, tag = 'smem constant byte address 0x4 - core index']
  #allocation1 [shape = 'u32[144,128]{1,0:T(1,128)}', space=vmem, size = 0x12000, scoped, tag = 'internal scratch']
  %s0 = inlined_call_operand.vmem [shape: f32[2,18,18,4], index: 0, kind: input, shape index: {}]
  %s1 = inlined_call_operand.vmem [shape: f32[9,4,128], index: 1, kind: input, shape index: {}]
  %s2 = inlined_call_operand.vmem [shape: f32[1,128], index: 2, kind: input, shape index: {}]
  %s3 = inlined_call_operand.vmem [shape: f32[2,16,16,128], index: 3, kind: output, shape index: {}]
  %s4 = sld [smem:[#allocation0]]
  $region45: #{_equal_conv2d_forward.1} parent=0
    _
  %s6 = ssub.s32 1, %s4
  %s7 = scalar_select 0, %s6, %s4
  loop: start=0, step=1, limit=4
  $region2: #{_equal_conv2d_forward.1} parent=0 // loop_pre_header
    _
  $region3: #{_equal_conv2d_forward.1} parent=0 // loop_header
    %s9 = sphi 0, %s13
    %p10 = scmp.ge.s32.totalorder %s9, 4
    %s16 = sphi 0, %s28
    %s17 = sphi 0, %s24
    %s18 = sphi 0, %s16
    %s19 = sphi 0, %s17
    %s20 = sphi 0, %s18
    %s21 = sphi 0, %s19
    %s31 = sphi 0, %s33
    %s34 = sphi 0, %s31
    %s35 = sphi 0, %s34
    %s51 = sphi 0, %s35
    %s55 = sphi 0, %s55
    %s57 = sphi 0, %s55
    %s58 = sphi 0, %s57
    %s72 = sphi 0, %s58
    %s76 = sphi 0, %s76
    %s78 = sphi 0, %s76
    %s79 = sphi 0, %s78
    %s93 = sphi 0, %s79
    %s101 = sphi 0, %s103
    %s104 = sphi 0, %s101
    %s105 = sphi 0, %s104
    %s121 = sphi 0, %s105
  $region4: #{_equal_conv2d_forward.1} parent=0 // loop_header_branch
    %12 = sbr.rel (%p10) target = $region8
  $region5: #{_equal_conv2d_forward.1} parent=0 // loop_body
    %s14 = ssub.s32 %s9, 1
    %s15 = ssub.s32 %s9, 2
    %s22 = sadd.s32 1, %s17
    %p23 = scmp.ge.s32.totalorder %s22, 1
    %s24 = scalar_select %p23, 0, %s22
    %s25 = sadd.s32 1, %s16
    %s26 = scalar_select %p23, %s25, %s16
    %p27 = scmp.ge.s32.totalorder %s26, 2
    %s28 = scalar_select %p27, 0, %s26
    %s29 = ssub.s32 %s16, %s28
    %p30 = scmp.eq.s32.totalorder %s29, 0
    %s32 = sadd.s32 %s31, 1
    %s33 = scalar_select %p30, %s31, %s32
    %p36 = pneg %p30
    %p37 = scmp.eq.s32.totalorder %s9, 1
    %p38 = por %p36, %p37
    %p39 = scmp.ne.s32.totalorder %s31, %s34
    %p40 = scmp.eq.s32.totalorder %s9, 0
    %p41 = por %p39, %p40
    %p42 = scmp.ne.s32.totalorder %s31, %s34
    %p43 = scmp.eq.s32.totalorder %s14, 1
    %p44 = por %p42, %p43
    %p45 = scmp.ne.s32.totalorder %s34, %s35
    %p46 = scmp.eq.s32.totalorder %s14, 0
    %p47 = por %p45, %p46
    %p48 = scmp.ne.s32.totalorder %s34, %s35
    %p49 = scmp.eq.s32.totalorder %s15, 1
    %p50 = por %p48, %p49
    %p52 = scmp.ne.s32.totalorder %s35, %s51
    %p53 = scmp.eq.s32.totalorder %s15, 0
    %p54 = por %p52, %p53
    %s56 = sadd.s32 %s55, 1
    %p59 = scmp.eq.s32.totalorder %s9, 1
    %p60 = scmp.ne.s32.totalorder %s55, %s57
    %p61 = scmp.eq.s32.totalorder %s9, 0
    %p62 = por %p60, %p61
    %p63 = scmp.ne.s32.totalorder %s55, %s57
    %p64 = scmp.eq.s32.totalorder %s14, 1
    %p65 = por %p63, %p64
    %p66 = scmp.ne.s32.totalorder %s57, %s58
    %p67 = scmp.eq.s32.totalorder %s14, 0
    %p68 = por %p66, %p67
    %p69 = scmp.ne.s32.totalorder %s57, %s58
    %p70 = scmp.eq.s32.totalorder %s15, 1
    %p71 = por %p69, %p70
    %p73 = scmp.ne.s32.totalorder %s58, %s72
    %p74 = scmp.eq.s32.totalorder %s15, 0
    %p75 = por %p73, %p74
    %s77 = sadd.s32 %s76, 1
    %p80 = scmp.eq.s32.totalorder %s9, 1
    %p81 = scmp.ne.s32.totalorder %s76, %s78
    %p82 = scmp.eq.s32.totalorder %s9, 0
    %p83 = por %p81, %p82
    %p84 = scmp.ne.s32.totalorder %s76, %s78
    %p85 = scmp.eq.s32.totalorder %s14, 1
    %p86 = por %p84, %p85
    %p87 = scmp.ne.s32.totalorder %s78, %s79
    %p88 = scmp.eq.s32.totalorder %s14, 0
    %p89 = por %p87, %p88
    %p90 = scmp.ne.s32.totalorder %s78, %s79
    %p91 = scmp.eq.s32.totalorder %s15, 1
    %p92 = por %p90, %p91
    %p94 = scmp.ne.s32.totalorder %s79, %s93
    %p95 = scmp.eq.s32.totalorder %s15, 0
    %p96 = por %p94, %p95
    %s97 = ssub.s32 %s16, %s28
    %s98 = ssub.s32 %s17, %s24
    %s99 = sor.u32 %s97, %s98
    %p100 = scmp.eq.s32.totalorder %s99, 0
    %s102 = sadd.s32 %s101, 1
    %s103 = scalar_select %p100, %s101, %s102
    %p106 = pneg %p100
    %p107 = scmp.eq.s32.totalorder %s9, 1
    %p108 = por %p106, %p107
    %p109 = scmp.ne.s32.totalorder %s101, %s104
    %p110 = scmp.eq.s32.totalorder %s9, 0
    %p111 = por %p109, %p110
    %p112 = scmp.ne.s32.totalorder %s101, %s104
    %p113 = scmp.eq.s32.totalorder %s14, 1
    %p114 = por %p112, %p113
    %p115 = scmp.ne.s32.totalorder %s104, %s105
    %p116 = scmp.eq.s32.totalorder %s14, 0
    %p117 = por %p115, %p116
    %p118 = scmp.ne.s32.totalorder %s104, %s105
    %p119 = scmp.eq.s32.totalorder %s15, 1
    %p120 = por %p118, %p119
    %p122 = scmp.ne.s32.totalorder %s105, %s121
    %p123 = scmp.eq.s32.totalorder %s15, 0
    %p124 = por %p122, %p123
    %p125 = scmp.le.s32.totalorder 1, %s9
    %p126 = scmp.lt.s32.totalorder %s9, 3
    %p127 = pnand %p125, %p126
    %p128 = pneg %p127
    // Predicated region
    $region9: #{_equal_conv2d_forward.1} parent=5 // pred_check
      _
    $region10: #{_equal_conv2d_forward.1} parent=5 // pred_check_branch
      %130 = sbr.rel (%p127) target = $region12
    $region11: #{_equal_conv2d_forward.1} parent=5 // pred_region
      %s131 = ssub.s32 %s9, 1
      // Predicated region
      $region13: #{_equal_conv2d_forward.1} parent=11 // pred_check
        %p132 = pneg %p68
      $region14: #{_equal_conv2d_forward.1} parent=11 // pred_check_branch
        %134 = sbr.rel (%p132) target = $region16
      $region15: #{_equal_conv2d_forward.1} parent=11 // pred_region
        _
      $region16: #{_equal_conv2d_forward.1} parent=11 // pred_fallthru
        _
      // Predicated region
      $region17: #{_equal_conv2d_forward.1} parent=11 // pred_check
        %p135 = pneg %p89
      $region18: #{_equal_conv2d_forward.1} parent=11 // pred_check_branch
        %137 = sbr.rel (%p135) target = $region20
      $region19: #{_equal_conv2d_forward.1} parent=11 // pred_region
        _
      $region20: #{_equal_conv2d_forward.1} parent=11 // pred_fallthru
        _
    $region12: #{_equal_conv2d_forward.1} parent=5 // pred_fallthru
      _
    %p138 = scmp.lt.s32.totalorder %s9, 2
    // Predicated region
    $region21: #{_equal_conv2d_forward.1} parent=5 // pred_check
      %p139 = pneg %p138
    $region22: #{_equal_conv2d_forward.1} parent=5 // pred_check_branch
      %141 = sbr.rel (%p139) target = $region24
    $region23: #{_equal_conv2d_forward.1} parent=5 // pred_region
      // Predicated region
      $region25: #{_equal_conv2d_forward.1} parent=23 // pred_check
        %p142 = pneg %p41
      $region26: #{_equal_conv2d_forward.1} parent=23 // pred_check_branch
        %144 = sbr.rel (%p142) target = $region28
      $region27: #{_equal_conv2d_forward.1} parent=23 // pred_region
        %p145 = scmp.lt.s32.totalorder %s16, 1
        %s146 = scalar_select %p145, %s16, 1
        %s147 = smul.addr %s146, 54
        %s148 = smul.addr %s147, 8
        %s149 = scalar_lea.vmem %s0, %s148
      $region28: #{_equal_conv2d_forward.1} parent=23 // pred_fallthru
        _
    $region24: #{_equal_conv2d_forward.1} parent=5 // pred_fallthru
      _
    %p150 = scmp.le.s32.totalorder 1, %s9
    %p151 = scmp.lt.s32.totalorder %s9, 3
    %p152 = pnand %p150, %p151
    %p153 = pneg %p152
    // Predicated region
    $region29: #{_equal_conv2d_forward.1} parent=5 // pred_check
      _
    $region30: #{_equal_conv2d_forward.1} parent=5 // pred_check_branch
      %155 = sbr.rel (%p152) target = $region32
    $region31: #{_equal_conv2d_forward.1} parent=5 // pred_region
      %s156 = ssub.s32 %s9, 1
      %p157 = scmp.lt.s32.totalorder %s18, 1
      %s158 = scalar_select %p157, %s18, 1
      %s159 = smul.addr %s158, 54
      %s160 = smul.addr %s159, 8
      %s161 = scalar_lea.vmem %s0, %s160
      %p162 = pneg %p47
      %p163 = pneg %p44
      %p164 = pneg %p68
      %p165 = pneg %p65
      %p166 = pneg %p89
      %p167 = pneg %p86
      %p168 = pneg %p117
      %p169 = pneg %p114
      %s170 = smul.u32 16, %s19
      %p171 = scmp.lt.s32.totalorder %s18, 1
      %s172 = scalar_select %p171, %s18, 1
      %p173 = scmp.lt.s32.totalorder %s170, 15
      %s174 = scalar_select %p173, %s170, 15
      %s175 = smul.addr %s174, 2
      %s176 = smul.addr %s172, 32
      %s177 = sadd.s32 %s175, %s176
      %s178 = smul.addr %s177, 8
      %s179 = scalar_lea.vmem %s3, %s178
      %p180 = scmp.lt.s32.totalorder %s18, 1
      %s181 = scalar_select %p180, %s18, 1
      %s182 = smul.addr %s181, 54
      %s183 = smul.addr %s182, 8
      %s184 = scalar_lea.vmem %s0, %s183
      %s185 = smul.u32 16, %s19
      %p186 = scmp.lt.s32.totalorder %s18, 1
      %s187 = scalar_select %p186, %s18, 1
      %p188 = scmp.lt.s32.totalorder %s185, 15
      %s189 = scalar_select %p188, %s185, 15
      %s190 = smul.addr %s189, 2
      %s191 = smul.addr %s187, 32
      %s192 = sadd.s32 %s190, %s191
      %s193 = smul.addr %s192, 8
      %s194 = scalar_lea.vmem %s3, %s193
      %s195 = smul.u32 16, %s19
      %s196 = smul.u32 %s19, 16
      %v197 = vld [vmem:[%s2] sm:$0x1]
      %v199 = vlaneseq
      %v200 = vshrl.u32 %v199, 7
      %v201 = vsub.s32 0, %v200
      %v202 = vrot.slane %v197, %v201
      %s204 = smul.u32 %s196, 24
      %s205 = scalar_lea.vmem %s184, %s204
      %v206 = vld [vmem:[%s205] sm:$0xff]
      %v207 = vld [vmem:[%s205 + $0x8] sm:$0xff]
      %v208 = vld [vmem:[%s205 + $0x18] sm:$0xff]
      %v209 = vld [vmem:[%s205 + $0x20] sm:$0xff]
      %v210 = vld [vmem:[%s205 + $0x30] sm:$0xff]
      %v211 = vld [vmem:[%s205 + $0x38] sm:$0xff]
      %v212 = vld [vmem:[%s205 + $0x48] sm:$0xff]
      %v213 = vld [vmem:[%s205 + $0x50] sm:$0xff]
      %v214 = vld [vmem:[%s205 + $0x60] sm:$0xff]
      %v215 = vld [vmem:[%s205 + $0x68] sm:$0xff]
      %v216 = vld [vmem:[%s205 + $0x78] sm:$0xff]
      %v217 = vld [vmem:[%s205 + $0x80] sm:$0xff]
      %v218 = vld [vmem:[%s205 + $0x90] sm:$0xff]
      %v219 = vld [vmem:[%s205 + $0x98] sm:$0xff]
      %v220 = vld [vmem:[%s205 + $0xa8] sm:$0xff]
      %v221 = vld [vmem:[%s205 + $0xb0] sm:$0xff]
      %v222 = vld [vmem:[%s205 + $0xc0] sm:$0xff]
      %v223 = vld [vmem:[%s205 + $0xc8] sm:$0xff]
      %v224 = vld [vmem:[%s205 + $0xd8] sm:$0xff]
      %v225 = vld [vmem:[%s205 + $0xe0] sm:$0xff]
      %v226 = vld [vmem:[%s205 + $0xf0] sm:$0xff]
      %v227 = vld [vmem:[%s205 + $0xf8] sm:$0xff]
      %v228 = vld [vmem:[%s205 + $0x108] sm:$0xff]
      %v229 = vld [vmem:[%s205 + $0x110] sm:$0xff]
      %v230 = vld [vmem:[%s205 + $0x120] sm:$0xff]
      %v231 = vld [vmem:[%s205 + $0x128] sm:$0xff]
      %v232 = vld [vmem:[%s205 + $0x138] sm:$0xff]
      %v233 = vld [vmem:[%s205 + $0x140] sm:$0xff]
      %v234 = vld [vmem:[%s205 + $0x150] sm:$0xff]
      %v235 = vld [vmem:[%s205 + $0x158] sm:$0xff]
      %v236 = vld [vmem:[%s205 + $0x168] sm:$0xff]
      %v237 = vld [vmem:[%s205 + $0x170] sm:$0xff]
      %v238 = vld [vmem:[%s1] sm:$0xf]
      %vm239 = vcmask 31744
      %v241 = vsel %vm239, %v206, 0
      %v244 = vsel %vm239, %v207, 0
      %v247 = vsel %vm239, %v208, 0
      %v250 = vsel %vm239, %v209, 0
      %v253 = vsel %vm239, %v210, 0
      %v256 = vsel %vm239, %v211, 0
      %v259 = vsel %vm239, %v212, 0
      %v262 = vsel %vm239, %v213, 0
      %v265 = vsel %vm239, %v214, 0
      %v268 = vsel %vm239, %v215, 0
      %v271 = vsel %vm239, %v216, 0
      %v274 = vsel %vm239, %v217, 0
      %v277 = vsel %vm239, %v218, 0
      %v280 = vsel %vm239, %v219, 0
      %v283 = vsel %vm239, %v220, 0
      %v286 = vsel %vm239, %v221, 0
      %v289 = vsel %vm239, %v222, 0
      %v292 = vsel %vm239, %v223, 0
      %v295 = vsel %vm239, %v224, 0
      %v298 = vsel %vm239, %v225, 0
      %v301 = vsel %vm239, %v226, 0
      %v304 = vsel %vm239, %v227, 0
      %v307 = vsel %vm239, %v228, 0
      %v310 = vsel %vm239, %v229, 0
      %v313 = vsel %vm239, %v230, 0
      %v316 = vsel %vm239, %v231, 0
      %v319 = vsel %vm239, %v232, 0
      %v322 = vsel %vm239, %v233, 0
      %v325 = vsel %vm239, %v234, 0
      %v328 = vsel %vm239, %v235, 0
      %v331 = vsel %vm239, %v236, 0
      %v334 = vsel %vm239, %v237, 0
      %vm336 = vcmask 1043456
      %v338 = vsel %vm336, %v238, 0
      %340 = vmatprep.subr.mxu0 0.0
      %341 = vmatpush1.msra.mxu0 %v338
      %342 = vmatprep.subr.mxu0 0.0
      %343 = vmatpush1.msra.mxu0 0.0
      %344 = vmatprep.subr.mxu0 0.0
      %345 = vmatpush1.msra.mxu0 0.0
      %346 = vmatprep.subr.mxu0 0.0
      %347 = vmatpush1.msra.mxu0 0.0
      %348 = vmatprep.subr.mxu0 0.0
      %349 = vmatpush1.msra.mxu0 0.0
      %350 = vmatprep.subr.mxu0 0.0
      %351 = vmatpush1.msra.mxu0 0.0
      %352 = vmatprep.subr.mxu0 0.0
      %353 = vmatpush1.msra.mxu0 0.0
      %354 = vmatprep.subr.mxu0 0.0
      %355 = vmatpush1.msra.mxu0 0.0
      %356 = vmatprep.subr.mxu0 0.0
      %357 = vmatpush1.msra.mxu0 0.0
      %358 = vmatprep.subr.mxu0 0.0
      %359 = vmatpush1.msra.mxu0 0.0
      %360 = vmatprep.subr.mxu0 0.0
      %361 = vmatpush1.msra.mxu0 0.0
      %362 = vmatprep.subr.mxu0 0.0
      %363 = vmatpush1.msra.mxu0 0.0
      %364 = vmatprep.subr.mxu0 0.0
      %365 = vmatpush1.msra.mxu0 0.0
      %366 = vmatprep.subr.mxu0 0.0
      %367 = vmatpush1.msra.mxu0 0.0
      %368 = vmatprep.subr.mxu0 0.0
      %369 = vmatpush1.msra.mxu0 0.0
      %370 = vmatprep.subr.mxu0 0.0
      %371 = vmatpush1.msra.mxu0 0.0
      %372 = vmatprep.subr.mxu0 0.0
      %373 = vmatpush1.msra.mxu0 0.0
      %374 = vmatprep.subr.mxu0 0.0
      %375 = vmatpush1.msra.mxu0 0.0
      %376 = vmatprep.subr.mxu0 0.0
      %377 = vmatpush1.msra.mxu0 0.0
      %378 = vmatprep.subr.mxu0 0.0
      %379 = vmatpush1.msra.mxu0 0.0
      %380 = vmatprep.subr.mxu0 0.0
      %381 = vmatpush1.msra.mxu0 0.0
      %382 = vmatprep.subr.mxu0 0.0
      %383 = vmatpush1.msra.mxu0 0.0
      %384 = vmatprep.subr.mxu0 0.0
      %385 = vmatpush1.msra.mxu0 0.0
      %386 = vmatprep.subr.mxu0 0.0
      %387 = vmatpush1.msra.mxu0 0.0
      %388 = vmatprep.subr.mxu0 0.0
      %389 = vmatpush1.msra.mxu0 0.0
      %390 = vmatprep.subr.mxu0 0.0
      %391 = vmatpush1.msra.mxu0 0.0
      %392 = vmatprep.subr.mxu0 0.0
      %393 = vmatpush1.msra.mxu0 0.0
      %394 = vmatprep.subr.mxu0 0.0
      %395 = vmatpush1.msra.mxu0 0.0
      %396 = vmatprep.subr.mxu0 0.0
      %397 = vmatpush1.msra.mxu0 0.0
      %398 = vmatprep.subr.mxu0 0.0
      %399 = vmatpush1.msra.mxu0 0.0
      %400 = vmatprep.subr.mxu0 0.0
      %401 = vmatpush1.msra.mxu0 0.0
      %402 = vmatprep.subr.mxu0 0.0
      %403 = vmatpush1.msra.mxu0 0.0
      %404 = vmatprep.mubr.f32.mxu0 0.0
      %405 = vmatmul.mubr.f32.gmra.mrb[0].mxu0 %v241
      %v406 = vpop.f32.mrb[0].mxu0
      %v407 = vadd.f32 0.0, %v406
      %v408 = vpop.f32.mrb[0].mxu0
      %409 = vmatprep.mubr.f32.mxu0 0.0
      %410 = vmatmul.mubr.f32.gmra.mrb[0].mxu0 %v244
      %v411 = vpop.f32.mrb[0].mxu0
      %v412 = vadd.f32 0.0, %v411
      %v413 = vpop.f32.mrb[0].mxu0
      %414 = vmatprep.mubr.f32.mxu0 0.0
      %415 = vmatmul.mubr.f32.gmra.mrb[0].mxu0 %v247
      %v416 = vpop.f32.mrb[0].mxu0
      %v417 = vadd.f32 0.0, %v416
      %v418 = vpop.f32.mrb[0].mxu0
      %419 = vmatprep.mubr.f32.mxu0 0.0
      %420 = vmatmul.mubr.f32.gmra.mrb[0].mxu0 %v250
      %v421 = vpop.f32.mrb[0].mxu0
      %v422 = vadd.f32 0.0, %v421
      %v423 = vpop.f32.mrb[0].mxu0
      %424 = vmatprep.mubr.f32.mxu0 0.0
      %425 = vmatmul.mubr.f32.gmra.mrb[0].mxu0 %v253
      %v426 = vpop.f32.mrb[0].mxu0
      %v427 = vadd.f32 0.0, %v426
      %v428 = vpop.f32.mrb[0].mxu0
      %429 = vmatprep.mubr.f32.mxu0 0.0
      %430 = vmatmul.mubr.f32.gmra.mrb[0].mxu0 %v256
      %v431 = vpop.f32.mrb[0].mxu0
      %v432 = vadd.f32 0.0, %v431
      %v433 = vpop.f32.mrb[0].mxu0
      %434 = vmatprep.mubr.f32.mxu0 0.0
      %435 = vmatmul.mubr.f32.gmra.mrb[0].mxu0 %v259
      %v436 = vpop.f32.mrb[0].mxu0
      %v437 = vadd.f32 0.0, %v436
      %v438 = vpop.f32.mrb[0].mxu0
      %439 = vmatprep.mubr.f32.mxu0 0.0
      %440 = vmatmul.mubr.f32.gmra.mrb[0].mxu0 %v262
      %v441 = vpop.f32.mrb[0].mxu0
      %v442 = vadd.f32 0.0, %v441
      %v443 = vpop.f32.mrb[0].mxu0
      %444 = vmatprep.mubr.f32.mxu0 0.0
      %445 = vmatmul.mubr.f32.gmra.mrb[0].mxu0 %v265
      %v446 = vpop.f32.mrb[0].mxu0
      %v447 = vadd.f32 0.0, %v446
      %v448 = vpop.f32.mrb[0].mxu0
      %449 = vmatprep.mubr.f32.mxu0 0.0
      %450 = vmatmul.mubr.f32.gmra.mrb[0].mxu0 %v268
      %v451 = vpop.f32.mrb[0].mxu0
      %v452 = vadd.f32 0.0, %v451
      %v453 = vpop.f32.mrb[0].mxu0
      %454 = vmatprep.mubr.f32.mxu0 0.0
      %455 = vmatmul.mubr.f32.gmra.mrb[0].mxu0 %v271
      %v456 = vpop.f32.mrb[0].mxu0
      %v457 = vadd.f32 0.0, %v456
      %v458 = vpop.f32.mrb[0].mxu0
      %459 = vmatprep.mubr.f32.mxu0 0.0
      %460 = vmatmul.mubr.f32.gmra.mrb[0].mxu0 %v274
      %v461 = vpop.f32.mrb[0].mxu0
      %v462 = vadd.f32 0.0, %v461
      %v463 = vpop.f32.mrb[0].mxu0
      %464 = vmatprep.mubr.f32.mxu0 0.0
      %465 = vmatmul.mubr.f32.gmra.mrb[0].mxu0 %v277
      %v466 = vpop.f32.mrb[0].mxu0
      %v467 = vadd.f32 0.0, %v466
      %v468 = vpop.f32.mrb[0].mxu0
      %469 = vmatprep.mubr.f32.mxu0 0.0
      %470 = vmatmul.mubr.f32.gmra.mrb[0].mxu0 %v280
      %v471 = vpop.f32.mrb[0].mxu0
      %v472 = vadd.f32 0.0, %v471
      %v473 = vpop.f32.mrb[0].mxu0
      %474 = vmatprep.mubr.f32.mxu0 0.0
      %475 = vmatmul.mubr.f32.gmra.mrb[0].mxu0 %v283
      %v476 = vpop.f32.mrb[0].mxu0
      %v477 = vadd.f32 0.0, %v476
      %v478 = vpop.f32.mrb[0].mxu0
      %479 = vmatprep.mubr.f32.mxu0 0.0
      %480 = vmatmul.mubr.f32.gmra.mrb[0].mxu0 %v286
      %v481 = vpop.f32.mrb[0].mxu0
      %v482 = vadd.f32 0.0, %v481
      %v483 = vpop.f32.mrb[0].mxu0
      %484 = vmatprep.mubr.f32.mxu0 0.0
      %485 = vmatmul.mubr.f32.gmra.mrb[0].mxu0 %v289
      %v486 = vpop.f32.mrb[0].mxu0
      %v487 = vadd.f32 0.0, %v486
      %v488 = vpop.f32.mrb[0].mxu0
      %489 = vmatprep.mubr.f32.mxu0 0.0
      %490 = vmatmul.mubr.f32.gmra.mrb[0].mxu0 %v292
      %v491 = vpop.f32.mrb[0].mxu0
      %v492 = vadd.f32 0.0, %v491
      %v493 = vpop.f32.mrb[0].mxu0
      %494 = vmatprep.mubr.f32.mxu0 0.0
      %495 = vmatmul.mubr.f32.gmra.mrb[0].mxu0 %v295
      %v496 = vpop.f32.mrb[0].mxu0
      %v497 = vadd.f32 0.0, %v496
      %v498 = vpop.f32.mrb[0].mxu0
      %499 = vmatprep.mubr.f32.mxu0 0.0
      %500 = vmatmul.mubr.f32.gmra.mrb[0].mxu0 %v298
      %v501 = vpop.f32.mrb[0].mxu0
      %v502 = vadd.f32 0.0, %v501
      %v503 = vpop.f32.mrb[0].mxu0
      %504 = vmatprep.mubr.f32.mxu0 0.0
      %505 = vmatmul.mubr.f32.gmra.mrb[0].mxu0 %v301
      %v506 = vpop.f32.mrb[0].mxu0
      %v507 = vadd.f32 0.0, %v506
      %v508 = vpop.f32.mrb[0].mxu0
      %509 = vmatprep.mubr.f32.mxu0 0.0
      %510 = vmatmul.mubr.f32.gmra.mrb[0].mxu0 %v304
      %v511 = vpop.f32.mrb[0].mxu0
      %v512 = vadd.f32 0.0, %v511
      %v513 = vpop.f32.mrb[0].mxu0
      %514 = vmatprep.mubr.f32.mxu0 0.0
      %515 = vmatmul.mubr.f32.gmra.mrb[0].mxu0 %v307
      %v516 = vpop.f32.mrb[0].mxu0
      %v517 = vadd.f32 0.0, %v516
      %v518 = vpop.f32.mrb[0].mxu0
      %519 = vmatprep.mubr.f32.mxu0 0.0
      %520 = vmatmul.mubr.f32.gmra.mrb[0].mxu0 %v310
      %v521 = vpop.f32.mrb[0].mxu0
      %v522 = vadd.f32 0.0, %v521
      %v523 = vpop.f32.mrb[0].mxu0
      %524 = vmatprep.mubr.f32.mxu0 0.0
      %525 = vmatmul.mubr.f32.gmra.mrb[0].mxu0 %v313
      %v526 = vpop.f32.mrb[0].mxu0
      %v527 = vadd.f32 0.0, %v526
      %v528 = vpop.f32.mrb[0].mxu0
      %529 = vmatprep.mubr.f32.mxu0 0.0
      %530 = vmatmul.mubr.f32.gmra.mrb[0].mxu0 %v316
      %v531 = vpop.f32.mrb[0].mxu0
      %v532 = vadd.f32 0.0, %v531
      %v533 = vpop.f32.mrb[0].mxu0
      %534 = vmatprep.mubr.f32.mxu0 0.0
      %535 = vmatmul.mubr.f32.gmra.mrb[0].mxu0 %v319
      %v536 = vpop.f32.mrb[0].mxu0
      %v537 = vadd.f32 0.0, %v536
      %v538 = vpop.f32.mrb[0].mxu0
      %539 = vmatprep.mubr.f32.mxu0 0.0
      %540 = vmatmul.mubr.f32.gmra.mrb[0].mxu0 %v322
      %v541 = vpop.f32.mrb[0].mxu0
      %v542 = vadd.f32 0.0, %v541
      %v543 = vpop.f32.mrb[0].mxu0
      %544 = vmatprep.mubr.f32.mxu0 0.0
      %545 = vmatmul.mubr.f32.gmra.mrb[0].mxu0 %v325
      %v546 = vpop.f32.mrb[0].mxu0
      %v547 = vadd.f32 0.0, %v546
      %v548 = vpop.f32.mrb[0].mxu0
      %549 = vmatprep.mubr.f32.mxu0 0.0
      %550 = vmatmul.mubr.f32.gmra.mrb[0].mxu0 %v328
      %v551 = vpop.f32.mrb[0].mxu0
      %v552 = vadd.f32 0.0, %v551
      %v553 = vpop.f32.mrb[0].mxu0
      %554 = vmatprep.mubr.f32.mxu0 0.0
      %555 = vmatmul.mubr.f32.gmra.mrb[0].mxu0 %v331
      %v556 = vpop.f32.mrb[0].mxu0
      %v557 = vadd.f32 0.0, %v556
      %v558 = vpop.f32.mrb[0].mxu0
      %559 = vmatprep.mubr.f32.mxu0 0.0
      %560 = vmatmul.mubr.f32.gmra.mrb[0].mxu0 %v334
      %v561 = vpop.f32.mrb[0].mxu0
      %v562 = vadd.f32 0.0, %v561
      %v563 = vpop.f32.mrb[0].mxu0
      %564 = vdwg.mxu0
      %v565 = vadd.f32 %v202, %v407
      %v566 = vadd.f32 %v202, %v412
      %v567 = vadd.f32 %v202, %v417
      %v568 = vadd.f32 %v202, %v422
      %v569 = vadd.f32 %v202, %v427
      %v570 = vadd.f32 %v202, %v432
      %v571 = vadd.f32 %v202, %v437
      %v572 = vadd.f32 %v202, %v442
      %v573 = vadd.f32 %v202, %v447
      %v574 = vadd.f32 %v202, %v452
      %v575 = vadd.f32 %v202, %v457
      %v576 = vadd.f32 %v202, %v462
      %v577 = vadd.f32 %v202, %v467
      %v578 = vadd.f32 %v202, %v472
      %v579 = vadd.f32 %v202, %v477
      %v580 = vadd.f32 %v202, %v482
      %v581 = vadd.f32 %v202, %v487
      %v582 = vadd.f32 %v202, %v492
      %v583 = vadd.f32 %v202, %v497
      %v584 = vadd.f32 %v202, %v502
      %v585 = vadd.f32 %v202, %v507
      %v586 = vadd.f32 %v202, %v512
      %v587 = vadd.f32 %v202, %v517
      %v588 = vadd.f32 %v202, %v522
      %v589 = vadd.f32 %v202, %v527
      %v590 = vadd.f32 %v202, %v532
      %v591 = vadd.f32 %v202, %v537
      %v592 = vadd.f32 %v202, %v542
      %v593 = vadd.f32 %v202, %v547
      %v594 = vadd.f32 %v202, %v552
      %v595 = vadd.f32 %v202, %v557
      %v596 = vadd.f32 %v202, %v562
      %v597 = vld [vmem:[%s205 + $0x1] sm:$0xff]
      %v598 = vld [vmem:[%s205 + $0x9] sm:$0xff]
      %v599 = vld [vmem:[%s205 + $0x19] sm:$0xff]
      %v600 = vld [vmem:[%s205 + $0x21] sm:$0xff]
      %v601 = vld [vmem:[%s205 + $0x31] sm:$0xff]
      %v602 = vld [vmem:[%s205 + $0x39] sm:$0xff]
      %v603 = vld [vmem:[%s205 + $0x49] sm:$0xff]
      %v604 = vld [vmem:[%s205 + $0x51] sm:$0xff]
      %v605 = vld [vmem:[%s205 + $0x61] sm:$0xff]
      %v606 = vld [vmem:[%s205 + $0x69] sm:$0xff]
      %v607 = vld [vmem:[%s205 + $0x79] sm:$0xff]
      %v608 = vld [vmem:[%s205 + $0x81] sm:$0xff]
      %v609 = vld [vmem:[%s205 + $0x91] sm:$0xff]
      %v610 = vld [vmem:[%s205 + $0x99] sm:$0xff]
      %v611 = vld [vmem:[%s205 + $0xa9] sm:$0xff]
      %v612 = vld [vmem:[%s205 + $0xb1] sm:$0xff]
      %v613 = vld [vmem:[%s205 + $0xc1] sm:$0xff]
      %v614 = vld [vmem:[%s205 + $0xc9] sm:$0xff]
      %v615 = vld [vmem:[%s205 + $0xd9] sm:$0xff]
      %v616 = vld [vmem:[%s205 + $0xe1] sm:$0xff]
      %v617 = vld [vmem:[%s205 + $0xf1] sm:$0xff]
      %v618 = vld [vmem:[%s205 + $0xf9] sm:$0xff]
      %v619 = vld [vmem:[%s205 + $0x109] sm:$0xff]
      %v620 = vld [vmem:[%s205 + $0x111] sm:$0xff]
      %v621 = vld [vmem:[%s205 + $0x121] sm:$0xff]
      %v622 = vld [vmem:[%s205 + $0x129] sm:$0xff]
      %v623 = vld [vmem:[%s205 + $0x139] sm:$0xff]
      %v624 = vld [vmem:[%s205 + $0x141] sm:$0xff]
      %v625 = vld [vmem:[%s205 + $0x151] sm:$0xff]
      %v626 = vld [vmem:[%s205 + $0x159] sm:$0xff]
      %v627 = vld [vmem:[%s205 + $0x169] sm:$0xff]
      %v628 = vld [vmem:[%s205 + $0x171] sm:$0xff]
      %s629 = scalar_lea.vmem %s1, 4
      %v630 = vld [vmem:[%s629] sm:$0xf]
      %v632 = vsel %vm239, %v597, 0
      %v635 = vsel %vm239, %v598, 0
      %v638 = vsel %vm239, %v599, 0
      %v641 = vsel %vm239, %v600, 0
      %v644 = vsel %vm239, %v601, 0
      %v647 = vsel %vm239, %v602, 0
      %v650 = vsel %vm239, %v603, 0
      %v653 = vsel %vm239, %v604, 0
      %v656 = vsel %vm239, %v605, 0
      %v659 = vsel %vm239, %v606, 0
      %v662 = vsel %vm239, %v607, 0
      %v665 = vsel %vm239, %v608, 0
      %v668 = vsel %vm239, %v609, 0
      %v671 = vsel %vm239, %v610, 0
      %v674 = vsel %vm239, %v611, 0
      %v677 = vsel %vm239, %v612, 0
      %v680 = vsel %vm239, %v613, 0
      %v683 = vsel %vm239, %v614, 0
      %v686 = vsel %vm239, %v615, 0
      %v689 = vsel %vm239, %v616, 0
      %v692 = vsel %vm239, %v617, 0
      %v695 = vsel %vm239, %v618, 0
      %v698 = vsel %vm239, %v619, 0
      %v701 = vsel %vm239, %v620, 0
      %v704 = vsel %vm239, %v621, 0
      %v707 = vsel %vm239, %v622, 0
      %v710 = vsel %vm239, %v623, 0
      %v713 = vsel %vm239, %v624, 0
      %v716 = vsel %vm239, %v625, 0
      %v719 = vsel %vm239, %v626, 0
      %v722 = vsel %vm239, %v627, 0
      %v725 = vsel %vm239, %v628, 0
      %v728 = vsel %vm336, %v630, 0
      %730 = vmatprep.subr.mxu0 0.0
      %731 = vmatpush1.msra.mxu0 %v728
      %732 = vmatprep.subr.mxu0 0.0
      %733 = vmatpush1.msra.mxu0 0.0
      %734 = vmatprep.subr.mxu0 0.0
      %735 = vmatpush1.msra.mxu0 0.0
      %736 = vmatprep.subr.mxu0 0.0
      %737 = vmatpush1.msra.mxu0 0.0
      %738 = vmatprep.subr.mxu0 0.0
      %739 = vmatpush1.msra.mxu0 0.0
      %740 = vmatprep.subr.mxu0 0.0
      %741 = vmatpush1.msra.mxu0 0.0
      %742 = vmatprep.subr.mxu0 0.0
      %743 = vmatpush1.msra.mxu0 0.0
      %744 = vmatprep.subr.mxu0 0.0
      %745 = vmatpush1.msra.mxu0 0.0
      %746 = vmatprep.subr.mxu0 0.0
      %747 = vmatpush1.msra.mxu0 0.0
      %748 = vmatprep.subr.mxu0 0.0
      %749 = vmatpush1.msra.mxu0 0.0
      %750 = vmatprep.subr.mxu0 0.0
      %751 = vmatpush1.msra.mxu0 0.0
      %752 = vmatprep.subr.mxu0 0.0
      %753 = vmatpush1.msra.mxu0 0.0
      %754 = vmatprep.subr.mxu0 0.0
      %755 = vmatpush1.msra.mxu0 0.0
      %756 = vmatprep.subr.mxu0 0.0
      %757 = vmatpush1.msra.mxu0 0.0
      %758 = vmatprep.subr.mxu0 0.0
      %759 = vmatpush1.msra.mxu0 0.0
      %760 = vmatprep.subr.mxu0 0.0
      %761 = vmatpush1.msra.mxu0 0.0
      %762 = vmatprep.subr.mxu0 0.0
      %763 = vmatpush1.msra.mxu0 0.0
      %764 = vmatprep.subr.mxu0 0.0
      %765 = vmatpush1.msra.mxu0 0.0
      %766 = vmatprep.subr.mxu0 0.0
      %767 = vmatpush1.msra.mxu0 0.0
      %768 = vmatprep.subr.mxu0 0.0
      %769 = vmatpush1.msra.mxu0 0.0
      %770 = vmatprep.subr.mxu0 0.0
      %771 = vmatpush1.msra.mxu0 0.0
      %772 = vmatprep.subr.mxu0 0.0
      %773 = vmatpush1.msra.mxu0 0.0
      %774 = vmatprep.subr.mxu0 0.0
      %775 = vmatpush1.msra.mxu0 0.0
      %776 = vmatprep.subr.mxu0 0.0
      %777 = vmatpush1.msra.mxu0 0.0
      %778 = vmatprep.subr.mxu0 0.0
      %779 = vmatpush1.msra.mxu0 0.0
      %780 = vmatprep.subr.mxu0 0.0
      %781 = vmatpush1.msra.mxu0 0.0
      %782 = vmatprep.subr.mxu0 0.0
      %783 = vmatpush1.msra.mxu0 0.0
      %784 = vmatprep.subr.mxu0 0.0
      %785 = vmatpush1.msra.mxu0 0.0
      %786 = vmatprep.subr.mxu0 0.0
      %787 = vmatpush1.msra.mxu0 0.0
      %788 = vmatprep.subr.mxu0 0.0
      %789 = vmatpush1.msra.mxu0 0.0
      %790 = vmatprep.subr.mxu0 0.0
      %791 = vmatpush1.msra.mxu0 0.0
      %792 = vmatprep.subr.mxu0 0.0
      %793 = vmatpush1.msra.mxu0 0.0
      %794 = vmatprep.mubr.f32.mxu0 0.0
      %795 = vmatmul.mubr.f32.gmra.mrb[0].mxu0 %v632
      %v796 = vpop.f32.mrb[0].mxu0
      %v797 = vadd.f32 0.0, %v796
      %v798 = vpop.f32.mrb[0].mxu0
      %799 = vmatprep.mubr.f32.mxu0 0.0
      %800 = vmatmul.mubr.f32.gmra.mrb[0].mxu0 %v635
      %v801 = vpop.f32.mrb[0].mxu0
      %v802 = vadd.f32 0.0, %v801
      %v803 = vpop.f32.mrb[0].mxu0
      %804 = vmatprep.mubr.f32.mxu0 0.0
      %805 = vmatmul.mubr.f32.gmra.mrb[0].mxu0 %v638
      %v806 = vpop.f32.mrb[0].mxu0
      %v807 = vadd.f32 0.0, %v806
      %v808 = vpop.f32.mrb[0].mxu0
      %809 = vmatprep.mubr.f32.mxu0 0.0
      %810 = vmatmul.mubr.f32.gmra.mrb[0].mxu0 %v641
      %v811 = vpop.f32.mrb[0].mxu0
      %v812 = vadd.f32 0.0, %v811
      %v813 = vpop.f32.mrb[0].mxu0
      %814 = vmatprep.mubr.f32.mxu0 0.0
      %815 = vmatmul.mubr.f32.gmra.mrb[0].mxu0 %v644
      %v816 = vpop.f32.mrb[0].mxu0
      %v817 = vadd.f32 0.0, %v816
      %v818 = vpop.f32.mrb[0].mxu0
      %819 = vmatprep.mubr.f32.mxu0 0.0
      %820 = vmatmul.mubr.f32.gmra.mrb[0].mxu0 %v647
      %v821 = vpop.f32.mrb[0].mxu0
      %v822 = vadd.f32 0.0, %v821
      %v823 = vpop.f32.mrb[0].mxu0
      %824 = vmatprep.mubr.f32.mxu0 0.0
      %825 = vmatmul.mubr.f32.gmra.mrb[0].mxu0 %v650
      %v826 = vpop.f32.mrb[0].mxu0
      %v827 = vadd.f32 0.0, %v826
      %v828 = vpop.f32.mrb[0].mxu0
      %829 = vmatprep.mubr.f32.mxu0 0.0
      %830 = vmatmul.mubr.f32.gmra.mrb[0].mxu0 %v653
      %v831 = vpop.f32.mrb[0].mxu0
      %v832 = vadd.f32 0.0, %v831
      %v833 = vpop.f32.mrb[0].mxu0
      %834 = vmatprep.mubr.f32.mxu0 0.0
      %835 = vmatmul.mubr.f32.gmra.mrb[0].mxu0 %v656
      %v836 = vpop.f32.mrb[0].mxu0
      %v837 = vadd.f32 0.0, %v836
      %v838 = vpop.f32.mrb[0].mxu0
      %839 = vmatprep.mubr.f32.mxu0 0.0
      %840 = vmatmul.mubr.f32.gmra.mrb[0].mxu0 %v659
      %v841 = vpop.f32.mrb[0].mxu0
      %v842 = vadd.f32 0.0, %v841
      %v843 = vpop.f32.mrb[0].mxu0
      %844 = vmatprep.mubr.f32.mxu0 0.0
      %845 = vmatmul.mubr.f32.gmra.mrb[0].mxu0 %v662
      %v846 = vpop.f32.mrb[0].mxu0
      %v847 = vadd.f32 0.0, %v846
      %v848 = vpop.f32.mrb[0].mxu0
      %849 = vmatprep.mubr.f32.mxu0 0.0
      %850 = vmatmul.mubr.f32.gmra.mrb[0].mxu0 %v665
      %v851 = vpop.f32.mrb[0].mxu0
      %v852 = vadd.f32 0.0, %v851
      %v853 = vpop.f32.mrb[0].mxu0
      %854 = vmatprep.mubr.f32.mxu0 0.0
      %855 = vmatmul.mubr.f32.gmra.mrb[0].mxu0 %v668
      %v856 = vpop.f32.mrb[0].mxu0
      %v857 = vadd.f32 0.0, %v856
      %v858 = vpop.f32.mrb[0].mxu0
      %859 = vmatprep.mubr.f32.mxu0 0.0
      %860 = vmatmul.mubr.f32.gmra.mrb[0].mxu0 %v671
      %v861 = vpop.f32.mrb[0].mxu0
      %v862 = vadd.f32 0.0, %v861
      %v863 = vpop.f32.mrb[0].mxu0
      %864 = vmatprep.mubr.f32.mxu0 0.0
      %865 = vmatmul.mubr.f32.gmra.mrb[0].mxu0 %v674
      %v866 = vpop.f32.mrb[0].mxu0
      %v867 = vadd.f32 0.0, %v866
      %v868 = vpop.f32.mrb[0].mxu0
      %869 = vmatprep.mubr.f32.mxu0 0.0
      %870 = vmatmul.mubr.f32.gmra.mrb[0].mxu0 %v677
      %v871 = vpop.f32.mrb[0].mxu0
      %v872 = vadd.f32 0.0, %v871
      %v873 = vpop.f32.mrb[0].mxu0
      %874 = vmatprep.mubr.f32.mxu0 0.0
      %875 = vmatmul.mubr.f32.gmra.mrb[0].mxu0 %v680
      %v876 = vpop.f32.mrb[0].mxu0
      %v877 = vadd.f32 0.0, %v876
      %v878 = vpop.f32.mrb[0].mxu0
      %879 = vmatprep.mubr.f32.mxu0 0.0
      %880 = vmatmul.mubr.f32.gmra.mrb[0].mxu0 %v683
      %v881 = vpop.f32.mrb[0].mxu0
      %v882 = vadd.f32 0.0, %v881
      %v883 = vpop.f32.mrb[0].mxu0
      %884 = vmatprep.mubr.f32.mxu0 0.0
      %885 = vmatmul.mubr.f32.gmra.mrb[0].mxu0 %v686
      %v886 = vpop.f32.mrb[0].mxu0
      %v887 = vadd.f32 0.0, %v886
      %v888 = vpop.f32.mrb[0].mxu0
      %889 = vmatprep.mubr.f32.mxu0 0.0
      %890 = vmatmul.mubr.f32.gmra.mrb[0].mxu0 %v689
      %v891 = vpop.f32.mrb[0].mxu0
      %v892 = vadd.f32 0.0, %v891
      %v893 = vpop.f32.mrb[0].mxu0
      %894 = vmatprep.mubr.f32.mxu0 0.0
      %895 = vmatmul.mubr.f32.gmra.mrb[0].mxu0 %v692
      %v896 = vpop.f32.mrb[0].mxu0
      %v897 = vadd.f32 0.0, %v896
      %v898 = vpop.f32.mrb[0].mxu0
      %899 = vmatprep.mubr.f32.mxu0 0.0
      %900 = vmatmul.mubr.f32.gmra.mrb[0].mxu0 %v695
      %v901 = vpop.f32.mrb[0].mxu0
      %v902 = vadd.f32 0.0, %v901
      %v903 = vpop.f32.mrb[0].mxu0
      %904 = vmatprep.mubr.f32.mxu0 0.0
      %905 = vmatmul.mubr.f32.gmra.mrb[0].mxu0 %v698
      %v906 = vpop.f32.mrb[0].mxu0
      %v907 = vadd.f32 0.0, %v906
      %v908 = vpop.f32.mrb[0].mxu0
      %909 = vmatprep.mubr.f32.mxu0 0.0
      %910 = vmatmul.mubr.f32.gmra.mrb[0].mxu0 %v701
      %v911 = vpop.f32.mrb[0].mxu0
      %v912 = vadd.f32 0.0, %v911
      %v913 = vpop.f32.mrb[0].mxu0
      %914 = vmatprep.mubr.f32.mxu0 0.0
      %915 = vmatmul.mubr.f32.gmra.mrb[0].mxu0 %v704
      %v916 = vpop.f32.mrb[0].mxu0
      %v917 = vadd.f32 0.0, %v916
      %v918 = vpop.f32.mrb[0].mxu0
      %919 = vmatprep.mubr.f32.mxu0 0.0
      %920 = vmatmul.mubr.f32.gmra.mrb[0].mxu0 %v707
      %v921 = vpop.f32.mrb[0].mxu0
      %v922 = vadd.f32 0.0, %v921
      %v923 = vpop.f32.mrb[0].mxu0
      %924 = vmatprep.mubr.f32.mxu0 0.0
      %925 = vmatmul.mubr.f32.gmra.mrb[0].mxu0 %v710
      %v926 = vpop.f32.mrb[0].mxu0
      %v927 = vadd.f32 0.0, %v926
      %v928 = vpop.f32.mrb[0].mxu0
      %929 = vmatprep.mubr.f32.mxu0 0.0
      %930 = vmatmul.mubr.f32.gmra.mrb[0].mxu0 %v713
      %v931 = vpop.f32.mrb[0].mxu0
      %v932 = vadd.f32 0.0, %v931
      %v933 = vpop.f32.mrb[0].mxu0
      %934 = vmatprep.mubr.f32.mxu0 0.0
      %935 = vmatmul.mubr.f32.gmra.mrb[0].mxu0 %v716
      %v936 = vpop.f32.mrb[0].mxu0
      %v937 = vadd.f32 0.0, %v936
      %v938 = vpop.f32.mrb[0].mxu0
      %939 = vmatprep.mubr.f32.mxu0 0.0
      %940 = vmatmul.mubr.f32.gmra.mrb[0].mxu0 %v719
      %v941 = vpop.f32.mrb[0].mxu0
      %v942 = vadd.f32 0.0, %v941
      %v943 = vpop.f32.mrb[0].mxu0
      %944 = vmatprep.mubr.f32.mxu0 0.0
      %945 = vmatmul.mubr.f32.gmra.mrb[0].mxu0 %v722
      %v946 = vpop.f32.mrb[0].mxu0
      %v947 = vadd.f32 0.0, %v946
      %v948 = vpop.f32.mrb[0].mxu0
      %949 = vmatprep.mubr.f32.mxu0 0.0
      %950 = vmatmul.mubr.f32.gmra.mrb[0].mxu0 %v725
      %v951 = vpop.f32.mrb[0].mxu0
      %v952 = vadd.f32 0.0, %v951
      %v953 = vpop.f32.mrb[0].mxu0
      %954 = vdwg.mxu0
      %v955 = vadd.f32 %v565, %v797
      %v956 = vadd.f32 %v566, %v802
      %v957 = vadd.f32 %v567, %v807
      %v958 = vadd.f32 %v568, %v812
      %v959 = vadd.f32 %v569, %v817
      %v960 = vadd.f32 %v570, %v822
      %v961 = vadd.f32 %v571, %v827
      %v962 = vadd.f32 %v572, %v832
      %v963 = vadd.f32 %v573, %v837
      %v964 = vadd.f32 %v574, %v842
      %v965 = vadd.f32 %v575, %v847
      %v966 = vadd.f32 %v576, %v852
      %v967 = vadd.f32 %v577, %v857
      %v968 = vadd.f32 %v578, %v862
      %v969 = vadd.f32 %v579, %v867
      %v970 = vadd.f32 %v580, %v872
      %v971 = vadd.f32 %v581, %v877
      %v972 = vadd.f32 %v582, %v882
      %v973 = vadd.f32 %v583, %v887
      %v974 = vadd.f32 %v584, %v892
      %v975 = vadd.f32 %v585, %v897
      %v976 = vadd.f32 %v586, %v902
      %v977 = vadd.f32 %v587, %v907
      %v978 = vadd.f32 %v588, %v912
      %v979 = vadd.f32 %v589, %v917
      %v980 = vadd.f32 %v590, %v922
      %v981 = vadd.f32 %v591, %v927
      %v982 = vadd.f32 %v592, %v932
      %v983 = vadd.f32 %v593, %v937
      %v984 = vadd.f32 %v594, %v942
      %v985 = vadd.f32 %v595, %v947
      %v986 = vadd.f32 %v596, %v952
      %v987 = vld [vmem:[%s205 + $0x2] sm:$0xff]
      %v988 = vld [vmem:[%s205 + $0xa] sm:$0xff]
      %v989 = vld [vmem:[%s205 + $0x1a] sm:$0xff]
      %v990 = vld [vmem:[%s205 + $0x22] sm:$0xff]
      %v991 = vld [vmem:[%s205 + $0x32] sm:$0xff]
      %v992 = vld [vmem:[%s205 + $0x3a] sm:$0xff]
      %v993 = vld [vmem:[%s205 + $0x4a] sm:$0xff]
      %v994 = vld [vmem:[%s205 + $0x52] sm:$0xff]
      %v995 = vld [vmem:[%s205 + $0x62] sm:$0xff]
      %v996 = vld [vmem:[%s205 + $0x6a] sm:$0xff]
      %v997 = vld [vmem:[%s205 + $0x7a] sm:$0xff]
      %v998 = vld [vmem:[%s205 + $0x82] sm:$0xff]
      %v999 = vld [vmem:[%s205 + $0x92] sm:$0xff]
      %v1000 = vld [vmem:[%s205 + $0x9a] sm:$0xff]
      %v1001 = vld [vmem:[%s205 + $0xaa] sm:$0xff]
      %v1002 = vld [vmem:[%s205 + $0xb2] sm:$0xff]
      %v1003 = vld [vmem:[%s205 + $0xc2] sm:$0xff]
      %v1004 = vld [vmem:[%s205 + $0xca] sm:$0xff]
      %v1005 = vld [vmem:[%s205 + $0xda] sm:$0xff]
      %v1006 = vld [vmem:[%s205 + $0xe2] sm:$0xff]
      %v1007 = vld [vmem:[%s205 + $0xf2] sm:$0xff]
      %v1008 = vld [vmem:[%s205 + $0xfa] sm:$0xff]
      %v1009 = vld [vmem:[%s205 + $0x10a] sm:$0xff]
      %v1010 = vld [vmem:[%s205 + $0x112] sm:$0xff]
      %v1011 = vld [vmem:[%s205 + $0x122] sm:$0xff]
      %v1012 = vld [vmem:[%s205 + $0x12a] sm:$0xff]
      %v1013 = vld [vmem:[%s205 + $0x13a] sm:$0xff]
      %v1014 = vld [vmem:[%s205 + $0x142] sm:$0xff]
      %v1015 = vld [vmem:[%s205 + $0x152] sm:$0xff]
      %v1016 = vld [vmem:[%s205 + $0x15a] sm:$0xff]
      %v1017 = vld [vmem:[%s205 + $0x16a] sm:$0xff]
      %v1018 = vld [vmem:[%s205 + $0x172] sm:$0xff]
      %s1019 = scalar_lea.vmem %s1, 8
      %v1020 = vld [vmem:[%s1019] sm:$0xf]
      %v1022 = vsel %vm239, %v987, 0
      %v1025 = vsel %vm239, %v988, 0
      %v1028 = vsel %vm239, %v989, 0
      %v1031 = vsel %vm239, %v990, 0
      %v1034 = vsel %vm239, %v991, 0
      %v1037 = vsel %vm239, %v992, 0
      %v1040 = vsel %vm239, %v993, 0
      %v1043 = vsel %vm239, %v994, 0
      %v1046 = vsel %vm239, %v995, 0
      %v1049 = vsel %vm239, %v996, 0
      %v1052 = vsel %vm239, %v997, 0
      %v1055 = vsel %vm239, %v998, 0
      %v1058 = vsel %vm239, %v999, 0
      %v1061 = vsel %vm239, %v1000, 0
      %v1064 = vsel %vm239, %v1001, 0
      %v1067 = vsel %vm239, %v1002, 0
      %v1070 = vsel %vm239, %v1003, 0
      %v1073 = vsel %vm239, %v1004, 0
      %v1076 = vsel %vm239, %v1005, 0
      %v1079 = vsel %vm239, %v1006, 0
      %v1082 = vsel %vm239, %v1007, 0
      %v1085 = vsel %vm239, %v1008, 0
      %v1088 = vsel %vm239, %v1009, 0
      %v1091 = vsel %vm239, %v1010, 0
      %v1094 = vsel %vm239, %v1011, 0
      %v1097 = vsel %vm239, %v1012, 0
      %v1100 = vsel %vm239, %v1013, 0
      %v1103 = vsel %vm239, %v1014, 0
      %v1106 = vsel %vm239, %v1015, 0
      %v1109 = vsel %vm239, %v1016, 0
      %v1112 = vsel %vm239, %v1017, 0
      %v1115 = vsel %vm239, %v1018, 0
      %v1118 = vsel %vm336, %v1020, 0
      %1120 = vmatprep.subr.mxu0 0.0
      %1121 = vmatpush1.msra.mxu0 %v1118
      %1122 = vmatprep.subr.mxu0 0.0
      %1123 = vmatpush1.msra.mxu0 0.0
      %1124 = vmatprep.subr.mxu0 0.0
      %1125 = vmatpush1.msra.mxu0 0.0
      %1126 = vmatprep.subr.mxu0 0.0
      %1127 = vmatpush1.msra.mxu0 0.0
      %1128 = vmatprep.subr.mxu0 0.0
      %1129 = vmatpush1.msra.mxu0 0.0
      %1130 = vmatprep.subr.mxu0 0.0
      %1131 = vmatpush1.msra.mxu0 0.0
      %1132 = vmatprep.subr.mxu0 0.0
      %1133 = vmatpush1.msra.mxu0 0.0
      %1134 = vmatprep.subr.mxu0 0.0
      %1135 = vmatpush1.msra.mxu0 0.0
      %1136 = vmatprep.subr.mxu0 0.0
      %1137 = vmatpush1.msra.mxu0 0.0
      %1138 = vmatprep.subr.mxu0 0.0
      %1139 = vmatpush1.msra.mxu0 0.0
      %1140 = vmatprep.subr.mxu0 0.0
      %1141 = vmatpush1.msra.mxu0 0.0
      %1142 = vmatprep.subr.mxu0 0.0
      %1143 = vmatpush1.msra.mxu0 0.0
      %1144 = vmatprep.subr.mxu0 0.0
      %1145 = vmatpush1.msra.mxu0 0.0
      %1146 = vmatprep.subr.mxu0 0.0
      %1147 = vmatpush1.msra.mxu0 0.0
      %1148 = vmatprep.subr.mxu0 0.0
      %1149 = vmatpush1.msra.mxu0 0.0
      %1150 = vmatprep.subr.mxu0 0.0
      %1151 = vmatpush1.msra.mxu0 0.0
      %1152 = vmatprep.subr.mxu0 0.0
      %1153 = vmatpush1.msra.mxu0 0.0
      %1154 = vmatprep.subr.mxu0 0.0
      %1155 = vmatpush1.msra.mxu0 0.0
      %1156 = vmatprep.subr.mxu0 0.0
      %1157 = vmatpush1.msra.mxu0 0.0
      %1158 = vmatprep.subr.mxu0 0.0
      %1159 = vmatpush1.msra.mxu0 0.0
      %1160 = vmatprep.subr.mxu0 0.0
      %1161 = vmatpush1.msra.mxu0 0.0
      %1162 = vmatprep.subr.mxu0 0.0
      %1163 = vmatpush1.msra.mxu0 0.0
      %1164 = vmatprep.subr.mxu0 0.0
      %1165 = vmatpush1.msra.mxu0 0.0
      %1166 = vmatprep.subr.mxu0 0.0
      %1167 = vmatpush1.msra.mxu0 0.0
      %1168 = vmatprep.subr.mxu0 0.0
      %1169 = vmatpush1.msra.mxu0 0.0
      %1170 = vmatprep.subr.mxu0 0.0
      %1171 = vmatpush1.msra.mxu0 0.0
      %1172 = vmatprep.subr.mxu0 0.0
      %1173 = vmatpush1.msra.mxu0 0.0
      %1174 = vmatprep.subr.mxu0 0.0
      %1175 = vmatpush1.msra.mxu0 0.0
      %1176 = vmatprep.subr.mxu0 0.0
      %1177 = vmatpush1.msra.mxu0 0.0
      %1178 = vmatprep.subr.mxu0 0.0
      %1179 = vmatpush1.msra.mxu0 0.0
      %1180 = vmatprep.subr.mxu0 0.0
      %1181 = vmatpush1.msra.mxu0 0.0
      %1182 = vmatprep.subr.mxu0 0.0
      %1183 = vmatpush1.msra.mxu0 0.0
      %1184 = vmatprep.mubr.f32.mxu0 0.0
      %1185 = vmatmul.mubr.f32.gmra.mrb[0].mxu0 %v1022
      %v1186 = vpop.f32.mrb[0].mxu0
      %v1187 = vadd.f32 0.0, %v1186
      %v1188 = vpop.f32.mrb[0].mxu0
      %1189 = vmatprep.mubr.f32.mxu0 0.0
      %1190 = vmatmul.mubr.f32.gmra.mrb[0].mxu0 %v1025
      %v1191 = vpop.f32.mrb[0].mxu0
      %v1192 = vadd.f32 0.0, %v1191
      %v1193 = vpop.f32.mrb[0].mxu0
      %1194 = vmatprep.mubr.f32.mxu0 0.0
      %1195 = vmatmul.mubr.f32.gmra.mrb[0].mxu0 %v1028
      %v1196 = vpop.f32.mrb[0].mxu0
      %v1197 = vadd.f32 0.0, %v1196
      %v1198 = vpop.f32.mrb[0].mxu0
      %1199 = vmatprep.mubr.f32.mxu0 0.0
      %1200 = vmatmul.mubr.f32.gmra.mrb[0].mxu0 %v1031
      %v1201 = vpop.f32.mrb[0].mxu0
      %v1202 = vadd.f32 0.0, %v1201
      %v1203 = vpop.f32.mrb[0].mxu0
      %1204 = vmatprep.mubr.f32.mxu0 0.0
      %1205 = vmatmul.mubr.f32.gmra.mrb[0].mxu0 %v1034
      %v1206 = vpop.f32.mrb[0].mxu0
      %v1207 = vadd.f32 0.0, %v1206
      %v1208 = vpop.f32.mrb[0].mxu0
      %1209 = vmatprep.mubr.f32.mxu0 0.0
      %1210 = vmatmul.mubr.f32.gmra.mrb[0].mxu0 %v1037
      %v1211 = vpop.f32.mrb[0].mxu0
      %v1212 = vadd.f32 0.0, %v1211
      %v1213 = vpop.f32.mrb[0].mxu0
      %1214 = vmatprep.mubr.f32.mxu0 0.0
      %1215 = vmatmul.mubr.f32.gmra.mrb[0].mxu0 %v1040
      %v1216 = vpop.f32.mrb[0].mxu0
      %v1217 = vadd.f32 0.0, %v1216
      %v1218 = vpop.f32.mrb[0].mxu0
      %1219 = vmatprep.mubr.f32.mxu0 0.0
      %1220 = vmatmul.mubr.f32.gmra.mrb[0].mxu0 %v1043
      %v1221 = vpop.f32.mrb[0].mxu0
      %v1222 = vadd.f32 0.0, %v1221
      %v1223 = vpop.f32.mrb[0].mxu0
      %1224 = vmatprep.mubr.f32.mxu0 0.0
      %1225 = vmatmul.mubr.f32.gmra.mrb[0].mxu0 %v1046
      %v1226 = vpop.f32.mrb[0].mxu0
      %v1227 = vadd.f32 0.0, %v1226
      %v1228 = vpop.f32.mrb[0].mxu0
      %1229 = vmatprep.mubr.f32.mxu0 0.0
      %1230 = vmatmul.mubr.f32.gmra.mrb[0].mxu0 %v1049
      %v1231 = vpop.f32.mrb[0].mxu0
      %v1232 = vadd.f32 0.0, %v1231
      %v1233 = vpop.f32.mrb[0].mxu0
      %1234 = vmatprep.mubr.f32.mxu0 0.0
      %1235 = vmatmul.mubr.f32.gmra.mrb[0].mxu0 %v1052
      %v1236 = vpop.f32.mrb[0].mxu0
      %v1237 = vadd.f32 0.0, %v1236
      %v1238 = vpop.f32.mrb[0].mxu0
      %1239 = vmatprep.mubr.f32.mxu0 0.0
      %1240 = vmatmul.mubr.f32.gmra.mrb[0].mxu0 %v1055
      %v1241 = vpop.f32.mrb[0].mxu0
      %v1242 = vadd.f32 0.0, %v1241
      %v1243 = vpop.f32.mrb[0].mxu0
      %1244 = vmatprep.mubr.f32.mxu0 0.0
      %1245 = vmatmul.mubr.f32.gmra.mrb[0].mxu0 %v1058
      %v1246 = vpop.f32.mrb[0].mxu0
      %v1247 = vadd.f32 0.0, %v1246
      %v1248 = vpop.f32.mrb[0].mxu0
      %1249 = vmatprep.mubr.f32.mxu0 0.0
      %1250 = vmatmul.mubr.f32.gmra.mrb[0].mxu0 %v1061
      %v1251 = vpop.f32.mrb[0].mxu0
      %v1252 = vadd.f32 0.0, %v1251
      %v1253 = vpop.f32.mrb[0].mxu0
      %1254 = vmatprep.mubr.f32.mxu0 0.0
      %1255 = vmatmul.mubr.f32.gmra.mrb[0].mxu0 %v1064
      %v1256 = vpop.f32.mrb[0].mxu0
      %v1257 = vadd.f32 0.0, %v1256
      %v1258 = vpop.f32.mrb[0].mxu0
      %1259 = vmatprep.mubr.f32.mxu0 0.0
      %1260 = vmatmul.mubr.f32.gmra.mrb[0].mxu0 %v1067
      %v1261 = vpop.f32.mrb[0].mxu0
      %v1262 = vadd.f32 0.0, %v1261
      %v1263 = vpop.f32.mrb[0].mxu0
      %1264 = vmatprep.mubr.f32.mxu0 0.0
      %1265 = vmatmul.mubr.f32.gmra.mrb[0].mxu0 %v1070
      %v1266 = vpop.f32.mrb[0].mxu0
      %v1267 = vadd.f32 0.0, %v1266
      %v1268 = vpop.f32.mrb[0].mxu0
      %1269 = vmatprep.mubr.f32.mxu0 0.0
      %1270 = vmatmul.mubr.f32.gmra.mrb[0].mxu0 %v1073
      %v1271 = vpop.f32.mrb[0].mxu0
      %v1272 = vadd.f32 0.0, %v1271
      %v1273 = vpop.f32.mrb[0].mxu0
      %1274 = vmatprep.mubr.f32.mxu0 0.0
      %1275 = vmatmul.mubr.f32.gmra.mrb[0].mxu0 %v1076
      %v1276 = vpop.f32.mrb[0].mxu0
      %v1277 = vadd.f32 0.0, %v1276
      %v1278 = vpop.f32.mrb[0].mxu0
      %1279 = vmatprep.mubr.f32.mxu0 0.0
      %1280 = vmatmul.mubr.f32.gmra.mrb[0].mxu0 %v1079
      %v1281 = vpop.f32.mrb[0].mxu0
      %v1282 = vadd.f32 0.0, %v1281
      %v1283 = vpop.f32.mrb[0].mxu0
      %1284 = vmatprep.mubr.f32.mxu0 0.0
      %1285 = vmatmul.mubr.f32.gmra.mrb[0].mxu0 %v1082
      %v1286 = vpop.f32.mrb[0].mxu0
      %v1287 = vadd.f32 0.0, %v1286
      %v1288 = vpop.f32.mrb[0].mxu0
      %1289 = vmatprep.mubr.f32.mxu0 0.0
      %1290 = vmatmul.mubr.f32.gmra.mrb[0].mxu0 %v1085
      %v1291 = vpop.f32.mrb[0].mxu0
      %v1292 = vadd.f32 0.0, %v1291
      %v1293 = vpop.f32.mrb[0].mxu0
      %1294 = vmatprep.mubr.f32.mxu0 0.0
      %1295 = vmatmul.mubr.f32.gmra.mrb[0].mxu0 %v1088
      %v1296 = vpop.f32.mrb[0].mxu0
      %v1297 = vadd.f32 0.0, %v1296
      %v1298 = vpop.f32.mrb[0].mxu0
      %1299 = vmatprep.mubr.f32.mxu0 0.0
      %1300 = vmatmul.mubr.f32.gmra.mrb[0].mxu0 %v1091
      %v1301 = vpop.f32.mrb[0].mxu0
      %v1302 = vadd.f32 0.0, %v1301
      %v1303 = vpop.f32.mrb[0].mxu0
      %1304 = vmatprep.mubr.f32.mxu0 0.0
      %1305 = vmatmul.mubr.f32.gmra.mrb[0].mxu0 %v1094
      %v1306 = vpop.f32.mrb[0].mxu0
      %v1307 = vadd.f32 0.0, %v1306
      %v1308 = vpop.f32.mrb[0].mxu0
      %1309 = vmatprep.mubr.f32.mxu0 0.0
      %1310 = vmatmul.mubr.f32.gmra.mrb[0].mxu0 %v1097
      %v1311 = vpop.f32.mrb[0].mxu0
      %v1312 = vadd.f32 0.0, %v1311
      %v1313 = vpop.f32.mrb[0].mxu0
      %1314 = vmatprep.mubr.f32.mxu0 0.0
      %1315 = vmatmul.mubr.f32.gmra.mrb[0].mxu0 %v1100
      %v1316 = vpop.f32.mrb[0].mxu0
      %v1317 = vadd.f32 0.0, %v1316
      %v1318 = vpop.f32.mrb[0].mxu0
      %1319 = vmatprep.mubr.f32.mxu0 0.0
      %1320 = vmatmul.mubr.f32.gmra.mrb[0].mxu0 %v1103
      %v1321 = vpop.f32.mrb[0].mxu0
      %v1322 = vadd.f32 0.0, %v1321
      %v1323 = vpop.f32.mrb[0].mxu0
      %1324 = vmatprep.mubr.f32.mxu0 0.0
      %1325 = vmatmul.mubr.f32.gmra.mrb[0].mxu0 %v1106
      %v1326 = vpop.f32.mrb[0].mxu0
      %v1327 = vadd.f32 0.0, %v1326
      %v1328 = vpop.f32.mrb[0].mxu0
      %1329 = vmatprep.mubr.f32.mxu0 0.0
      %1330 = vmatmul.mubr.f32.gmra.mrb[0].mxu0 %v1109
      %v1331 = vpop.f32.mrb[0].mxu0
      %v1332 = vadd.f32 0.0, %v1331
      %v1333 = vpop.f32.mrb[0].mxu0
      %1334 = vmatprep.mubr.f32.mxu0 0.0
      %1335 = vmatmul.mubr.f32.gmra.mrb[0].mxu0 %v1112
      %v1336 = vpop.f32.mrb[0].mxu0
      %v1337 = vadd.f32 0.0, %v1336
      %v1338 = vpop.f32.mrb[0].mxu0
      %1339 = vmatprep.mubr.f32.mxu0 0.0
      %1340 = vmatmul.mubr.f32.gmra.mrb[0].mxu0 %v1115
      %v1341 = vpop.f32.mrb[0].mxu0
      %v1342 = vadd.f32 0.0, %v1341
      %v1343 = vpop.f32.mrb[0].mxu0
      %1344 = vdwg.mxu0
      %v1345 = vadd.f32 %v955, %v1187
      %v1346 = vadd.f32 %v956, %v1192
      %v1347 = vadd.f32 %v957, %v1197
      %v1348 = vadd.f32 %v958, %v1202
      %v1349 = vadd.f32 %v959, %v1207
      %v1350 = vadd.f32 %v960, %v1212
      %v1351 = vadd.f32 %v961, %v1217
      %v1352 = vadd.f32 %v962, %v1222
      %v1353 = vadd.f32 %v963, %v1227
      %v1354 = vadd.f32 %v964, %v1232
      %v1355 = vadd.f32 %v965, %v1237
      %v1356 = vadd.f32 %v966, %v1242
      %v1357 = vadd.f32 %v967, %v1247
      %v1358 = vadd.f32 %v968, %v1252
      %v1359 = vadd.f32 %v969, %v1257
      %v1360 = vadd.f32 %v970, %v1262
      %v1361 = vadd.f32 %v971, %v1267
      %v1362 = vadd.f32 %v972, %v1272
      %v1363 = vadd.f32 %v973, %v1277
      %v1364 = vadd.f32 %v974, %v1282
      %v1365 = vadd.f32 %v975, %v1287
      %v1366 = vadd.f32 %v976, %v1292
      %v1367 = vadd.f32 %v977, %v1297
      %v1368 = vadd.f32 %v978, %v1302
      %v1369 = vadd.f32 %v979, %v1307
      %v1370 = vadd.f32 %v980, %v1312
      %v1371 = vadd.f32 %v981, %v1317
      %v1372 = vadd.f32 %v982, %v1322
      %v1373 = vadd.f32 %v983, %v1327
      %v1374 = vadd.f32 %v984, %v1332
      %v1375 = vadd.f32 %v985, %v1337
      %v1376 = vadd.f32 %v986, %v1342
      %s1377 = sadd.s32 %s196, 1
      %s1378 = smul.u32 %s1377, 24
      %s1379 = scalar_lea.vmem %s184, %s1378
      %v1380 = vld [vmem:[%s1379] sm:$0xff]
      %v1381 = vld [vmem:[%s1379 + $0x8] sm:$0xff]
      %v1382 = vld [vmem:[%s1379 + $0x18] sm:$0xff]
      %v1383 = vld [vmem:[%s1379 + $0x20] sm:$0xff]
      %v1384 = vld [vmem:[%s1379 + $0x30] sm:$0xff]
      %v1385 = vld [vmem:[%s1379 + $0x38] sm:$0xff]
      %v1386 = vld [vmem:[%s1379 + $0x48] sm:$0xff]
      %v1387 = vld [vmem:[%s1379 + $0x50] sm:$0xff]
      %v1388 = vld [vmem:[%s1379 + $0x60] sm:$0xff]
      %v1389 = vld [vmem:[%s1379 + $0x68] sm:$0xff]
      %v1390 = vld [vmem:[%s1379 + $0x78] sm:$0xff]
      %v1391 = vld [vmem:[%s1379 + $0x80] sm:$0xff]
      %v1392 = vld [vmem:[%s1379 + $0x90] sm:$0xff]
      %v1393 = vld [vmem:[%s1379 + $0x98] sm:$0xff]
      %v1394 = vld [vmem:[%s1379 + $0xa8] sm:$0xff]
      %v1395 = vld [vmem:[%s1379 + $0xb0] sm:$0xff]
      %v1396 = vld [vmem:[%s1379 + $0xc0] sm:$0xff]
      %v1397 = vld [vmem:[%s1379 + $0xc8] sm:$0xff]
      %v1398 = vld [vmem:[%s1379 + $0xd8] sm:$0xff]
      %v1399 = vld [vmem:[%s1379 + $0xe0] sm:$0xff]
      %v1400 = vld [vmem:[%s1379 + $0xf0] sm:$0xff]
      %v1401 = vld [vmem:[%s1379 + $0xf8] sm:$0xff]
      %v1402 = vld [vmem:[%s1379 + $0x108] sm:$0xff]
      %v1403 = vld [vmem:[%s1379 + $0x110] sm:$0xff]
      %v1404 = vld [vmem:[%s1379 + $0x120] sm:$0xff]
      %v1405 = vld [vmem:[%s1379 + $0x128] sm:$0xff]
      %v1406 = vld [vmem:[%s1379 + $0x138] sm:$0xff]
      %v1407 = vld [vmem:[%s1379 + $0x140] sm:$0xff]
      %v1408 = vld [vmem:[%s1379 + $0x150] sm:$0xff]
      %v1409 = vld [vmem:[%s1379 + $0x158] sm:$0xff]
      %v1410 = vld [vmem:[%s1379 + $0x168] sm:$0xff]
      %v1411 = vld [vmem:[%s1379 + $0x170] sm:$0xff]
      %s1412 = scalar_lea.vmem %s1, 12
      %v1413 = vld [vmem:[%s1412] sm:$0xf]
      %v1415 = vsel %vm239, %v1380, 0
      %v1418 = vsel %vm239, %v1381, 0
      %v1421 = vsel %vm239, %v1382, 0
      %v1424 = vsel %vm239, %v1383, 0
      %v1427 = vsel %vm239, %v1384, 0
      %v1430 = vsel %vm239, %v1385, 0
      %v1433 = vsel %vm239, %v1386, 0
      %v1436 = vsel %vm239, %v1387, 0
      %v1439 = vsel %vm239, %v1388, 0
      %v1442 = vsel %vm239, %v1389, 0
      %v1445 = vsel %vm239, %v1390, 0
      %v1448 = vsel %vm239, %v1391, 0
      %v1451 = vsel %vm239, %v1392, 0
      %v1454 = vsel %vm239, %v1393, 0
      %v1457 = vsel %vm239, %v1394, 0
      %v1460 = vsel %vm239, %v1395, 0
      %v1463 = vsel %vm239, %v1396, 0
      %v1466 = vsel %vm239, %v1397, 0
      %v1469 = vsel %vm239, %v1398, 0
      %v1472 = vsel %vm239, %v1399, 0
      %v1475 = vsel %vm239, %v1400, 0
      %v1478 = vsel %vm239, %v1401, 0
      %v1481 = vsel %vm239, %v1402, 0
      %v1484 = vsel %vm239, %v1403, 0
      %v1487 = vsel %vm239, %v1404, 0
      %v1490 = vsel %vm239, %v1405, 0
      %v1493 = vsel %vm239, %v1406, 0
      %v1496 = vsel %vm239, %v1407, 0
      %v1499 = vsel %vm239, %v1408, 0
      %v1502 = vsel %vm239, %v1409, 0
      %v1505 = vsel %vm239, %v1410, 0
      %v1508 = vsel %vm239, %v1411, 0
      %v1511 = vsel %vm336, %v1413, 0
      %1513 = vmatprep.subr.mxu0 0.0
      %1514 = vmatpush1.msra.mxu0 %v1511
      %1515 = vmatprep.subr.mxu0 0.0
      %1516 = vmatpush1.msra.mxu0 0.0
      %1517 = vmatprep.subr.mxu0 0.0
      %1518 = vmatpush1.msra.mxu0 0.0
      %1519 = vmatprep.subr.mxu0 0.0
      %1520 = vmatpush1.msra.mxu0 0.0
      %1521 = vmatprep.subr.mxu0 0.0
      %1522 = vmatpush1.msra.mxu0 0.0
      %1523 = vmatprep.subr.mxu0 0.0
      %1524 = vmatpush1.msra.mxu0 0.0
      %1525 = vmatprep.subr.mxu0 0.0
      %1526 = vmatpush1.msra.mxu0 0.0
      %1527 = vmatprep.subr.mxu0 0.0
      %1528 = vmatpush1.msra.mxu0 0.0
      %1529 = vmatprep.subr.mxu0 0.0
      %1530 = vmatpush1.msra.mxu0 0.0
      %1531 = vmatprep.subr.mxu0 0.0
      %1532 = vmatpush1.msra.mxu0 0.0
      %1533 = vmatprep.subr.mxu0 0.0
      %1534 = vmatpush1.msra.mxu0 0.0
      %1535 = vmatprep.subr.mxu0 0.0
      %1536 = vmatpush1.msra.mxu0 0.0
      %1537 = vmatprep.subr.mxu0 0.0
      %1538 = vmatpush1.msra.mxu0 0.0
      %1539 = vmatprep.subr.mxu0 0.0
      %1540 = vmatpush1.msra.mxu0 0.0
      %1541 = vmatprep.subr.mxu0 0.0
      %1542 = vmatpush1.msra.mxu0 0.0
      %1543 = vmatprep.subr.mxu0 0.0
      %1544 = vmatpush1.msra.mxu0 0.0
      %1545 = vmatprep.subr.mxu0 0.0
      %1546 = vmatpush1.msra.mxu0 0.0
      %1547 = vmatprep.subr.mxu0 0.0
      %1548 = vmatpush1.msra.mxu0 0.0
      %1549 = vmatprep.subr.mxu0 0.0
      %1550 = vmatpush1.msra.mxu0 0.0
      %1551 = vmatprep.subr.mxu0 0.0
      %1552 = vmatpush1.msra.mxu0 0.0
      %1553 = vmatprep.subr.mxu0 0.0
      %1554 = vmatpush1.msra.mxu0 0.0
      %1555 = vmatprep.subr.mxu0 0.0
      %1556 = vmatpush1.msra.mxu0 0.0
      %1557 = vmatprep.subr.mxu0 0.0
      %1558 = vmatpush1.msra.mxu0 0.0
      %1559 = vmatprep.subr.mxu0 0.0
      %1560 = vmatpush1.msra.mxu0 0.0
      %1561 = vmatprep.subr.mxu0 0.0
      %1562 = vmatpush1.msra.mxu0 0.0
      %1563 = vmatprep.subr.mxu0 0.0
      %1564 = vmatpush1.msra.mxu0 0.0
      %1565 = vmatprep.subr.mxu0 0.0
      %1566 = vmatpush1.msra.mxu0 0.0
      %1567 = vmatprep.subr.mxu0 0.0
      %1568 = vmatpush1.msra.mxu0 0.0
      %1569 = vmatprep.subr.mxu0 0.0
      %1570 = vmatpush1.msra.mxu0 0.0
      %1571 = vmatprep.subr.mxu0 0.0
      %1572 = vmatpush1.msra.mxu0 0.0
      %1573 = vmatprep.subr.mxu0 0.0
      %1574 = vmatpush1.msra.mxu0 0.0
      %1575 = vmatprep.subr.mxu0 0.0
      %1576 = vmatpush1.msra.mxu0 0.0
      %1577 = vmatprep.mubr.f32.mxu0 0.0
      %1578 = vmatmul.mubr.f32.gmra.mrb[0].mxu0 %v1415
      %v1579 = vpop.f32.mrb[0].mxu0
      %v1580 = vadd.f32 0.0, %v1579
      %v1581 = vpop.f32.mrb[0].mxu0
      %1582 = vmatprep.mubr.f32.mxu0 0.0
      %1583 = vmatmul.mubr.f32.gmra.mrb[0].mxu0 %v1418
      %v1584 = vpop.f32.mrb[0].mxu0
      %v1585 = vadd.f32 0.0, %v1584
      %v1586 = vpop.f32.mrb[0].mxu0
      %1587 = vmatprep.mubr.f32.mxu0 0.0
      %1588 = vmatmul.mubr.f32.gmra.mrb[0].mxu0 %v1421
      %v1589 = vpop.f32.mrb[0].mxu0
      %v1590 = vadd.f32 0.0, %v1589
      %v1591 = vpop.f32.mrb[0].mxu0
      %1592 = vmatprep.mubr.f32.mxu0 0.0
      %1593 = vmatmul.mubr.f32.gmra.mrb[0].mxu0 %v1424
      %v1594 = vpop.f32.mrb[0].mxu0
      %v1595 = vadd.f32 0.0, %v1594
      %v1596 = vpop.f32.mrb[0].mxu0
      %1597 = vmatprep.mubr.f32.mxu0 0.0
      %1598 = vmatmul.mubr.f32.gmra.mrb[0].mxu0 %v1427
      %v1599 = vpop.f32.mrb[0].mxu0
      %v1600 = vadd.f32 0.0, %v1599
      %v1601 = vpop.f32.mrb[0].mxu0
      %1602 = vmatprep.mubr.f32.mxu0 0.0
      %1603 = vmatmul.mubr.f32.gmra.mrb[0].mxu0 %v1430
      %v1604 = vpop.f32.mrb[0].mxu0
      %v1605 = vadd.f32 0.0, %v1604
      %v1606 = vpop.f32.mrb[0].mxu0
      %1607 = vmatprep.mubr.f32.mxu0 0.0
      %1608 = vmatmul.mubr.f32.gmra.mrb[0].mxu0 %v1433
      %v1609 = vpop.f32.mrb[0].mxu0
      %v1610 = vadd.f32 0.0, %v1609
      %v1611 = vpop.f32.mrb[0].mxu0
      %1612 = vmatprep.mubr.f32.mxu0 0.0
      %1613 = vmatmul.mubr.f32.gmra.mrb[0].mxu0 %v1436
      %v1614 = vpop.f32.mrb[0].mxu0
      %v1615 = vadd.f32 0.0, %v1614
      %v1616 = vpop.f32.mrb[0].mxu0
      %1617 = vmatprep.mubr.f32.mxu0 0.0
      %1618 = vmatmul.mubr.f32.gmra.mrb[0].mxu0 %v1439
      %v1619 = vpop.f32.mrb[0].mxu0
      %v1620 = vadd.f32 0.0, %v1619
      %v1621 = vpop.f32.mrb[0].mxu0
      %1622 = vmatprep.mubr.f32.mxu0 0.0
      %1623 = vmatmul.mubr.f32.gmra.mrb[0].mxu0 %v1442
      %v1624 = vpop.f32.mrb[0].mxu0
      %v1625 = vadd.f32 0.0, %v1624
      %v1626 = vpop.f32.mrb[0].mxu0
      %1627 = vmatprep.mubr.f32.mxu0 0.0
      %1628 = vmatmul.mubr.f32.gmra.mrb[0].mxu0 %v1445
      %v1629 = vpop.f32.mrb[0].mxu0
      %v1630 = vadd.f32 0.0, %v1629
      %v1631 = vpop.f32.mrb[0].mxu0
      %1632 = vmatprep.mubr.f32.mxu0 0.0
      %1633 = vmatmul.mubr.f32.gmra.mrb[0].mxu0 %v1448
      %v1634 = vpop.f32.mrb[0].mxu0
      %v1635 = vadd.f32 0.0, %v1634
      %v1636 = vpop.f32.mrb[0].mxu0
      %1637 = vmatprep.mubr.f32.mxu0 0.0
      %1638 = vmatmul.mubr.f32.gmra.mrb[0].mxu0 %v1451
      %v1639 = vpop.f32.mrb[0].mxu0
      %v1640 = vadd.f32 0.0, %v1639
      %v1641 = vpop.f32.mrb[0].mxu0
      %1642 = vmatprep.mubr.f32.mxu0 0.0
      %1643 = vmatmul.mubr.f32.gmra.mrb[0].mxu0 %v1454
      %v1644 = vpop.f32.mrb[0].mxu0
      %v1645 = vadd.f32 0.0, %v1644
      %v1646 = vpop.f32.mrb[0].mxu0
      %1647 = vmatprep.mubr.f32.mxu0 0.0
      %1648 = vmatmul.mubr.f32.gmra.mrb[0].mxu0 %v1457
      %v1649 = vpop.f32.mrb[0].mxu0
      %v1650 = vadd.f32 0.0, %v1649
      %v1651 = vpop.f32.mrb[0].mxu0
      %1652 = vmatprep.mubr.f32.mxu0 0.0
      %1653 = vmatmul.mubr.f32.gmra.mrb[0].mxu0 %v1460
      %v1654 = vpop.f32.mrb[0].mxu0
      %v1655 = vadd.f32 0.0, %v1654
      %v1656 = vpop.f32.mrb[0].mxu0
      %1657 = vmatprep.mubr.f32.mxu0 0.0
      %1658 = vmatmul.mubr.f32.gmra.mrb[0].mxu0 %v1463
      %v1659 = vpop.f32.mrb[0].mxu0
      %v1660 = vadd.f32 0.0, %v1659
      %v1661 = vpop.f32.mrb[0].mxu0
      %1662 = vmatprep.mubr.f32.mxu0 0.0
      %1663 = vmatmul.mubr.f32.gmra.mrb[0].mxu0 %v1466
      %v1664 = vpop.f32.mrb[0].mxu0
      %v1665 = vadd.f32 0.0, %v1664
      %v1666 = vpop.f32.mrb[0].mxu0
      %1667 = vmatprep.mubr.f32.mxu0 0.0
      %1668 = vmatmul.mubr.f32.gmra.mrb[0].mxu0 %v1469
      %v1669 = vpop.f32.mrb[0].mxu0
      %v1670 = vadd.f32 0.0, %v1669
      %v1671 = vpop.f32.mrb[0].mxu0
      %1672 = vmatprep.mubr.f32.mxu0 0.0
      %1673 = vmatmul.mubr.f32.gmra.mrb[0].mxu0 %v1472
      %v1674 = vpop.f32.mrb[0].mxu0
      %v1675 = vadd.f32 0.0, %v1674
      %v1676 = vpop.f32.mrb[0].mxu0
      %1677 = vmatprep.mubr.f32.mxu0 0.0
      %1678 = vmatmul.mubr.f32.gmra.mrb[0].mxu0 %v1475
      %v1679 = vpop.f32.mrb[0].mxu0
      %v1680 = vadd.f32 0.0, %v1679
      %v1681 = vpop.f32.mrb[0].mxu0
      %1682 = vmatprep.mubr.f32.mxu0 0.0
      %1683 = vmatmul.mubr.f32.gmra.mrb[0].mxu0 %v1478
      %v1684 = vpop.f32.mrb[0].mxu0
      %v1685 = vadd.f32 0.0, %v1684
      %v1686 = vpop.f32.mrb[0].mxu0
      %1687 = vmatprep.mubr.f32.mxu0 0.0
      %1688 = vmatmul.mubr.f32.gmra.mrb[0].mxu0 %v1481
      %v1689 = vpop.f32.mrb[0].mxu0
      %v1690 = vadd.f32 0.0, %v1689
      %v1691 = vpop.f32.mrb[0].mxu0
      %1692 = vmatprep.mubr.f32.mxu0 0.0
      %1693 = vmatmul.mubr.f32.gmra.mrb[0].mxu0 %v1484
      %v1694 = vpop.f32.mrb[0].mxu0
      %v1695 = vadd.f32 0.0, %v1694
      %v1696 = vpop.f32.mrb[0].mxu0
      %1697 = vmatprep.mubr.f32.mxu0 0.0
      %1698 = vmatmul.mubr.f32.gmra.mrb[0].mxu0 %v1487
      %v1699 = vpop.f32.mrb[0].mxu0
      %v1700 = vadd.f32 0.0, %v1699
      %v1701 = vpop.f32.mrb[0].mxu0
      %1702 = vmatprep.mubr.f32.mxu0 0.0
      %1703 = vmatmul.mubr.f32.gmra.mrb[0].mxu0 %v1490
      %v1704 = vpop.f32.mrb[0].mxu0
      %v1705 = vadd.f32 0.0, %v1704
      %v1706 = vpop.f32.mrb[0].mxu0
      %1707 = vmatprep.mubr.f32.mxu0 0.0
      %1708 = vmatmul.mubr.f32.gmra.mrb[0].mxu0 %v1493
      %v1709 = vpop.f32.mrb[0].mxu0
      %v1710 = vadd.f32 0.0, %v1709
      %v1711 = vpop.f32.mrb[0].mxu0
      %1712 = vmatprep.mubr.f32.mxu0 0.0
      %1713 = vmatmul.mubr.f32.gmra.mrb[0].mxu0 %v1496
      %v1714 = vpop.f32.mrb[0].mxu0
      %v1715 = vadd.f32 0.0, %v1714
      %v1716 = vpop.f32.mrb[0].mxu0
      %1717 = vmatprep.mubr.f32.mxu0 0.0
      %1718 = vmatmul.mubr.f32.gmra.mrb[0].mxu0 %v1499
      %v1719 = vpop.f32.mrb[0].mxu0
      %v1720 = vadd.f32 0.0, %v1719
      %v1721 = vpop.f32.mrb[0].mxu0
      %1722 = vmatprep.mubr.f32.mxu0 0.0
      %1723 = vmatmul.mubr.f32.gmra.mrb[0].mxu0 %v1502
      %v1724 = vpop.f32.mrb[0].mxu0
      %v1725 = vadd.f32 0.0, %v1724
      %v1726 = vpop.f32.mrb[0].mxu0
      %1727 = vmatprep.mubr.f32.mxu0 0.0
      %1728 = vmatmul.mubr.f32.gmra.mrb[0].mxu0 %v1505
      %v1729 = vpop.f32.mrb[0].mxu0
      %v1730 = vadd.f32 0.0, %v1729
      %v1731 = vpop.f32.mrb[0].mxu0
      %1732 = vmatprep.mubr.f32.mxu0 0.0
      %1733 = vmatmul.mubr.f32.gmra.mrb[0].mxu0 %v1508
      %v1734 = vpop.f32.mrb[0].mxu0
      %v1735 = vadd.f32 0.0, %v1734
      %v1736 = vpop.f32.mrb[0].mxu0
      %1737 = vdwg.mxu0
      %v1738 = vadd.f32 %v1345, %v1580
      %v1739 = vadd.f32 %v1346, %v1585
      %v1740 = vadd.f32 %v1347, %v1590
      %v1741 = vadd.f32 %v1348, %v1595
      %v1742 = vadd.f32 %v1349, %v1600
      %v1743 = vadd.f32 %v1350, %v1605
      %v1744 = vadd.f32 %v1351, %v1610
      %v1745 = vadd.f32 %v1352, %v1615
      %v1746 = vadd.f32 %v1353, %v1620
      %v1747 = vadd.f32 %v1354, %v1625
      %v1748 = vadd.f32 %v1355, %v1630
      %v1749 = vadd.f32 %v1356, %v1635
      %v1750 = vadd.f32 %v1357, %v1640
      %v1751 = vadd.f32 %v1358, %v1645
      %v1752 = vadd.f32 %v1359, %v1650
      %v1753 = vadd.f32 %v1360, %v1655
      %v1754 = vadd.f32 %v1361, %v1660
      %v1755 = vadd.f32 %v1362, %v1665
      %v1756 = vadd.f32 %v1363, %v1670
      %v1757 = vadd.f32 %v1364, %v1675
      %v1758 = vadd.f32 %v1365, %v1680
      %v1759 = vadd.f32 %v1366, %v1685
      %v1760 = vadd.f32 %v1367, %v1690
      %v1761 = vadd.f32 %v1368, %v1695
      %v1762 = vadd.f32 %v1369, %v1700
      %v1763 = vadd.f32 %v1370, %v1705
      %v1764 = vadd.f32 %v1371, %v1710
      %v1765 = vadd.f32 %v1372, %v1715
      %v1766 = vadd.f32 %v1373, %v1720
      %v1767 = vadd.f32 %v1374, %v1725
      %v1768 = vadd.f32 %v1375, %v1730
      %v1769 = vadd.f32 %v1376, %v1735
      %v1770 = vld [vmem:[%s1379 + $0x1] sm:$0xff]
      %v1771 = vld [vmem:[%s1379 + $0x9] sm:$0xff]
      %v1772 = vld [vmem:[%s1379 + $0x19] sm:$0xff]
      %v1773 = vld [vmem:[%s1379 + $0x21] sm:$0xff]
      %v1774 = vld [vmem:[%s1379 + $0x31] sm:$0xff]
      %v1775 = vld [vmem:[%s1379 + $0x39] sm:$0xff]
      %v1776 = vld [vmem:[%s1379 + $0x49] sm:$0xff]
      %v1777 = vld [vmem:[%s1379 + $0x51] sm:$0xff]
      %v1778 = vld [vmem:[%s1379 + $0x61] sm:$0xff]
      %v1779 = vld [vmem:[%s1379 + $0x69] sm:$0xff]
      %v1780 = vld [vmem:[%s1379 + $0x79] sm:$0xff]
      %v1781 = vld [vmem:[%s1379 + $0x81] sm:$0xff]
      %v1782 = vld [vmem:[%s1379 + $0x91] sm:$0xff]
      %v1783 = vld [vmem:[%s1379 + $0x99] sm:$0xff]
      %v1784 = vld [vmem:[%s1379 + $0xa9] sm:$0xff]
      %v1785 = vld [vmem:[%s1379 + $0xb1] sm:$0xff]
      %v1786 = vld [vmem:[%s1379 + $0xc1] sm:$0xff]
      %v1787 = vld [vmem:[%s1379 + $0xc9] sm:$0xff]
      %v1788 = vld [vmem:[%s1379 + $0xd9] sm:$0xff]
      %v1789 = vld [vmem:[%s1379 + $0xe1] sm:$0xff]
      %v1790 = vld [vmem:[%s1379 + $0xf1] sm:$0xff]
      %v1791 = vld [vmem:[%s1379 + $0xf9] sm:$0xff]
      %v1792 = vld [vmem:[%s1379 + $0x109] sm:$0xff]
      %v1793 = vld [vmem:[%s1379 + $0x111] sm:$0xff]
      %v1794 = vld [vmem:[%s1379 + $0x121] sm:$0xff]
      %v1795 = vld [vmem:[%s1379 + $0x129] sm:$0xff]
      %v1796 = vld [vmem:[%s1379 + $0x139] sm:$0xff]
      %v1797 = vld [vmem:[%s1379 + $0x141] sm:$0xff]
      %v1798 = vld [vmem:[%s1379 + $0x151] sm:$0xff]
      %v1799 = vld [vmem:[%s1379 + $0x159] sm:$0xff]
      %v1800 = vld [vmem:[%s1379 + $0x169] sm:$0xff]
      %v1801 = vld [vmem:[%s1379 + $0x171] sm:$0xff]
      %s1802 = scalar_lea.vmem %s1, 16
      %v1803 = vld [vmem:[%s1802] sm:$0xf]
      %v1805 = vsel %vm239, %v1770, 0
      %v1808 = vsel %vm239, %v1771, 0
      %v1811 = vsel %vm239, %v1772, 0
      %v1814 = vsel %vm239, %v1773, 0
      %v1817 = vsel %vm239, %v1774, 0
      %v1820 = vsel %vm239, %v1775, 0
      %v1823 = vsel %vm239, %v1776, 0
      %v1826 = vsel %vm239, %v1777, 0
      %v1829 = vsel %vm239, %v1778, 0
      %v1832 = vsel %vm239, %v1779, 0
      %v1835 = vsel %vm239, %v1780, 0
      %v1838 = vsel %vm239, %v1781, 0
      %v1841 = vsel %vm239, %v1782, 0
      %v1844 = vsel %vm239, %v1783, 0
      %v1847 = vsel %vm239, %v1784, 0
      %v1850 = vsel %vm239, %v1785, 0
      %v1853 = vsel %vm239, %v1786, 0
      %v1856 = vsel %vm239, %v1787, 0
      %v1859 = vsel %vm239, %v1788, 0
      %v1862 = vsel %vm239, %v1789, 0
      %v1865 = vsel %vm239, %v1790, 0
      %v1868 = vsel %vm239, %v1791, 0
      %v1871 = vsel %vm239, %v1792, 0
      %v1874 = vsel %vm239, %v1793, 0
      %v1877 = vsel %vm239, %v1794, 0
      %v1880 = vsel %vm239, %v1795, 0
      %v1883 = vsel %vm239, %v1796, 0
      %v1886 = vsel %vm239, %v1797, 0
      %v1889 = vsel %vm239, %v1798, 0
      %v1892 = vsel %vm239, %v1799, 0
      %v1895 = vsel %vm239, %v1800, 0
      %v1898 = vsel %vm239, %v1801, 0
      %v1901 = vsel %vm336, %v1803, 0
      %1903 = vmatprep.subr.mxu0 0.0
      %1904 = vmatpush1.msra.mxu0 %v1901
      %1905 = vmatprep.subr.mxu0 0.0
      %1906 = vmatpush1.msra.mxu0 0.0
      %1907 = vmatprep.subr.mxu0 0.0
      %1908 = vmatpush1.msra.mxu0 0.0
      %1909 = vmatprep.subr.mxu0 0.0
      %1910 = vmatpush1.msra.mxu0 0.0
      %1911 = vmatprep.subr.mxu0 0.0
      %1912 = vmatpush1.msra.mxu0 0.0
      %1913 = vmatprep.subr.mxu0 0.0
      %1914 = vmatpush1.msra.mxu0 0.0
      %1915 = vmatprep.subr.mxu0 0.0
      %1916 = vmatpush1.msra.mxu0 0.0
      %1917 = vmatprep.subr.mxu0 0.0
      %1918 = vmatpush1.msra.mxu0 0.0
      %1919 = vmatprep.subr.mxu0 0.0
      %1920 = vmatpush1.msra.mxu0 0.0
      %1921 = vmatprep.subr.mxu0 0.0
      %1922 = vmatpush1.msra.mxu0 0.0
      %1923 = vmatprep.subr.mxu0 0.0
      %1924 = vmatpush1.msra.mxu0 0.0
      %1925 = vmatprep.subr.mxu0 0.0
      %1926 = vmatpush1.msra.mxu0 0.0
      %1927 = vmatprep.subr.mxu0 0.0
      %1928 = vmatpush1.msra.mxu0 0.0
      %1929 = vmatprep.subr.mxu0 0.0
      %1930 = vmatpush1.msra.mxu0 0.0
      %1931 = vmatprep.subr.mxu0 0.0
      %1932 = vmatpush1.msra.mxu0 0.0
      %1933 = vmatprep.subr.mxu0 0.0
      %1934 = vmatpush1.msra.mxu0 0.0
      %1935 = vmatprep.subr.mxu0 0.0
      %1936 = vmatpush1.msra.mxu0 0.0
      %1937 = vmatprep.subr.mxu0 0.0
      %1938 = vmatpush1.msra.mxu0 0.0
      %1939 = vmatprep.subr.mxu0 0.0
      %1940 = vmatpush1.msra.mxu0 0.0
      %1941 = vmatprep.subr.mxu0 0.0
      %1942 = vmatpush1.msra.mxu0 0.0
      %1943 = vmatprep.subr.mxu0 0.0
      %1944 = vmatpush1.msra.mxu0 0.0
      %1945 = vmatprep.subr.mxu0 0.0
      %1946 = vmatpush1.msra.mxu0 0.0
      %1947 = vmatprep.subr.mxu0 0.0
      %1948 = vmatpush1.msra.mxu0 0.0
      %1949 = vmatprep.subr.mxu0 0.0
      %1950 = vmatpush1.msra.mxu0 0.0
      %1951 = vmatprep.subr.mxu0 0.0
      %1952 = vmatpush1.msra.mxu0 0.0
      %1953 = vmatprep.subr.mxu0 0.0
      %1954 = vmatpush1.msra.mxu0 0.0
      %1955 = vmatprep.subr.mxu0 0.0
      %1956 = vmatpush1.msra.mxu0 0.0
      %1957 = vmatprep.subr.mxu0 0.0
      %1958 = vmatpush1.msra.mxu0 0.0
      %1959 = vmatprep.subr.mxu0 0.0
      %1960 = vmatpush1.msra.mxu0 0.0
      %1961 = vmatprep.subr.mxu0 0.0
      %1962 = vmatpush1.msra.mxu0 0.0
      %1963 = vmatprep.subr.mxu0 0.0
      %1964 = vmatpush1.msra.mxu0 0.0
      %1965 = vmatprep.subr.mxu0 0.0
      %1966 = vmatpush1.msra.mxu0 0.0
      %1967 = vmatprep.mubr.f32.mxu0 0.0
      %1968 = vmatmul.mubr.f32.gmra.mrb[0].mxu0 %v1805
      %v1969 = vpop.f32.mrb[0].mxu0
      %v1970 = vadd.f32 0.0, %v1969
      %v1971 = vpop.f32.mrb[0].mxu0
      %1972 = vmatprep.mubr.f32.mxu0 0.0
      %1973 = vmatmul.mubr.f32.gmra.mrb[0].mxu0 %v1808
      %v1974 = vpop.f32.mrb[0].mxu0
      %v1975 = vadd.f32 0.0, %v1974
      %v1976 = vpop.f32.mrb[0].mxu0
      %1977 = vmatprep.mubr.f32.mxu0 0.0
      %1978 = vmatmul.mubr.f32.gmra.mrb[0].mxu0 %v1811
      %v1979 = vpop.f32.mrb[0].mxu0
      %v1980 = vadd.f32 0.0, %v1979
      %v1981 = vpop.f32.mrb[0].mxu0
      %1982 = vmatprep.mubr.f32.mxu0 0.0
      %1983 = vmatmul.mubr.f32.gmra.mrb[0].mxu0 %v1814
      %v1984 = vpop.f32.mrb[0].mxu0
      %v1985 = vadd.f32 0.0, %v1984
      %v1986 = vpop.f32.mrb[0].mxu0
      %1987 = vmatprep.mubr.f32.mxu0 0.0
      %1988 = vmatmul.mubr.f32.gmra.mrb[0].mxu0 %v1817
      %v1989 = vpop.f32.mrb[0].mxu0
      %v1990 = vadd.f32 0.0, %v1989
      %v1991 = vpop.f32.mrb[0].mxu0
      %1992 = vmatprep.mubr.f32.mxu0 0.0
      %1993 = vmatmul.mubr.f32.gmra.mrb[0].mxu0 %v1820
      %v1994 = vpop.f32.mrb[0].mxu0
      %v1995 = vadd.f32 0.0, %v1994
      %v1996 = vpop.f32.mrb[0].mxu0
      %1997 = vmatprep.mubr.f32.mxu0 0.0
      %1998 = vmatmul.mubr.f32.gmra.mrb[0].mxu0 %v1823
      %v1999 = vpop.f32.mrb[0].mxu0
      %v2000 = vadd.f32 0.0, %v1999
      %v2001 = vpop.f32.mrb[0].mxu0
      %2002 = vmatprep.mubr.f32.mxu0 0.0
      %2003 = vmatmul.mubr.f32.gmra.mrb[0].mxu0 %v1826
      %v2004 = vpop.f32.mrb[0].mxu0
      %v2005 = vadd.f32 0.0, %v2004
      %v2006 = vpop.f32.mrb[0].mxu0
      %2007 = vmatprep.mubr.f32.mxu0 0.0
      %2008 = vmatmul.mubr.f32.gmra.mrb[0].mxu0 %v1829
      %v2009 = vpop.f32.mrb[0].mxu0
      %v2010 = vadd.f32 0.0, %v2009
      %v2011 = vpop.f32.mrb[0].mxu0
      %2012 = vmatprep.mubr.f32.mxu0 0.0
      %2013 = vmatmul.mubr.f32.gmra.mrb[0].mxu0 %v1832
      %v2014 = vpop.f32.mrb[0].mxu0
      %v2015 = vadd.f32 0.0, %v2014
      %v2016 = vpop.f32.mrb[0].mxu0
      %2017 = vmatprep.mubr.f32.mxu0 0.0
      %2018 = vmatmul.mubr.f32.gmra.mrb[0].mxu0 %v1835
      %v2019 = vpop.f32.mrb[0].mxu0
      %v2020 = vadd.f32 0.0, %v2019
      %v2021 = vpop.f32.mrb[0].mxu0
      %2022 = vmatprep.mubr.f32.mxu0 0.0
      %2023 = vmatmul.mubr.f32.gmra.mrb[0].mxu0 %v1838
      %v2024 = vpop.f32.mrb[0].mxu0
      %v2025 = vadd.f32 0.0, %v2024
      %v2026 = vpop.f32.mrb[0].mxu0
      %2027 = vmatprep.mubr.f32.mxu0 0.0
      %2028 = vmatmul.mubr.f32.gmra.mrb[0].mxu0 %v1841
      %v2029 = vpop.f32.mrb[0].mxu0
      %v2030 = vadd.f32 0.0, %v2029
      %v2031 = vpop.f32.mrb[0].mxu0
      %2032 = vmatprep.mubr.f32.mxu0 0.0
      %2033 = vmatmul.mubr.f32.gmra.mrb[0].mxu0 %v1844
      %v2034 = vpop.f32.mrb[0].mxu0
      %v2035 = vadd.f32 0.0, %v2034
      %v2036 = vpop.f32.mrb[0].mxu0
      %2037 = vmatprep.mubr.f32.mxu0 0.0
      %2038 = vmatmul.mubr.f32.gmra.mrb[0].mxu0 %v1847
      %v2039 = vpop.f32.mrb[0].mxu0
      %v2040 = vadd.f32 0.0, %v2039
      %v2041 = vpop.f32.mrb[0].mxu0
      %2042 = vmatprep.mubr.f32.mxu0 0.0
      %2043 = vmatmul.mubr.f32.gmra.mrb[0].mxu0 %v1850
      %v2044 = vpop.f32.mrb[0].mxu0
      %v2045 = vadd.f32 0.0, %v2044
      %v2046 = vpop.f32.mrb[0].mxu0
      %2047 = vmatprep.mubr.f32.mxu0 0.0
      %2048 = vmatmul.mubr.f32.gmra.mrb[0].mxu0 %v1853
      %v2049 = vpop.f32.mrb[0].mxu0
      %v2050 = vadd.f32 0.0, %v2049
      %v2051 = vpop.f32.mrb[0].mxu0
      %2052 = vmatprep.mubr.f32.mxu0 0.0
      %2053 = vmatmul.mubr.f32.gmra.mrb[0].mxu0 %v1856
      %v2054 = vpop.f32.mrb[0].mxu0
      %v2055 = vadd.f32 0.0, %v2054
      %v2056 = vpop.f32.mrb[0].mxu0
      %2057 = vmatprep.mubr.f32.mxu0 0.0
      %2058 = vmatmul.mubr.f32.gmra.mrb[0].mxu0 %v1859
      %v2059 = vpop.f32.mrb[0].mxu0
      %v2060 = vadd.f32 0.0, %v2059
      %v2061 = vpop.f32.mrb[0].mxu0
      %2062 = vmatprep.mubr.f32.mxu0 0.0
      %2063 = vmatmul.mubr.f32.gmra.mrb[0].mxu0 %v1862
      %v2064 = vpop.f32.mrb[0].mxu0
      %v2065 = vadd.f32 0.0, %v2064
      %v2066 = vpop.f32.mrb[0].mxu0
      %2067 = vmatprep.mubr.f32.mxu0 0.0
      %2068 = vmatmul.mubr.f32.gmra.mrb[0].mxu0 %v1865
      %v2069 = vpop.f32.mrb[0].mxu0
      %v2070 = vadd.f32 0.0, %v2069
      %v2071 = vpop.f32.mrb[0].mxu0
      %2072 = vmatprep.mubr.f32.mxu0 0.0
      %2073 = vmatmul.mubr.f32.gmra.mrb[0].mxu0 %v1868
      %v2074 = vpop.f32.mrb[0].mxu0
      %v2075 = vadd.f32 0.0, %v2074
      %v2076 = vpop.f32.mrb[0].mxu0
      %2077 = vmatprep.mubr.f32.mxu0 0.0
      %2078 = vmatmul.mubr.f32.gmra.mrb[0].mxu0 %v1871
      %v2079 = vpop.f32.mrb[0].mxu0
      %v2080 = vadd.f32 0.0, %v2079
      %v2081 = vpop.f32.mrb[0].mxu0
      %2082 = vmatprep.mubr.f32.mxu0 0.0
      %2083 = vmatmul.mubr.f32.gmra.mrb[0].mxu0 %v1874
      %v2084 = vpop.f32.mrb[0].mxu0
      %v2085 = vadd.f32 0.0, %v2084
      %v2086 = vpop.f32.mrb[0].mxu0
      %2087 = vmatprep.mubr.f32.mxu0 0.0
      %2088 = vmatmul.mubr.f32.gmra.mrb[0].mxu0 %v1877
      %v2089 = vpop.f32.mrb[0].mxu0
      %v2090 = vadd.f32 0.0, %v2089
      %v2091 = vpop.f32.mrb[0].mxu0
      %2092 = vmatprep.mubr.f32.mxu0 0.0
      %2093 = vmatmul.mubr.f32.gmra.mrb[0].mxu0 %v1880
      %v2094 = vpop.f32.mrb[0].mxu0
      %v2095 = vadd.f32 0.0, %v2094
      %v2096 = vpop.f32.mrb[0].mxu0
      %2097 = vmatprep.mubr.f32.mxu0 0.0
      %2098 = vmatmul.mubr.f32.gmra.mrb[0].mxu0 %v1883
      %v2099 = vpop.f32.mrb[0].mxu0
      %v2100 = vadd.f32 0.0, %v2099
      %v2101 = vpop.f32.mrb[0].mxu0
      %2102 = vmatprep.mubr.f32.mxu0 0.0
      %2103 = vmatmul.mubr.f32.gmra.mrb[0].mxu0 %v1886
      %v2104 = vpop.f32.mrb[0].mxu0
      %v2105 = vadd.f32 0.0, %v2104
      %v2106 = vpop.f32.mrb[0].mxu0
      %2107 = vmatprep.mubr.f32.mxu0 0.0
      %2108 = vmatmul.mubr.f32.gmra.mrb[0].mxu0 %v1889
      %v2109 = vpop.f32.mrb[0].mxu0
      %v2110 = vadd.f32 0.0, %v2109
      %v2111 = vpop.f32.mrb[0].mxu0
      %2112 = vmatprep.mubr.f32.mxu0 0.0
      %2113 = vmatmul.mubr.f32.gmra.mrb[0].mxu0 %v1892
      %v2114 = vpop.f32.mrb[0].mxu0
      %v2115 = vadd.f32 0.0, %v2114
      %v2116 = vpop.f32.mrb[0].mxu0
      %2117 = vmatprep.mubr.f32.mxu0 0.0
      %2118 = vmatmul.mubr.f32.gmra.mrb[0].mxu0 %v1895
      %v2119 = vpop.f32.mrb[0].mxu0
      %v2120 = vadd.f32 0.0, %v2119
      %v2121 = vpop.f32.mrb[0].mxu0
      %2122 = vmatprep.mubr.f32.mxu0 0.0
      %2123 = vmatmul.mubr.f32.gmra.mrb[0].mxu0 %v1898
      %v2124 = vpop.f32.mrb[0].mxu0
      %v2125 = vadd.f32 0.0, %v2124
      %v2126 = vpop.f32.mrb[0].mxu0
      %2127 = vdwg.mxu0
      %v2128 = vadd.f32 %v1738, %v1970
      %v2129 = vadd.f32 %v1739, %v1975
      %v2130 = vadd.f32 %v1740, %v1980
      %v2131 = vadd.f32 %v1741, %v1985
      %v2132 = vadd.f32 %v1742, %v1990
      %v2133 = vadd.f32 %v1743, %v1995
      %v2134 = vadd.f32 %v1744, %v2000
      %v2135 = vadd.f32 %v1745, %v2005
      %v2136 = vadd.f32 %v1746, %v2010
      %v2137 = vadd.f32 %v1747, %v2015
      %v2138 = vadd.f32 %v1748, %v2020
      %v2139 = vadd.f32 %v1749, %v2025
      %v2140 = vadd.f32 %v1750, %v2030
      %v2141 = vadd.f32 %v1751, %v2035
      %v2142 = vadd.f32 %v1752, %v2040
      %v2143 = vadd.f32 %v1753, %v2045
      %v2144 = vadd.f32 %v1754, %v2050
      %v2145 = vadd.f32 %v1755, %v2055
      %v2146 = vadd.f32 %v1756, %v2060
      %v2147 = vadd.f32 %v1757, %v2065
      %v2148 = vadd.f32 %v1758, %v2070
      %v2149 = vadd.f32 %v1759, %v2075
      %v2150 = vadd.f32 %v1760, %v2080
      %v2151 = vadd.f32 %v1761, %v2085
      %v2152 = vadd.f32 %v1762, %v2090
      %v2153 = vadd.f32 %v1763, %v2095
      %v2154 = vadd.f32 %v1764, %v2100
      %v2155 = vadd.f32 %v1765, %v2105
      %v2156 = vadd.f32 %v1766, %v2110
      %v2157 = vadd.f32 %v1767, %v2115
      %v2158 = vadd.f32 %v1768, %v2120
      %v2159 = vadd.f32 %v1769, %v2125
      %v2160 = vld [vmem:[%s1379 + $0x2] sm:$0xff]
      %v2161 = vld [vmem:[%s1379 + $0xa] sm:$0xff]
      %v2162 = vld [vmem:[%s1379 + $0x1a] sm:$0xff]
      %v2163 = vld [vmem:[%s1379 + $0x22] sm:$0xff]
      %v2164 = vld [vmem:[%s1379 + $0x32] sm:$0xff]
      %v2165 = vld [vmem:[%s1379 + $0x3a] sm:$0xff]
      %v2166 = vld [vmem:[%s1379 + $0x4a] sm:$0xff]
      %v2167 = vld [vmem:[%s1379 + $0x52] sm:$0xff]
      %v2168 = vld [vmem:[%s1379 + $0x62] sm:$0xff]
      %v2169 = vld [vmem:[%s1379 + $0x6a] sm:$0xff]
      %v2170 = vld [vmem:[%s1379 + $0x7a] sm:$0xff]
      %v2171 = vld [vmem:[%s1379 + $0x82] sm:$0xff]
      %v2172 = vld [vmem:[%s1379 + $0x92] sm:$0xff]
      %v2173 = vld [vmem:[%s1379 + $0x9a] sm:$0xff]
      %v2174 = vld [vmem:[%s1379 + $0xaa] sm:$0xff]
      %v2175 = vld [vmem:[%s1379 + $0xb2] sm:$0xff]
      %v2176 = vld [vmem:[%s1379 + $0xc2] sm:$0xff]
      %v2177 = vld [vmem:[%s1379 + $0xca] sm:$0xff]
      %v2178 = vld [vmem:[%s1379 + $0xda] sm:$0xff]
      %v2179 = vld [vmem:[%s1379 + $0xe2] sm:$0xff]
      %v2180 = vld [vmem:[%s1379 + $0xf2] sm:$0xff]
      %v2181 = vld [vmem:[%s1379 + $0xfa] sm:$0xff]
      %v2182 = vld [vmem:[%s1379 + $0x10a] sm:$0xff]
      %v2183 = vld [vmem:[%s1379 + $0x112] sm:$0xff]
      %v2184 = vld [vmem:[%s1379 + $0x122] sm:$0xff]
      %v2185 = vld [vmem:[%s1379 + $0x12a] sm:$0xff]
      %v2186 = vld [vmem:[%s1379 + $0x13a] sm:$0xff]
      %v2187 = vld [vmem:[%s1379 + $0x142] sm:$0xff]
      %v2188 = vld [vmem:[%s1379 + $0x152] sm:$0xff]
      %v2189 = vld [vmem:[%s1379 + $0x15a] sm:$0xff]
      %v2190 = vld [vmem:[%s1379 + $0x16a] sm:$0xff]
      %v2191 = vld [vmem:[%s1379 + $0x172] sm:$0xff]
      %s2192 = scalar_lea.vmem %s1, 20
      %v2193 = vld [vmem:[%s2192] sm:$0xf]
      %v2195 = vsel %vm239, %v2160, 0
      %v2198 = vsel %vm239, %v2161, 0
      %v2201 = vsel %vm239, %v2162, 0
      %v2204 = vsel %vm239, %v2163, 0
      %v2207 = vsel %vm239, %v2164, 0
      %v2210 = vsel %vm239, %v2165, 0
      %v2213 = vsel %vm239, %v2166, 0
      %v2216 = vsel %vm239, %v2167, 0
      %v2219 = vsel %vm239, %v2168, 0
      %v2222 = vsel %vm239, %v2169, 0
      %v2225 = vsel %vm239, %v2170, 0
      %v2228 = vsel %vm239, %v2171, 0
      %v2231 = vsel %vm239, %v2172, 0
      %v2234 = vsel %vm239, %v2173, 0
      %v2237 = vsel %vm239, %v2174, 0
      %v2240 = vsel %vm239, %v2175, 0
      %v2243 = vsel %vm239, %v2176, 0
      %v2246 = vsel %vm239, %v2177, 0
      %v2249 = vsel %vm239, %v2178, 0
      %v2252 = vsel %vm239, %v2179, 0
      %v2255 = vsel %vm239, %v2180, 0
      %v2258 = vsel %vm239, %v2181, 0
      %v2261 = vsel %vm239, %v2182, 0
      %v2264 = vsel %vm239, %v2183, 0
      %v2267 = vsel %vm239, %v2184, 0
      %v2270 = vsel %vm239, %v2185, 0
      %v2273 = vsel %vm239, %v2186, 0
      %v2276 = vsel %vm239, %v2187, 0
      %v2279 = vsel %vm239, %v2188, 0
      %v2282 = vsel %vm239, %v2189, 0
      %v2285 = vsel %vm239, %v2190, 0
      %v2288 = vsel %vm239, %v2191, 0
      %v2291 = vsel %vm336, %v2193, 0
      %2293 = vmatprep.subr.mxu0 0.0
      %2294 = vmatpush1.msra.mxu0 %v2291
      %2295 = vmatprep.subr.mxu0 0.0
      %2296 = vmatpush1.msra.mxu0 0.0
      %2297 = vmatprep.subr.mxu0 0.0
      %2298 = vmatpush1.msra.mxu0 0.0
      %2299 = vmatprep.subr.mxu0 0.0
      %2300 = vmatpush1.msra.mxu0 0.0
      %2301 = vmatprep.subr.mxu0 0.0
      %2302 = vmatpush1.msra.mxu0 0.0
      %2303 = vmatprep.subr.mxu0 0.0
      %2304 = vmatpush1.msra.mxu0 0.0
      %2305 = vmatprep.subr.mxu0 0.0
      %2306 = vmatpush1.msra.mxu0 0.0
      %2307 = vmatprep.subr.mxu0 0.0
      %2308 = vmatpush1.msra.mxu0 0.0
      %2309 = vmatprep.subr.mxu0 0.0
      %2310 = vmatpush1.msra.mxu0 0.0
      %2311 = vmatprep.subr.mxu0 0.0
      %2312 = vmatpush1.msra.mxu0 0.0
      %2313 = vmatprep.subr.mxu0 0.0
      %2314 = vmatpush1.msra.mxu0 0.0
      %2315 = vmatprep.subr.mxu0 0.0
      %2316 = vmatpush1.msra.mxu0 0.0
      %2317 = vmatprep.subr.mxu0 0.0
      %2318 = vmatpush1.msra.mxu0 0.0
      %2319 = vmatprep.subr.mxu0 0.0
      %2320 = vmatpush1.msra.mxu0 0.0
      %2321 = vmatprep.subr.mxu0 0.0
      %2322 = vmatpush1.msra.mxu0 0.0
      %2323 = vmatprep.subr.mxu0 0.0
      %2324 = vmatpush1.msra.mxu0 0.0
      %2325 = vmatprep.subr.mxu0 0.0
      %2326 = vmatpush1.msra.mxu0 0.0
      %2327 = vmatprep.subr.mxu0 0.0
      %2328 = vmatpush1.msra.mxu0 0.0
      %2329 = vmatprep.subr.mxu0 0.0
      %2330 = vmatpush1.msra.mxu0 0.0
      %2331 = vmatprep.subr.mxu0 0.0
      %2332 = vmatpush1.msra.mxu0 0.0
      %2333 = vmatprep.subr.mxu0 0.0
      %2334 = vmatpush1.msra.mxu0 0.0
      %2335 = vmatprep.subr.mxu0 0.0
      %2336 = vmatpush1.msra.mxu0 0.0
      %2337 = vmatprep.subr.mxu0 0.0
      %2338 = vmatpush1.msra.mxu0 0.0
      %2339 = vmatprep.subr.mxu0 0.0
      %2340 = vmatpush1.msra.mxu0 0.0
      %2341 = vmatprep.subr.mxu0 0.0
      %2342 = vmatpush1.msra.mxu0 0.0
      %2343 = vmatprep.subr.mxu0 0.0
      %2344 = vmatpush1.msra.mxu0 0.0
      %2345 = vmatprep.subr.mxu0 0.0
      %2346 = vmatpush1.msra.mxu0 0.0
      %2347 = vmatprep.subr.mxu0 0.0
      %2348 = vmatpush1.msra.mxu0 0.0
      %2349 = vmatprep.subr.mxu0 0.0
      %2350 = vmatpush1.msra.mxu0 0.0
      %2351 = vmatprep.subr.mxu0 0.0
      %2352 = vmatpush1.msra.mxu0 0.0
      %2353 = vmatprep.subr.mxu0 0.0
      %2354 = vmatpush1.msra.mxu0 0.0
      %2355 = vmatprep.subr.mxu0 0.0
      %2356 = vmatpush1.msra.mxu0 0.0
      %2357 = vmatprep.mubr.f32.mxu0 0.0
      %2358 = vmatmul.mubr.f32.gmra.mrb[0].mxu0 %v2195
      %v2359 = vpop.f32.mrb[0].mxu0
      %v2360 = vadd.f32 0.0, %v2359
      %v2361 = vpop.f32.mrb[0].mxu0
      %2362 = vmatprep.mubr.f32.mxu0 0.0
      %2363 = vmatmul.mubr.f32.gmra.mrb[0].mxu0 %v2198
      %v2364 = vpop.f32.mrb[0].mxu0
      %v2365 = vadd.f32 0.0, %v2364
      %v2366 = vpop.f32.mrb[0].mxu0
      %2367 = vmatprep.mubr.f32.mxu0 0.0
      %2368 = vmatmul.mubr.f32.gmra.mrb[0].mxu0 %v2201
      %v2369 = vpop.f32.mrb[0].mxu0
      %v2370 = vadd.f32 0.0, %v2369
      %v2371 = vpop.f32.mrb[0].mxu0
      %2372 = vmatprep.mubr.f32.mxu0 0.0
      %2373 = vmatmul.mubr.f32.gmra.mrb[0].mxu0 %v2204
      %v2374 = vpop.f32.mrb[0].mxu0
      %v2375 = vadd.f32 0.0, %v2374
      %v2376 = vpop.f32.mrb[0].mxu0
      %2377 = vmatprep.mubr.f32.mxu0 0.0
      %2378 = vmatmul.mubr.f32.gmra.mrb[0].mxu0 %v2207
      %v2379 = vpop.f32.mrb[0].mxu0
      %v2380 = vadd.f32 0.0, %v2379
      %v2381 = vpop.f32.mrb[0].mxu0
      %2382 = vmatprep.mubr.f32.mxu0 0.0
      %2383 = vmatmul.mubr.f32.gmra.mrb[0].mxu0 %v2210
      %v2384 = vpop.f32.mrb[0].mxu0
      %v2385 = vadd.f32 0.0, %v2384
      %v2386 = vpop.f32.mrb[0].mxu0
      %2387 = vmatprep.mubr.f32.mxu0 0.0
      %2388 = vmatmul.mubr.f32.gmra.mrb[0].mxu0 %v2213
      %v2389 = vpop.f32.mrb[0].mxu0
      %v2390 = vadd.f32 0.0, %v2389
      %v2391 = vpop.f32.mrb[0].mxu0
      %2392 = vmatprep.mubr.f32.mxu0 0.0
      %2393 = vmatmul.mubr.f32.gmra.mrb[0].mxu0 %v2216
      %v2394 = vpop.f32.mrb[0].mxu0
      %v2395 = vadd.f32 0.0, %v2394
      %v2396 = vpop.f32.mrb[0].mxu0
      %2397 = vmatprep.mubr.f32.mxu0 0.0
      %2398 = vmatmul.mubr.f32.gmra.mrb[0].mxu0 %v2219
      %v2399 = vpop.f32.mrb[0].mxu0
      %v2400 = vadd.f32 0.0, %v2399
      %v2401 = vpop.f32.mrb[0].mxu0
      %2402 = vmatprep.mubr.f32.mxu0 0.0
      %2403 = vmatmul.mubr.f32.gmra.mrb[0].mxu0 %v2222
      %v2404 = vpop.f32.mrb[0].mxu0
      %v2405 = vadd.f32 0.0, %v2404
      %v2406 = vpop.f32.mrb[0].mxu0
      %2407 = vmatprep.mubr.f32.mxu0 0.0
      %2408 = vmatmul.mubr.f32.gmra.mrb[0].mxu0 %v2225
      %v2409 = vpop.f32.mrb[0].mxu0
      %v2410 = vadd.f32 0.0, %v2409
      %v2411 = vpop.f32.mrb[0].mxu0
      %2412 = vmatprep.mubr.f32.mxu0 0.0
      %2413 = vmatmul.mubr.f32.gmra.mrb[0].mxu0 %v2228
      %v2414 = vpop.f32.mrb[0].mxu0
      %v2415 = vadd.f32 0.0, %v2414
      %v2416 = vpop.f32.mrb[0].mxu0
      %2417 = vmatprep.mubr.f32.mxu0 0.0
      %2418 = vmatmul.mubr.f32.gmra.mrb[0].mxu0 %v2231
      %v2419 = vpop.f32.mrb[0].mxu0
      %v2420 = vadd.f32 0.0, %v2419
      %v2421 = vpop.f32.mrb[0].mxu0
      %2422 = vmatprep.mubr.f32.mxu0 0.0
      %2423 = vmatmul.mubr.f32.gmra.mrb[0].mxu0 %v2234
      %v2424 = vpop.f32.mrb[0].mxu0
      %v2425 = vadd.f32 0.0, %v2424
      %v2426 = vpop.f32.mrb[0].mxu0
      %2427 = vmatprep.mubr.f32.mxu0 0.0
      %2428 = vmatmul.mubr.f32.gmra.mrb[0].mxu0 %v2237
      %v2429 = vpop.f32.mrb[0].mxu0
      %v2430 = vadd.f32 0.0, %v2429
      %v2431 = vpop.f32.mrb[0].mxu0
      %2432 = vmatprep.mubr.f32.mxu0 0.0
      %2433 = vmatmul.mubr.f32.gmra.mrb[0].mxu0 %v2240
      %v2434 = vpop.f32.mrb[0].mxu0
      %v2435 = vadd.f32 0.0, %v2434
      %v2436 = vpop.f32.mrb[0].mxu0
      %2437 = vmatprep.mubr.f32.mxu0 0.0
      %2438 = vmatmul.mubr.f32.gmra.mrb[0].mxu0 %v2243
      %v2439 = vpop.f32.mrb[0].mxu0
      %v2440 = vadd.f32 0.0, %v2439
      %v2441 = vpop.f32.mrb[0].mxu0
      %2442 = vmatprep.mubr.f32.mxu0 0.0
      %2443 = vmatmul.mubr.f32.gmra.mrb[0].mxu0 %v2246
      %v2444 = vpop.f32.mrb[0].mxu0
      %v2445 = vadd.f32 0.0, %v2444
      %v2446 = vpop.f32.mrb[0].mxu0
      %2447 = vmatprep.mubr.f32.mxu0 0.0
      %2448 = vmatmul.mubr.f32.gmra.mrb[0].mxu0 %v2249
      %v2449 = vpop.f32.mrb[0].mxu0
      %v2450 = vadd.f32 0.0, %v2449
      %v2451 = vpop.f32.mrb[0].mxu0
      %2452 = vmatprep.mubr.f32.mxu0 0.0
      %2453 = vmatmul.mubr.f32.gmra.mrb[0].mxu0 %v2252
      %v2454 = vpop.f32.mrb[0].mxu0
      %v2455 = vadd.f32 0.0, %v2454
      %v2456 = vpop.f32.mrb[0].mxu0
      %2457 = vmatprep.mubr.f32.mxu0 0.0
      %2458 = vmatmul.mubr.f32.gmra.mrb[0].mxu0 %v2255
      %v2459 = vpop.f32.mrb[0].mxu0
      %v2460 = vadd.f32 0.0, %v2459
      %v2461 = vpop.f32.mrb[0].mxu0
      %2462 = vmatprep.mubr.f32.mxu0 0.0
      %2463 = vmatmul.mubr.f32.gmra.mrb[0].mxu0 %v2258
      %v2464 = vpop.f32.mrb[0].mxu0
      %v2465 = vadd.f32 0.0, %v2464
      %v2466 = vpop.f32.mrb[0].mxu0
      %2467 = vmatprep.mubr.f32.mxu0 0.0
      %2468 = vmatmul.mubr.f32.gmra.mrb[0].mxu0 %v2261
      %v2469 = vpop.f32.mrb[0].mxu0
      %v2470 = vadd.f32 0.0, %v2469
      %v2471 = vpop.f32.mrb[0].mxu0
      %2472 = vmatprep.mubr.f32.mxu0 0.0
      %2473 = vmatmul.mubr.f32.gmra.mrb[0].mxu0 %v2264
      %v2474 = vpop.f32.mrb[0].mxu0
      %v2475 = vadd.f32 0.0, %v2474
      %v2476 = vpop.f32.mrb[0].mxu0
      %2477 = vmatprep.mubr.f32.mxu0 0.0
      %2478 = vmatmul.mubr.f32.gmra.mrb[0].mxu0 %v2267
      %v2479 = vpop.f32.mrb[0].mxu0
      %v2480 = vadd.f32 0.0, %v2479
      %v2481 = vpop.f32.mrb[0].mxu0
      %2482 = vmatprep.mubr.f32.mxu0 0.0
      %2483 = vmatmul.mubr.f32.gmra.mrb[0].mxu0 %v2270
      %v2484 = vpop.f32.mrb[0].mxu0
      %v2485 = vadd.f32 0.0, %v2484
      %v2486 = vpop.f32.mrb[0].mxu0
      %2487 = vmatprep.mubr.f32.mxu0 0.0
      %2488 = vmatmul.mubr.f32.gmra.mrb[0].mxu0 %v2273
      %v2489 = vpop.f32.mrb[0].mxu0
      %v2490 = vadd.f32 0.0, %v2489
      %v2491 = vpop.f32.mrb[0].mxu0
      %2492 = vmatprep.mubr.f32.mxu0 0.0
      %2493 = vmatmul.mubr.f32.gmra.mrb[0].mxu0 %v2276
      %v2494 = vpop.f32.mrb[0].mxu0
      %v2495 = vadd.f32 0.0, %v2494
      %v2496 = vpop.f32.mrb[0].mxu0
      %2497 = vmatprep.mubr.f32.mxu0 0.0
      %2498 = vmatmul.mubr.f32.gmra.mrb[0].mxu0 %v2279
      %v2499 = vpop.f32.mrb[0].mxu0
      %v2500 = vadd.f32 0.0, %v2499
      %v2501 = vpop.f32.mrb[0].mxu0
      %2502 = vmatprep.mubr.f32.mxu0 0.0
      %2503 = vmatmul.mubr.f32.gmra.mrb[0].mxu0 %v2282
      %v2504 = vpop.f32.mrb[0].mxu0
      %v2505 = vadd.f32 0.0, %v2504
      %v2506 = vpop.f32.mrb[0].mxu0
      %2507 = vmatprep.mubr.f32.mxu0 0.0
      %2508 = vmatmul.mubr.f32.gmra.mrb[0].mxu0 %v2285
      %v2509 = vpop.f32.mrb[0].mxu0
      %v2510 = vadd.f32 0.0, %v2509
      %v2511 = vpop.f32.mrb[0].mxu0
      %2512 = vmatprep.mubr.f32.mxu0 0.0
      %2513 = vmatmul.mubr.f32.gmra.mrb[0].mxu0 %v2288
      %v2514 = vpop.f32.mrb[0].mxu0
      %v2515 = vadd.f32 0.0, %v2514
      %v2516 = vpop.f32.mrb[0].mxu0
      %2517 = vdwg.mxu0
      %v2518 = vadd.f32 %v2128, %v2360
      %v2519 = vadd.f32 %v2129, %v2365
      %v2520 = vadd.f32 %v2130, %v2370
      %v2521 = vadd.f32 %v2131, %v2375
      %v2522 = vadd.f32 %v2132, %v2380
      %v2523 = vadd.f32 %v2133, %v2385
      %v2524 = vadd.f32 %v2134, %v2390
      %v2525 = vadd.f32 %v2135, %v2395
      %v2526 = vadd.f32 %v2136, %v2400
      %v2527 = vadd.f32 %v2137, %v2405
      %v2528 = vadd.f32 %v2138, %v2410
      %v2529 = vadd.f32 %v2139, %v2415
      %v2530 = vadd.f32 %v2140, %v2420
      %v2531 = vadd.f32 %v2141, %v2425
      %v2532 = vadd.f32 %v2142, %v2430
      %v2533 = vadd.f32 %v2143, %v2435
      %v2534 = vadd.f32 %v2144, %v2440
      %v2535 = vadd.f32 %v2145, %v2445
      %v2536 = vadd.f32 %v2146, %v2450
      %v2537 = vadd.f32 %v2147, %v2455
      %v2538 = vadd.f32 %v2148, %v2460
      %v2539 = vadd.f32 %v2149, %v2465
      %v2540 = vadd.f32 %v2150, %v2470
      %v2541 = vadd.f32 %v2151, %v2475
      %v2542 = vadd.f32 %v2152, %v2480
      %v2543 = vadd.f32 %v2153, %v2485
      %v2544 = vadd.f32 %v2154, %v2490
      %v2545 = vadd.f32 %v2155, %v2495
      %v2546 = vadd.f32 %v2156, %v2500
      %v2547 = vadd.f32 %v2157, %v2505
      %v2548 = vadd.f32 %v2158, %v2510
      %v2549 = vadd.f32 %v2159, %v2515
      %s2550 = sadd.s32 %s196, 2
      %s2551 = smul.u32 %s2550, 24
      %s2552 = scalar_lea.vmem %s184, %s2551
      %v2553 = vld [vmem:[%s2552] sm:$0xff]
      %v2554 = vld [vmem:[%s2552 + $0x8] sm:$0xff]
      %v2555 = vld [vmem:[%s2552 + $0x18] sm:$0xff]
      %v2556 = vld [vmem:[%s2552 + $0x20] sm:$0xff]
      %v2557 = vld [vmem:[%s2552 + $0x30] sm:$0xff]
      %v2558 = vld [vmem:[%s2552 + $0x38] sm:$0xff]
      %v2559 = vld [vmem:[%s2552 + $0x48] sm:$0xff]
      %v2560 = vld [vmem:[%s2552 + $0x50] sm:$0xff]
      %v2561 = vld [vmem:[%s2552 + $0x60] sm:$0xff]
      %v2562 = vld [vmem:[%s2552 + $0x68] sm:$0xff]
      %v2563 = vld [vmem:[%s2552 + $0x78] sm:$0xff]
      %v2564 = vld [vmem:[%s2552 + $0x80] sm:$0xff]
      %v2565 = vld [vmem:[%s2552 + $0x90] sm:$0xff]
      %v2566 = vld [vmem:[%s2552 + $0x98] sm:$0xff]
      %v2567 = vld [vmem:[%s2552 + $0xa8] sm:$0xff]
      %v2568 = vld [vmem:[%s2552 + $0xb0] sm:$0xff]
      %v2569 = vld [vmem:[%s2552 + $0xc0] sm:$0xff]
      %v2570 = vld [vmem:[%s2552 + $0xc8] sm:$0xff]
      %v2571 = vld [vmem:[%s2552 + $0xd8] sm:$0xff]
      %v2572 = vld [vmem:[%s2552 + $0xe0] sm:$0xff]
      %v2573 = vld [vmem:[%s2552 + $0xf0] sm:$0xff]
      %v2574 = vld [vmem:[%s2552 + $0xf8] sm:$0xff]
      %v2575 = vld [vmem:[%s2552 + $0x108] sm:$0xff]
      %v2576 = vld [vmem:[%s2552 + $0x110] sm:$0xff]
      %v2577 = vld [vmem:[%s2552 + $0x120] sm:$0xff]
      %v2578 = vld [vmem:[%s2552 + $0x128] sm:$0xff]
      %v2579 = vld [vmem:[%s2552 + $0x138] sm:$0xff]
      %v2580 = vld [vmem:[%s2552 + $0x140] sm:$0xff]
      %v2581 = vld [vmem:[%s2552 + $0x150] sm:$0xff]
      %v2582 = vld [vmem:[%s2552 + $0x158] sm:$0xff]
      %v2583 = vld [vmem:[%s2552 + $0x168] sm:$0xff]
      %v2584 = vld [vmem:[%s2552 + $0x170] sm:$0xff]
      %s2585 = scalar_lea.vmem %s1, 24
      %v2586 = vld [vmem:[%s2585] sm:$0xf]
      %v2588 = vsel %vm239, %v2553, 0
      %v2591 = vsel %vm239, %v2554, 0
      %v2594 = vsel %vm239, %v2555, 0
      %v2597 = vsel %vm239, %v2556, 0
      %v2600 = vsel %vm239, %v2557, 0
      %v2603 = vsel %vm239, %v2558, 0
      %v2606 = vsel %vm239, %v2559, 0
      %v2609 = vsel %vm239, %v2560, 0
      %v2612 = vsel %vm239, %v2561, 0
      %v2615 = vsel %vm239, %v2562, 0
      %v2618 = vsel %vm239, %v2563, 0
      %v2621 = vsel %vm239, %v2564, 0
      %v2624 = vsel %vm239, %v2565, 0
      %v2627 = vsel %vm239, %v2566, 0
      %v2630 = vsel %vm239, %v2567, 0
      %v2633 = vsel %vm239, %v2568, 0
      %v2636 = vsel %vm239, %v2569, 0
      %v2639 = vsel %vm239, %v2570, 0
      %v2642 = vsel %vm239, %v2571, 0
      %v2645 = vsel %vm239, %v2572, 0
      %v2648 = vsel %vm239, %v2573, 0
      %v2651 = vsel %vm239, %v2574, 0
      %v2654 = vsel %vm239, %v2575, 0
      %v2657 = vsel %vm239, %v2576, 0
      %v2660 = vsel %vm239, %v2577, 0
      %v2663 = vsel %vm239, %v2578, 0
      %v2666 = vsel %vm239, %v2579, 0
      %v2669 = vsel %vm239, %v2580, 0
      %v2672 = vsel %vm239, %v2581, 0
      %v2675 = vsel %vm239, %v2582, 0
      %v2678 = vsel %vm239, %v2583, 0
      %v2681 = vsel %vm239, %v2584, 0
      %v2684 = vsel %vm336, %v2586, 0
      %2686 = vmatprep.subr.mxu0 0.0
      %2687 = vmatpush1.msra.mxu0 %v2684
      %2688 = vmatprep.subr.mxu0 0.0
      %2689 = vmatpush1.msra.mxu0 0.0
      %2690 = vmatprep.subr.mxu0 0.0
      %2691 = vmatpush1.msra.mxu0 0.0
      %2692 = vmatprep.subr.mxu0 0.0
      %2693 = vmatpush1.msra.mxu0 0.0
      %2694 = vmatprep.subr.mxu0 0.0
      %2695 = vmatpush1.msra.mxu0 0.0
      %2696 = vmatprep.subr.mxu0 0.0
      %2697 = vmatpush1.msra.mxu0 0.0
      %2698 = vmatprep.subr.mxu0 0.0
      %2699 = vmatpush1.msra.mxu0 0.0
      %2700 = vmatprep.subr.mxu0 0.0
      %2701 = vmatpush1.msra.mxu0 0.0
      %2702 = vmatprep.subr.mxu0 0.0
      %2703 = vmatpush1.msra.mxu0 0.0
      %2704 = vmatprep.subr.mxu0 0.0
      %2705 = vmatpush1.msra.mxu0 0.0
      %2706 = vmatprep.subr.mxu0 0.0
      %2707 = vmatpush1.msra.mxu0 0.0
      %2708 = vmatprep.subr.mxu0 0.0
      %2709 = vmatpush1.msra.mxu0 0.0
      %2710 = vmatprep.subr.mxu0 0.0
      %2711 = vmatpush1.msra.mxu0 0.0
      %2712 = vmatprep.subr.mxu0 0.0
      %2713 = vmatpush1.msra.mxu0 0.0
      %2714 = vmatprep.subr.mxu0 0.0
      %2715 = vmatpush1.msra.mxu0 0.0
      %2716 = vmatprep.subr.mxu0 0.0
      %2717 = vmatpush1.msra.mxu0 0.0
      %2718 = vmatprep.subr.mxu0 0.0
      %2719 = vmatpush1.msra.mxu0 0.0
      %2720 = vmatprep.subr.mxu0 0.0
      %2721 = vmatpush1.msra.mxu0 0.0
      %2722 = vmatprep.subr.mxu0 0.0
      %2723 = vmatpush1.msra.mxu0 0.0
      %2724 = vmatprep.subr.mxu0 0.0
      %2725 = vmatpush1.msra.mxu0 0.0
      %2726 = vmatprep.subr.mxu0 0.0
      %2727 = vmatpush1.msra.mxu0 0.0
      %2728 = vmatprep.subr.mxu0 0.0
      %2729 = vmatpush1.msra.mxu0 0.0
      %2730 = vmatprep.subr.mxu0 0.0
      %2731 = vmatpush1.msra.mxu0 0.0
      %2732 = vmatprep.subr.mxu0 0.0
      %2733 = vmatpush1.msra.mxu0 0.0
      %2734 = vmatprep.subr.mxu0 0.0
      %2735 = vmatpush1.msra.mxu0 0.0
      %2736 = vmatprep.subr.mxu0 0.0
      %2737 = vmatpush1.msra.mxu0 0.0
      %2738 = vmatprep.subr.mxu0 0.0
      %2739 = vmatpush1.msra.mxu0 0.0
      %2740 = vmatprep.subr.mxu0 0.0
      %2741 = vmatpush1.msra.mxu0 0.0
      %2742 = vmatprep.subr.mxu0 0.0
      %2743 = vmatpush1.msra.mxu0 0.0
      %2744 = vmatprep.subr.mxu0 0.0
      %2745 = vmatpush1.msra.mxu0 0.0
      %2746 = vmatprep.subr.mxu0 0.0
      %2747 = vmatpush1.msra.mxu0 0.0
      %2748 = vmatprep.subr.mxu0 0.0
      %2749 = vmatpush1.msra.mxu0 0.0
      %2750 = vmatprep.mubr.f32.mxu0 0.0
      %2751 = vmatmul.mubr.f32.gmra.mrb[0].mxu0 %v2588
      %v2752 = vpop.f32.mrb[0].mxu0
      %v2753 = vadd.f32 0.0, %v2752
      %v2754 = vpop.f32.mrb[0].mxu0
      %2755 = vmatprep.mubr.f32.mxu0 0.0
      %2756 = vmatmul.mubr.f32.gmra.mrb[0].mxu0 %v2591
      %v2757 = vpop.f32.mrb[0].mxu0
      %v2758 = vadd.f32 0.0, %v2757
      %v2759 = vpop.f32.mrb[0].mxu0
      %2760 = vmatprep.mubr.f32.mxu0 0.0
      %2761 = vmatmul.mubr.f32.gmra.mrb[0].mxu0 %v2594
      %v2762 = vpop.f32.mrb[0].mxu0
      %v2763 = vadd.f32 0.0, %v2762
      %v2764 = vpop.f32.mrb[0].mxu0
      %2765 = vmatprep.mubr.f32.mxu0 0.0
      %2766 = vmatmul.mubr.f32.gmra.mrb[0].mxu0 %v2597
      %v2767 = vpop.f32.mrb[0].mxu0
      %v2768 = vadd.f32 0.0, %v2767
      %v2769 = vpop.f32.mrb[0].mxu0
      %2770 = vmatprep.mubr.f32.mxu0 0.0
      %2771 = vmatmul.mubr.f32.gmra.mrb[0].mxu0 %v2600
      %v2772 = vpop.f32.mrb[0].mxu0
      %v2773 = vadd.f32 0.0, %v2772
      %v2774 = vpop.f32.mrb[0].mxu0
      %2775 = vmatprep.mubr.f32.mxu0 0.0
      %2776 = vmatmul.mubr.f32.gmra.mrb[0].mxu0 %v2603
      %v2777 = vpop.f32.mrb[0].mxu0
      %v2778 = vadd.f32 0.0, %v2777
      %v2779 = vpop.f32.mrb[0].mxu0
      %2780 = vmatprep.mubr.f32.mxu0 0.0
      %2781 = vmatmul.mubr.f32.gmra.mrb[0].mxu0 %v2606
      %v2782 = vpop.f32.mrb[0].mxu0
      %v2783 = vadd.f32 0.0, %v2782
      %v2784 = vpop.f32.mrb[0].mxu0
      %2785 = vmatprep.mubr.f32.mxu0 0.0
      %2786 = vmatmul.mubr.f32.gmra.mrb[0].mxu0 %v2609
      %v2787 = vpop.f32.mrb[0].mxu0
      %v2788 = vadd.f32 0.0, %v2787
      %v2789 = vpop.f32.mrb[0].mxu0
      %2790 = vmatprep.mubr.f32.mxu0 0.0
      %2791 = vmatmul.mubr.f32.gmra.mrb[0].mxu0 %v2612
      %v2792 = vpop.f32.mrb[0].mxu0
      %v2793 = vadd.f32 0.0, %v2792
      %v2794 = vpop.f32.mrb[0].mxu0
      %2795 = vmatprep.mubr.f32.mxu0 0.0
      %2796 = vmatmul.mubr.f32.gmra.mrb[0].mxu0 %v2615
      %v2797 = vpop.f32.mrb[0].mxu0
      %v2798 = vadd.f32 0.0, %v2797
      %v2799 = vpop.f32.mrb[0].mxu0
      %2800 = vmatprep.mubr.f32.mxu0 0.0
      %2801 = vmatmul.mubr.f32.gmra.mrb[0].mxu0 %v2618
      %v2802 = vpop.f32.mrb[0].mxu0
      %v2803 = vadd.f32 0.0, %v2802
      %v2804 = vpop.f32.mrb[0].mxu0
      %2805 = vmatprep.mubr.f32.mxu0 0.0
      %2806 = vmatmul.mubr.f32.gmra.mrb[0].mxu0 %v2621
      %v2807 = vpop.f32.mrb[0].mxu0
      %v2808 = vadd.f32 0.0, %v2807
      %v2809 = vpop.f32.mrb[0].mxu0
      %2810 = vmatprep.mubr.f32.mxu0 0.0
      %2811 = vmatmul.mubr.f32.gmra.mrb[0].mxu0 %v2624
      %v2812 = vpop.f32.mrb[0].mxu0
      %v2813 = vadd.f32 0.0, %v2812
      %v2814 = vpop.f32.mrb[0].mxu0
      %2815 = vmatprep.mubr.f32.mxu0 0.0
      %2816 = vmatmul.mubr.f32.gmra.mrb[0].mxu0 %v2627
      %v2817 = vpop.f32.mrb[0].mxu0
      %v2818 = vadd.f32 0.0, %v2817
      %v2819 = vpop.f32.mrb[0].mxu0
      %2820 = vmatprep.mubr.f32.mxu0 0.0
      %2821 = vmatmul.mubr.f32.gmra.mrb[0].mxu0 %v2630
      %v2822 = vpop.f32.mrb[0].mxu0
      %v2823 = vadd.f32 0.0, %v2822
      %v2824 = vpop.f32.mrb[0].mxu0
      %2825 = vmatprep.mubr.f32.mxu0 0.0
      %2826 = vmatmul.mubr.f32.gmra.mrb[0].mxu0 %v2633
      %v2827 = vpop.f32.mrb[0].mxu0
      %v2828 = vadd.f32 0.0, %v2827
      %v2829 = vpop.f32.mrb[0].mxu0
      %2830 = vmatprep.mubr.f32.mxu0 0.0
      %2831 = vmatmul.mubr.f32.gmra.mrb[0].mxu0 %v2636
      %v2832 = vpop.f32.mrb[0].mxu0
      %v2833 = vadd.f32 0.0, %v2832
      %v2834 = vpop.f32.mrb[0].mxu0
      %2835 = vmatprep.mubr.f32.mxu0 0.0
      %2836 = vmatmul.mubr.f32.gmra.mrb[0].mxu0 %v2639
      %v2837 = vpop.f32.mrb[0].mxu0
      %v2838 = vadd.f32 0.0, %v2837
      %v2839 = vpop.f32.mrb[0].mxu0
      %2840 = vmatprep.mubr.f32.mxu0 0.0
      %2841 = vmatmul.mubr.f32.gmra.mrb[0].mxu0 %v2642
      %v2842 = vpop.f32.mrb[0].mxu0
      %v2843 = vadd.f32 0.0, %v2842
      %v2844 = vpop.f32.mrb[0].mxu0
      %2845 = vmatprep.mubr.f32.mxu0 0.0
      %2846 = vmatmul.mubr.f32.gmra.mrb[0].mxu0 %v2645
      %v2847 = vpop.f32.mrb[0].mxu0
      %v2848 = vadd.f32 0.0, %v2847
      %v2849 = vpop.f32.mrb[0].mxu0
      %2850 = vmatprep.mubr.f32.mxu0 0.0
      %2851 = vmatmul.mubr.f32.gmra.mrb[0].mxu0 %v2648
      %v2852 = vpop.f32.mrb[0].mxu0
      %v2853 = vadd.f32 0.0, %v2852
      %v2854 = vpop.f32.mrb[0].mxu0
      %2855 = vmatprep.mubr.f32.mxu0 0.0
      %2856 = vmatmul.mubr.f32.gmra.mrb[0].mxu0 %v2651
      %v2857 = vpop.f32.mrb[0].mxu0
      %v2858 = vadd.f32 0.0, %v2857
      %v2859 = vpop.f32.mrb[0].mxu0
      %2860 = vmatprep.mubr.f32.mxu0 0.0
      %2861 = vmatmul.mubr.f32.gmra.mrb[0].mxu0 %v2654
      %v2862 = vpop.f32.mrb[0].mxu0
      %v2863 = vadd.f32 0.0, %v2862
      %v2864 = vpop.f32.mrb[0].mxu0
      %2865 = vmatprep.mubr.f32.mxu0 0.0
      %2866 = vmatmul.mubr.f32.gmra.mrb[0].mxu0 %v2657
      %v2867 = vpop.f32.mrb[0].mxu0
      %v2868 = vadd.f32 0.0, %v2867
      %v2869 = vpop.f32.mrb[0].mxu0
      %2870 = vmatprep.mubr.f32.mxu0 0.0
      %2871 = vmatmul.mubr.f32.gmra.mrb[0].mxu0 %v2660
      %v2872 = vpop.f32.mrb[0].mxu0
      %v2873 = vadd.f32 0.0, %v2872
      %v2874 = vpop.f32.mrb[0].mxu0
      %2875 = vmatprep.mubr.f32.mxu0 0.0
      %2876 = vmatmul.mubr.f32.gmra.mrb[0].mxu0 %v2663
      %v2877 = vpop.f32.mrb[0].mxu0
      %v2878 = vadd.f32 0.0, %v2877
      %v2879 = vpop.f32.mrb[0].mxu0
      %2880 = vmatprep.mubr.f32.mxu0 0.0
      %2881 = vmatmul.mubr.f32.gmra.mrb[0].mxu0 %v2666
      %v2882 = vpop.f32.mrb[0].mxu0
      %v2883 = vadd.f32 0.0, %v2882
      %v2884 = vpop.f32.mrb[0].mxu0
      %2885 = vmatprep.mubr.f32.mxu0 0.0
      %2886 = vmatmul.mubr.f32.gmra.mrb[0].mxu0 %v2669
      %v2887 = vpop.f32.mrb[0].mxu0
      %v2888 = vadd.f32 0.0, %v2887
      %v2889 = vpop.f32.mrb[0].mxu0
      %2890 = vmatprep.mubr.f32.mxu0 0.0
      %2891 = vmatmul.mubr.f32.gmra.mrb[0].mxu0 %v2672
      %v2892 = vpop.f32.mrb[0].mxu0
      %v2893 = vadd.f32 0.0, %v2892
      %v2894 = vpop.f32.mrb[0].mxu0
      %2895 = vmatprep.mubr.f32.mxu0 0.0
      %2896 = vmatmul.mubr.f32.gmra.mrb[0].mxu0 %v2675
      %v2897 = vpop.f32.mrb[0].mxu0
      %v2898 = vadd.f32 0.0, %v2897
      %v2899 = vpop.f32.mrb[0].mxu0
      %2900 = vmatprep.mubr.f32.mxu0 0.0
      %2901 = vmatmul.mubr.f32.gmra.mrb[0].mxu0 %v2678
      %v2902 = vpop.f32.mrb[0].mxu0
      %v2903 = vadd.f32 0.0, %v2902
      %v2904 = vpop.f32.mrb[0].mxu0
      %2905 = vmatprep.mubr.f32.mxu0 0.0
      %2906 = vmatmul.mubr.f32.gmra.mrb[0].mxu0 %v2681
      %v2907 = vpop.f32.mrb[0].mxu0
      %v2908 = vadd.f32 0.0, %v2907
      %v2909 = vpop.f32.mrb[0].mxu0
      %2910 = vdwg.mxu0
      %v2911 = vadd.f32 %v2518, %v2753
      %v2912 = vadd.f32 %v2519, %v2758
      %v2913 = vadd.f32 %v2520, %v2763
      %v2914 = vadd.f32 %v2521, %v2768
      %v2915 = vadd.f32 %v2522, %v2773
      %v2916 = vadd.f32 %v2523, %v2778
      %v2917 = vadd.f32 %v2524, %v2783
      %v2918 = vadd.f32 %v2525, %v2788
      %v2919 = vadd.f32 %v2526, %v2793
      %v2920 = vadd.f32 %v2527, %v2798
      %v2921 = vadd.f32 %v2528, %v2803
      %v2922 = vadd.f32 %v2529, %v2808
      %v2923 = vadd.f32 %v2530, %v2813
      %v2924 = vadd.f32 %v2531, %v2818
      %v2925 = vadd.f32 %v2532, %v2823
      %v2926 = vadd.f32 %v2533, %v2828
      %v2927 = vadd.f32 %v2534, %v2833
      %v2928 = vadd.f32 %v2535, %v2838
      %v2929 = vadd.f32 %v2536, %v2843
      %v2930 = vadd.f32 %v2537, %v2848
      %v2931 = vadd.f32 %v2538, %v2853
      %v2932 = vadd.f32 %v2539, %v2858
      %v2933 = vadd.f32 %v2540, %v2863
      %v2934 = vadd.f32 %v2541, %v2868
      %v2935 = vadd.f32 %v2542, %v2873
      %v2936 = vadd.f32 %v2543, %v2878
      %v2937 = vadd.f32 %v2544, %v2883
      %v2938 = vadd.f32 %v2545, %v2888
      %v2939 = vadd.f32 %v2546, %v2893
      %v2940 = vadd.f32 %v2547, %v2898
      %v2941 = vadd.f32 %v2548, %v2903
      %v2942 = vadd.f32 %v2549, %v2908
      %v2943 = vld [vmem:[%s2552 + $0x1] sm:$0xff]
      %v2944 = vld [vmem:[%s2552 + $0x9] sm:$0xff]
      %v2945 = vld [vmem:[%s2552 + $0x19] sm:$0xff]
      %v2946 = vld [vmem:[%s2552 + $0x21] sm:$0xff]
      %v2947 = vld [vmem:[%s2552 + $0x31] sm:$0xff]
      %v2948 = vld [vmem:[%s2552 + $0x39] sm:$0xff]
      %v2949 = vld [vmem:[%s2552 + $0x49] sm:$0xff]
      %v2950 = vld [vmem:[%s2552 + $0x51] sm:$0xff]
      %v2951 = vld [vmem:[%s2552 + $0x61] sm:$0xff]
      %v2952 = vld [vmem:[%s2552 + $0x69] sm:$0xff]
      %v2953 = vld [vmem:[%s2552 + $0x79] sm:$0xff]
      %v2954 = vld [vmem:[%s2552 + $0x81] sm:$0xff]
      %v2955 = vld [vmem:[%s2552 + $0x91] sm:$0xff]
      %v2956 = vld [vmem:[%s2552 + $0x99] sm:$0xff]
      %v2957 = vld [vmem:[%s2552 + $0xa9] sm:$0xff]
      %v2958 = vld [vmem:[%s2552 + $0xb1] sm:$0xff]
      %v2959 = vld [vmem:[%s2552 + $0xc1] sm:$0xff]
      %v2960 = vld [vmem:[%s2552 + $0xc9] sm:$0xff]
      %v2961 = vld [vmem:[%s2552 + $0xd9] sm:$0xff]
      %v2962 = vld [vmem:[%s2552 + $0xe1] sm:$0xff]
      %v2963 = vld [vmem:[%s2552 + $0xf1] sm:$0xff]
      %v2964 = vld [vmem:[%s2552 + $0xf9] sm:$0xff]
      %v2965 = vld [vmem:[%s2552 + $0x109] sm:$0xff]
      %v2966 = vld [vmem:[%s2552 + $0x111] sm:$0xff]
      %v2967 = vld [vmem:[%s2552 + $0x121] sm:$0xff]
      %v2968 = vld [vmem:[%s2552 + $0x129] sm:$0xff]
      %v2969 = vld [vmem:[%s2552 + $0x139] sm:$0xff]
      %v2970 = vld [vmem:[%s2552 + $0x141] sm:$0xff]
      %v2971 = vld [vmem:[%s2552 + $0x151] sm:$0xff]
      %v2972 = vld [vmem:[%s2552 + $0x159] sm:$0xff]
      %v2973 = vld [vmem:[%s2552 + $0x169] sm:$0xff]
      %v2974 = vld [vmem:[%s2552 + $0x171] sm:$0xff]
      %s2975 = scalar_lea.vmem %s1, 28
      %v2976 = vld [vmem:[%s2975] sm:$0xf]
      %v2978 = vsel %vm239, %v2943, 0
      %v2981 = vsel %vm239, %v2944, 0
      %v2984 = vsel %vm239, %v2945, 0
      %v2987 = vsel %vm239, %v2946, 0
      %v2990 = vsel %vm239, %v2947, 0
      %v2993 = vsel %vm239, %v2948, 0
      %v2996 = vsel %vm239, %v2949, 0
      %v2999 = vsel %vm239, %v2950, 0
      %v3002 = vsel %vm239, %v2951, 0
      %v3005 = vsel %vm239, %v2952, 0
      %v3008 = vsel %vm239, %v2953, 0
      %v3011 = vsel %vm239, %v2954, 0
      %v3014 = vsel %vm239, %v2955, 0
      %v3017 = vsel %vm239, %v2956, 0
      %v3020 = vsel %vm239, %v2957, 0
      %v3023 = vsel %vm239, %v2958, 0
      %v3026 = vsel %vm239, %v2959, 0
      %v3029 = vsel %vm239, %v2960, 0
      %v3032 = vsel %vm239, %v2961, 0
      %v3035 = vsel %vm239, %v2962, 0
      %v3038 = vsel %vm239, %v2963, 0
      %v3041 = vsel %vm239, %v2964, 0
      %v3044 = vsel %vm239, %v2965, 0
      %v3047 = vsel %vm239, %v2966, 0
      %v3050 = vsel %vm239, %v2967, 0
      %v3053 = vsel %vm239, %v2968, 0
      %v3056 = vsel %vm239, %v2969, 0
      %v3059 = vsel %vm239, %v2970, 0
      %v3062 = vsel %vm239, %v2971, 0
      %v3065 = vsel %vm239, %v2972, 0
      %v3068 = vsel %vm239, %v2973, 0
      %v3071 = vsel %vm239, %v2974, 0
      %v3074 = vsel %vm336, %v2976, 0
      %3076 = vmatprep.subr.mxu0 0.0
      %3077 = vmatpush1.msra.mxu0 %v3074
      %3078 = vmatprep.subr.mxu0 0.0
      %3079 = vmatpush1.msra.mxu0 0.0
      %3080 = vmatprep.subr.mxu0 0.0
      %3081 = vmatpush1.msra.mxu0 0.0
      %3082 = vmatprep.subr.mxu0 0.0
      %3083 = vmatpush1.msra.mxu0 0.0
      %3084 = vmatprep.subr.mxu0 0.0
      %3085 = vmatpush1.msra.mxu0 0.0
      %3086 = vmatprep.subr.mxu0 0.0
      %3087 = vmatpush1.msra.mxu0 0.0
      %3088 = vmatprep.subr.mxu0 0.0
      %3089 = vmatpush1.msra.mxu0 0.0
      %3090 = vmatprep.subr.mxu0 0.0
      %3091 = vmatpush1.msra.mxu0 0.0
      %3092 = vmatprep.subr.mxu0 0.0
      %3093 = vmatpush1.msra.mxu0 0.0
      %3094 = vmatprep.subr.mxu0 0.0
      %3095 = vmatpush1.msra.mxu0 0.0
      %3096 = vmatprep.subr.mxu0 0.0
      %3097 = vmatpush1.msra.mxu0 0.0
      %3098 = vmatprep.subr.mxu0 0.0
      %3099 = vmatpush1.msra.mxu0 0.0
      %3100 = vmatprep.subr.mxu0 0.0
      %3101 = vmatpush1.msra.mxu0 0.0
      %3102 = vmatprep.subr.mxu0 0.0
      %3103 = vmatpush1.msra.mxu0 0.0
      %3104 = vmatprep.subr.mxu0 0.0
      %3105 = vmatpush1.msra.mxu0 0.0
      %3106 = vmatprep.subr.mxu0 0.0
      %3107 = vmatpush1.msra.mxu0 0.0
      %3108 = vmatprep.subr.mxu0 0.0
      %3109 = vmatpush1.msra.mxu0 0.0
      %3110 = vmatprep.subr.mxu0 0.0
      %3111 = vmatpush1.msra.mxu0 0.0
      %3112 = vmatprep.subr.mxu0 0.0
      %3113 = vmatpush1.msra.mxu0 0.0
      %3114 = vmatprep.subr.mxu0 0.0
      %3115 = vmatpush1.msra.mxu0 0.0
      %3116 = vmatprep.subr.mxu0 0.0
      %3117 = vmatpush1.msra.mxu0 0.0
      %3118 = vmatprep.subr.mxu0 0.0
      %3119 = vmatpush1.msra.mxu0 0.0
      %3120 = vmatprep.subr.mxu0 0.0
      %3121 = vmatpush1.msra.mxu0 0.0
      %3122 = vmatprep.subr.mxu0 0.0
      %3123 = vmatpush1.msra.mxu0 0.0
      %3124 = vmatprep.subr.mxu0 0.0
      %3125 = vmatpush1.msra.mxu0 0.0
      %3126 = vmatprep.subr.mxu0 0.0
      %3127 = vmatpush1.msra.mxu0 0.0
      %3128 = vmatprep.subr.mxu0 0.0
      %3129 = vmatpush1.msra.mxu0 0.0
      %3130 = vmatprep.subr.mxu0 0.0
      %3131 = vmatpush1.msra.mxu0 0.0
      %3132 = vmatprep.subr.mxu0 0.0
      %3133 = vmatpush1.msra.mxu0 0.0
      %3134 = vmatprep.subr.mxu0 0.0
      %3135 = vmatpush1.msra.mxu0 0.0
      %3136 = vmatprep.subr.mxu0 0.0
      %3137 = vmatpush1.msra.mxu0 0.0
      %3138 = vmatprep.subr.mxu0 0.0
      %3139 = vmatpush1.msra.mxu0 0.0
      %3140 = vmatprep.mubr.f32.mxu0 0.0
      %3141 = vmatmul.mubr.f32.gmra.mrb[0].mxu0 %v2978
      %v3142 = vpop.f32.mrb[0].mxu0
      %v3143 = vadd.f32 0.0, %v3142
      %v3144 = vpop.f32.mrb[0].mxu0
      %3145 = vmatprep.mubr.f32.mxu0 0.0
      %3146 = vmatmul.mubr.f32.gmra.mrb[0].mxu0 %v2981
      %v3147 = vpop.f32.mrb[0].mxu0
      %v3148 = vadd.f32 0.0, %v3147
      %v3149 = vpop.f32.mrb[0].mxu0
      %3150 = vmatprep.mubr.f32.mxu0 0.0
      %3151 = vmatmul.mubr.f32.gmra.mrb[0].mxu0 %v2984
      %v3152 = vpop.f32.mrb[0].mxu0
      %v3153 = vadd.f32 0.0, %v3152
      %v3154 = vpop.f32.mrb[0].mxu0
      %3155 = vmatprep.mubr.f32.mxu0 0.0
      %3156 = vmatmul.mubr.f32.gmra.mrb[0].mxu0 %v2987
      %v3157 = vpop.f32.mrb[0].mxu0
      %v3158 = vadd.f32 0.0, %v3157
      %v3159 = vpop.f32.mrb[0].mxu0
      %3160 = vmatprep.mubr.f32.mxu0 0.0
      %3161 = vmatmul.mubr.f32.gmra.mrb[0].mxu0 %v2990
      %v3162 = vpop.f32.mrb[0].mxu0
      %v3163 = vadd.f32 0.0, %v3162
      %v3164 = vpop.f32.mrb[0].mxu0
      %3165 = vmatprep.mubr.f32.mxu0 0.0
      %3166 = vmatmul.mubr.f32.gmra.mrb[0].mxu0 %v2993
      %v3167 = vpop.f32.mrb[0].mxu0
      %v3168 = vadd.f32 0.0, %v3167
      %v3169 = vpop.f32.mrb[0].mxu0
      %3170 = vmatprep.mubr.f32.mxu0 0.0
      %3171 = vmatmul.mubr.f32.gmra.mrb[0].mxu0 %v2996
      %v3172 = vpop.f32.mrb[0].mxu0
      %v3173 = vadd.f32 0.0, %v3172
      %v3174 = vpop.f32.mrb[0].mxu0
      %3175 = vmatprep.mubr.f32.mxu0 0.0
      %3176 = vmatmul.mubr.f32.gmra.mrb[0].mxu0 %v2999
      %v3177 = vpop.f32.mrb[0].mxu0
      %v3178 = vadd.f32 0.0, %v3177
      %v3179 = vpop.f32.mrb[0].mxu0
      %3180 = vmatprep.mubr.f32.mxu0 0.0
      %3181 = vmatmul.mubr.f32.gmra.mrb[0].mxu0 %v3002
      %v3182 = vpop.f32.mrb[0].mxu0
      %v3183 = vadd.f32 0.0, %v3182
      %v3184 = vpop.f32.mrb[0].mxu0
      %3185 = vmatprep.mubr.f32.mxu0 0.0
      %3186 = vmatmul.mubr.f32.gmra.mrb[0].mxu0 %v3005
      %v3187 = vpop.f32.mrb[0].mxu0
      %v3188 = vadd.f32 0.0, %v3187
      %v3189 = vpop.f32.mrb[0].mxu0
      %3190 = vmatprep.mubr.f32.mxu0 0.0
      %3191 = vmatmul.mubr.f32.gmra.mrb[0].mxu0 %v3008
      %v3192 = vpop.f32.mrb[0].mxu0
      %v3193 = vadd.f32 0.0, %v3192
      %v3194 = vpop.f32.mrb[0].mxu0
      %3195 = vmatprep.mubr.f32.mxu0 0.0
      %3196 = vmatmul.mubr.f32.gmra.mrb[0].mxu0 %v3011
      %v3197 = vpop.f32.mrb[0].mxu0
      %v3198 = vadd.f32 0.0, %v3197
      %v3199 = vpop.f32.mrb[0].mxu0
      %3200 = vmatprep.mubr.f32.mxu0 0.0
      %3201 = vmatmul.mubr.f32.gmra.mrb[0].mxu0 %v3014
      %v3202 = vpop.f32.mrb[0].mxu0
      %v3203 = vadd.f32 0.0, %v3202
      %v3204 = vpop.f32.mrb[0].mxu0
      %3205 = vmatprep.mubr.f32.mxu0 0.0
      %3206 = vmatmul.mubr.f32.gmra.mrb[0].mxu0 %v3017
      %v3207 = vpop.f32.mrb[0].mxu0
      %v3208 = vadd.f32 0.0, %v3207
      %v3209 = vpop.f32.mrb[0].mxu0
      %3210 = vmatprep.mubr.f32.mxu0 0.0
      %3211 = vmatmul.mubr.f32.gmra.mrb[0].mxu0 %v3020
      %v3212 = vpop.f32.mrb[0].mxu0
      %v3213 = vadd.f32 0.0, %v3212
      %v3214 = vpop.f32.mrb[0].mxu0
      %3215 = vmatprep.mubr.f32.mxu0 0.0
      %3216 = vmatmul.mubr.f32.gmra.mrb[0].mxu0 %v3023
      %v3217 = vpop.f32.mrb[0].mxu0
      %v3218 = vadd.f32 0.0, %v3217
      %v3219 = vpop.f32.mrb[0].mxu0
      %3220 = vmatprep.mubr.f32.mxu0 0.0
      %3221 = vmatmul.mubr.f32.gmra.mrb[0].mxu0 %v3026
      %v3222 = vpop.f32.mrb[0].mxu0
      %v3223 = vadd.f32 0.0, %v3222
      %v3224 = vpop.f32.mrb[0].mxu0
      %3225 = vmatprep.mubr.f32.mxu0 0.0
      %3226 = vmatmul.mubr.f32.gmra.mrb[0].mxu0 %v3029
      %v3227 = vpop.f32.mrb[0].mxu0
      %v3228 = vadd.f32 0.0, %v3227
      %v3229 = vpop.f32.mrb[0].mxu0
      %3230 = vmatprep.mubr.f32.mxu0 0.0
      %3231 = vmatmul.mubr.f32.gmra.mrb[0].mxu0 %v3032
      %v3232 = vpop.f32.mrb[0].mxu0
      %v3233 = vadd.f32 0.0, %v3232
      %v3234 = vpop.f32.mrb[0].mxu0
      %3235 = vmatprep.mubr.f32.mxu0 0.0
      %3236 = vmatmul.mubr.f32.gmra.mrb[0].mxu0 %v3035
      %v3237 = vpop.f32.mrb[0].mxu0
      %v3238 = vadd.f32 0.0, %v3237
      %v3239 = vpop.f32.mrb[0].mxu0
      %3240 = vmatprep.mubr.f32.mxu0 0.0
      %3241 = vmatmul.mubr.f32.gmra.mrb[0].mxu0 %v3038
      %v3242 = vpop.f32.mrb[0].mxu0
      %v3243 = vadd.f32 0.0, %v3242
      %v3244 = vpop.f32.mrb[0].mxu0
      %3245 = vmatprep.mubr.f32.mxu0 0.0
      %3246 = vmatmul.mubr.f32.gmra.mrb[0].mxu0 %v3041
      %v3247 = vpop.f32.mrb[0].mxu0
      %v3248 = vadd.f32 0.0, %v3247
      %v3249 = vpop.f32.mrb[0].mxu0
      %3250 = vmatprep.mubr.f32.mxu0 0.0
      %3251 = vmatmul.mubr.f32.gmra.mrb[0].mxu0 %v3044
      %v3252 = vpop.f32.mrb[0].mxu0
      %v3253 = vadd.f32 0.0, %v3252
      %v3254 = vpop.f32.mrb[0].mxu0
      %3255 = vmatprep.mubr.f32.mxu0 0.0
      %3256 = vmatmul.mubr.f32.gmra.mrb[0].mxu0 %v3047
      %v3257 = vpop.f32.mrb[0].mxu0
      %v3258 = vadd.f32 0.0, %v3257
      %v3259 = vpop.f32.mrb[0].mxu0
      %3260 = vmatprep.mubr.f32.mxu0 0.0
      %3261 = vmatmul.mubr.f32.gmra.mrb[0].mxu0 %v3050
      %v3262 = vpop.f32.mrb[0].mxu0
      %v3263 = vadd.f32 0.0, %v3262
      %v3264 = vpop.f32.mrb[0].mxu0
      %3265 = vmatprep.mubr.f32.mxu0 0.0
      %3266 = vmatmul.mubr.f32.gmra.mrb[0].mxu0 %v3053
      %v3267 = vpop.f32.mrb[0].mxu0
      %v3268 = vadd.f32 0.0, %v3267
      %v3269 = vpop.f32.mrb[0].mxu0
      %3270 = vmatprep.mubr.f32.mxu0 0.0
      %3271 = vmatmul.mubr.f32.gmra.mrb[0].mxu0 %v3056
      %v3272 = vpop.f32.mrb[0].mxu0
      %v3273 = vadd.f32 0.0, %v3272
      %v3274 = vpop.f32.mrb[0].mxu0
      %3275 = vmatprep.mubr.f32.mxu0 0.0
      %3276 = vmatmul.mubr.f32.gmra.mrb[0].mxu0 %v3059
      %v3277 = vpop.f32.mrb[0].mxu0
      %v3278 = vadd.f32 0.0, %v3277
      %v3279 = vpop.f32.mrb[0].mxu0
      %3280 = vmatprep.mubr.f32.mxu0 0.0
      %3281 = vmatmul.mubr.f32.gmra.mrb[0].mxu0 %v3062
      %v3282 = vpop.f32.mrb[0].mxu0
      %v3283 = vadd.f32 0.0, %v3282
      %v3284 = vpop.f32.mrb[0].mxu0
      %3285 = vmatprep.mubr.f32.mxu0 0.0
      %3286 = vmatmul.mubr.f32.gmra.mrb[0].mxu0 %v3065
      %v3287 = vpop.f32.mrb[0].mxu0
      %v3288 = vadd.f32 0.0, %v3287
      %v3289 = vpop.f32.mrb[0].mxu0
      %3290 = vmatprep.mubr.f32.mxu0 0.0
      %3291 = vmatmul.mubr.f32.gmra.mrb[0].mxu0 %v3068
      %v3292 = vpop.f32.mrb[0].mxu0
      %v3293 = vadd.f32 0.0, %v3292
      %v3294 = vpop.f32.mrb[0].mxu0
      %3295 = vmatprep.mubr.f32.mxu0 0.0
      %3296 = vmatmul.mubr.f32.gmra.mrb[0].mxu0 %v3071
      %v3297 = vpop.f32.mrb[0].mxu0
      %v3298 = vadd.f32 0.0, %v3297
      %v3299 = vpop.f32.mrb[0].mxu0
      %3300 = vdwg.mxu0
      %v3301 = vadd.f32 %v2911, %v3143
      %v3302 = vadd.f32 %v2912, %v3148
      %v3303 = vadd.f32 %v2913, %v3153
      %v3304 = vadd.f32 %v2914, %v3158
      %v3305 = vadd.f32 %v2915, %v3163
      %v3306 = vadd.f32 %v2916, %v3168
      %v3307 = vadd.f32 %v2917, %v3173
      %v3308 = vadd.f32 %v2918, %v3178
      %v3309 = vadd.f32 %v2919, %v3183
      %v3310 = vadd.f32 %v2920, %v3188
      %v3311 = vadd.f32 %v2921, %v3193
      %v3312 = vadd.f32 %v2922, %v3198
      %v3313 = vadd.f32 %v2923, %v3203
      %v3314 = vadd.f32 %v2924, %v3208
      %v3315 = vadd.f32 %v2925, %v3213
      %v3316 = vadd.f32 %v2926, %v3218
      %v3317 = vadd.f32 %v2927, %v3223
      %v3318 = vadd.f32 %v2928, %v3228
      %v3319 = vadd.f32 %v2929, %v3233
      %v3320 = vadd.f32 %v2930, %v3238
      %v3321 = vadd.f32 %v2931, %v3243
      %v3322 = vadd.f32 %v2932, %v3248
      %v3323 = vadd.f32 %v2933, %v3253
      %v3324 = vadd.f32 %v2934, %v3258
      %v3325 = vadd.f32 %v2935, %v3263
      %v3326 = vadd.f32 %v2936, %v3268
      %v3327 = vadd.f32 %v2937, %v3273
      %v3328 = vadd.f32 %v2938, %v3278
      %v3329 = vadd.f32 %v2939, %v3283
      %v3330 = vadd.f32 %v2940, %v3288
      %v3331 = vadd.f32 %v2941, %v3293
      %v3332 = vadd.f32 %v2942, %v3298
      %v3333 = vld [vmem:[%s2552 + $0x2] sm:$0xff]
      %v3334 = vld [vmem:[%s2552 + $0xa] sm:$0xff]
      %v3335 = vld [vmem:[%s2552 + $0x1a] sm:$0xff]
      %v3336 = vld [vmem:[%s2552 + $0x22] sm:$0xff]
      %v3337 = vld [vmem:[%s2552 + $0x32] sm:$0xff]
      %v3338 = vld [vmem:[%s2552 + $0x3a] sm:$0xff]
      %v3339 = vld [vmem:[%s2552 + $0x4a] sm:$0xff]
      %v3340 = vld [vmem:[%s2552 + $0x52] sm:$0xff]
      %v3341 = vld [vmem:[%s2552 + $0x62] sm:$0xff]
      %v3342 = vld [vmem:[%s2552 + $0x6a] sm:$0xff]
      %v3343 = vld [vmem:[%s2552 + $0x7a] sm:$0xff]
      %v3344 = vld [vmem:[%s2552 + $0x82] sm:$0xff]
      %v3345 = vld [vmem:[%s2552 + $0x92] sm:$0xff]
      %v3346 = vld [vmem:[%s2552 + $0x9a] sm:$0xff]
      %v3347 = vld [vmem:[%s2552 + $0xaa] sm:$0xff]
      %v3348 = vld [vmem:[%s2552 + $0xb2] sm:$0xff]
      %v3349 = vld [vmem:[%s2552 + $0xc2] sm:$0xff]
      %v3350 = vld [vmem:[%s2552 + $0xca] sm:$0xff]
      %v3351 = vld [vmem:[%s2552 + $0xda] sm:$0xff]
      %v3352 = vld [vmem:[%s2552 + $0xe2] sm:$0xff]
      %v3353 = vld [vmem:[%s2552 + $0xf2] sm:$0xff]
      %v3354 = vld [vmem:[%s2552 + $0xfa] sm:$0xff]
      %v3355 = vld [vmem:[%s2552 + $0x10a] sm:$0xff]
      %v3356 = vld [vmem:[%s2552 + $0x112] sm:$0xff]
      %v3357 = vld [vmem:[%s2552 + $0x122] sm:$0xff]
      %v3358 = vld [vmem:[%s2552 + $0x12a] sm:$0xff]
      %v3359 = vld [vmem:[%s2552 + $0x13a] sm:$0xff]
      %v3360 = vld [vmem:[%s2552 + $0x142] sm:$0xff]
      %v3361 = vld [vmem:[%s2552 + $0x152] sm:$0xff]
      %v3362 = vld [vmem:[%s2552 + $0x15a] sm:$0xff]
      %v3363 = vld [vmem:[%s2552 + $0x16a] sm:$0xff]
      %v3364 = vld [vmem:[%s2552 + $0x172] sm:$0xff]
      %s3365 = scalar_lea.vmem %s1, 32
      %v3366 = vld [vmem:[%s3365] sm:$0xf]
      %v3368 = vsel %vm239, %v3333, 0
      %v3371 = vsel %vm239, %v3334, 0
      %v3374 = vsel %vm239, %v3335, 0
      %v3377 = vsel %vm239, %v3336, 0
      %v3380 = vsel %vm239, %v3337, 0
      %v3383 = vsel %vm239, %v3338, 0
      %v3386 = vsel %vm239, %v3339, 0
      %v3389 = vsel %vm239, %v3340, 0
      %v3392 = vsel %vm239, %v3341, 0
      %v3395 = vsel %vm239, %v3342, 0
      %v3398 = vsel %vm239, %v3343, 0
      %v3401 = vsel %vm239, %v3344, 0
      %v3404 = vsel %vm239, %v3345, 0
      %v3407 = vsel %vm239, %v3346, 0
      %v3410 = vsel %vm239, %v3347, 0
      %v3413 = vsel %vm239, %v3348, 0
      %v3416 = vsel %vm239, %v3349, 0
      %v3419 = vsel %vm239, %v3350, 0
      %v3422 = vsel %vm239, %v3351, 0
      %v3425 = vsel %vm239, %v3352, 0
      %v3428 = vsel %vm239, %v3353, 0
      %v3431 = vsel %vm239, %v3354, 0
      %v3434 = vsel %vm239, %v3355, 0
      %v3437 = vsel %vm239, %v3356, 0
      %v3440 = vsel %vm239, %v3357, 0
      %v3443 = vsel %vm239, %v3358, 0
      %v3446 = vsel %vm239, %v3359, 0
      %v3449 = vsel %vm239, %v3360, 0
      %v3452 = vsel %vm239, %v3361, 0
      %v3455 = vsel %vm239, %v3362, 0
      %v3458 = vsel %vm239, %v3363, 0
      %v3461 = vsel %vm239, %v3364, 0
      %v3464 = vsel %vm336, %v3366, 0
      %3466 = vmatprep.subr.mxu0 0.0
      %3467 = vmatpush1.msra.mxu0 %v3464
      %3468 = vmatprep.subr.mxu0 0.0
      %3469 = vmatpush1.msra.mxu0 0.0
      %3470 = vmatprep.subr.mxu0 0.0
      %3471 = vmatpush1.msra.mxu0 0.0
      %3472 = vmatprep.subr.mxu0 0.0
      %3473 = vmatpush1.msra.mxu0 0.0
      %3474 = vmatprep.subr.mxu0 0.0
      %3475 = vmatpush1.msra.mxu0 0.0
      %3476 = vmatprep.subr.mxu0 0.0
      %3477 = vmatpush1.msra.mxu0 0.0
      %3478 = vmatprep.subr.mxu0 0.0
      %3479 = vmatpush1.msra.mxu0 0.0
      %3480 = vmatprep.subr.mxu0 0.0
      %3481 = vmatpush1.msra.mxu0 0.0
      %3482 = vmatprep.subr.mxu0 0.0
      %3483 = vmatpush1.msra.mxu0 0.0
      %3484 = vmatprep.subr.mxu0 0.0
      %3485 = vmatpush1.msra.mxu0 0.0
      %3486 = vmatprep.subr.mxu0 0.0
      %3487 = vmatpush1.msra.mxu0 0.0
      %3488 = vmatprep.subr.mxu0 0.0
      %3489 = vmatpush1.msra.mxu0 0.0
      %3490 = vmatprep.subr.mxu0 0.0
      %3491 = vmatpush1.msra.mxu0 0.0
      %3492 = vmatprep.subr.mxu0 0.0
      %3493 = vmatpush1.msra.mxu0 0.0
      %3494 = vmatprep.subr.mxu0 0.0
      %3495 = vmatpush1.msra.mxu0 0.0
      %3496 = vmatprep.subr.mxu0 0.0
      %3497 = vmatpush1.msra.mxu0 0.0
      %3498 = vmatprep.subr.mxu0 0.0
      %3499 = vmatpush1.msra.mxu0 0.0
      %3500 = vmatprep.subr.mxu0 0.0
      %3501 = vmatpush1.msra.mxu0 0.0
      %3502 = vmatprep.subr.mxu0 0.0
      %3503 = vmatpush1.msra.mxu0 0.0
      %3504 = vmatprep.subr.mxu0 0.0
      %3505 = vmatpush1.msra.mxu0 0.0
      %3506 = vmatprep.subr.mxu0 0.0
      %3507 = vmatpush1.msra.mxu0 0.0
      %3508 = vmatprep.subr.mxu0 0.0
      %3509 = vmatpush1.msra.mxu0 0.0
      %3510 = vmatprep.subr.mxu0 0.0
      %3511 = vmatpush1.msra.mxu0 0.0
      %3512 = vmatprep.subr.mxu0 0.0
      %3513 = vmatpush1.msra.mxu0 0.0
      %3514 = vmatprep.subr.mxu0 0.0
      %3515 = vmatpush1.msra.mxu0 0.0
      %3516 = vmatprep.subr.mxu0 0.0
      %3517 = vmatpush1.msra.mxu0 0.0
      %3518 = vmatprep.subr.mxu0 0.0
      %3519 = vmatpush1.msra.mxu0 0.0
      %3520 = vmatprep.subr.mxu0 0.0
      %3521 = vmatpush1.msra.mxu0 0.0
      %3522 = vmatprep.subr.mxu0 0.0
      %3523 = vmatpush1.msra.mxu0 0.0
      %3524 = vmatprep.subr.mxu0 0.0
      %3525 = vmatpush1.msra.mxu0 0.0
      %3526 = vmatprep.subr.mxu0 0.0
      %3527 = vmatpush1.msra.mxu0 0.0
      %3528 = vmatprep.subr.mxu0 0.0
      %3529 = vmatpush1.msra.mxu0 0.0
      %3530 = vmatprep.mubr.f32.mxu0 0.0
      %3531 = vmatmul.mubr.f32.gmra.mrb[0].mxu0 %v3368
      %v3532 = vpop.f32.mrb[0].mxu0
      %v3533 = vadd.f32 0.0, %v3532
      %v3534 = vpop.f32.mrb[0].mxu0
      %3535 = vmatprep.mubr.f32.mxu0 0.0
      %3536 = vmatmul.mubr.f32.gmra.mrb[0].mxu0 %v3371
      %v3537 = vpop.f32.mrb[0].mxu0
      %v3538 = vadd.f32 0.0, %v3537
      %v3539 = vpop.f32.mrb[0].mxu0
      %3540 = vmatprep.mubr.f32.mxu0 0.0
      %3541 = vmatmul.mubr.f32.gmra.mrb[0].mxu0 %v3374
      %v3542 = vpop.f32.mrb[0].mxu0
      %v3543 = vadd.f32 0.0, %v3542
      %v3544 = vpop.f32.mrb[0].mxu0
      %3545 = vmatprep.mubr.f32.mxu0 0.0
      %3546 = vmatmul.mubr.f32.gmra.mrb[0].mxu0 %v3377
      %v3547 = vpop.f32.mrb[0].mxu0
      %v3548 = vadd.f32 0.0, %v3547
      %v3549 = vpop.f32.mrb[0].mxu0
      %3550 = vmatprep.mubr.f32.mxu0 0.0
      %3551 = vmatmul.mubr.f32.gmra.mrb[0].mxu0 %v3380
      %v3552 = vpop.f32.mrb[0].mxu0
      %v3553 = vadd.f32 0.0, %v3552
      %v3554 = vpop.f32.mrb[0].mxu0
      %3555 = vmatprep.mubr.f32.mxu0 0.0
      %3556 = vmatmul.mubr.f32.gmra.mrb[0].mxu0 %v3383
      %v3557 = vpop.f32.mrb[0].mxu0
      %v3558 = vadd.f32 0.0, %v3557
      %v3559 = vpop.f32.mrb[0].mxu0
      %3560 = vmatprep.mubr.f32.mxu0 0.0
      %3561 = vmatmul.mubr.f32.gmra.mrb[0].mxu0 %v3386
      %v3562 = vpop.f32.mrb[0].mxu0
      %v3563 = vadd.f32 0.0, %v3562
      %v3564 = vpop.f32.mrb[0].mxu0
      %3565 = vmatprep.mubr.f32.mxu0 0.0
      %3566 = vmatmul.mubr.f32.gmra.mrb[0].mxu0 %v3389
      %v3567 = vpop.f32.mrb[0].mxu0
      %v3568 = vadd.f32 0.0, %v3567
      %v3569 = vpop.f32.mrb[0].mxu0
      %3570 = vmatprep.mubr.f32.mxu0 0.0
      %3571 = vmatmul.mubr.f32.gmra.mrb[0].mxu0 %v3392
      %v3572 = vpop.f32.mrb[0].mxu0
      %v3573 = vadd.f32 0.0, %v3572
      %v3574 = vpop.f32.mrb[0].mxu0
      %3575 = vmatprep.mubr.f32.mxu0 0.0
      %3576 = vmatmul.mubr.f32.gmra.mrb[0].mxu0 %v3395
      %v3577 = vpop.f32.mrb[0].mxu0
      %v3578 = vadd.f32 0.0, %v3577
      %v3579 = vpop.f32.mrb[0].mxu0
      %3580 = vmatprep.mubr.f32.mxu0 0.0
      %3581 = vmatmul.mubr.f32.gmra.mrb[0].mxu0 %v3398
      %v3582 = vpop.f32.mrb[0].mxu0
      %v3583 = vadd.f32 0.0, %v3582
      %v3584 = vpop.f32.mrb[0].mxu0
      %3585 = vmatprep.mubr.f32.mxu0 0.0
      %3586 = vmatmul.mubr.f32.gmra.mrb[0].mxu0 %v3401
      %v3587 = vpop.f32.mrb[0].mxu0
      %v3588 = vadd.f32 0.0, %v3587
      %v3589 = vpop.f32.mrb[0].mxu0
      %3590 = vmatprep.mubr.f32.mxu0 0.0
      %3591 = vmatmul.mubr.f32.gmra.mrb[0].mxu0 %v3404
      %v3592 = vpop.f32.mrb[0].mxu0
      %v3593 = vadd.f32 0.0, %v3592
      %v3594 = vpop.f32.mrb[0].mxu0
      %3595 = vmatprep.mubr.f32.mxu0 0.0
      %3596 = vmatmul.mubr.f32.gmra.mrb[0].mxu0 %v3407
      %v3597 = vpop.f32.mrb[0].mxu0
      %v3598 = vadd.f32 0.0, %v3597
      %v3599 = vpop.f32.mrb[0].mxu0
      %3600 = vmatprep.mubr.f32.mxu0 0.0
      %3601 = vmatmul.mubr.f32.gmra.mrb[0].mxu0 %v3410
      %v3602 = vpop.f32.mrb[0].mxu0
      %v3603 = vadd.f32 0.0, %v3602
      %v3604 = vpop.f32.mrb[0].mxu0
      %3605 = vmatprep.mubr.f32.mxu0 0.0
      %3606 = vmatmul.mubr.f32.gmra.mrb[0].mxu0 %v3413
      %v3607 = vpop.f32.mrb[0].mxu0
      %v3608 = vadd.f32 0.0, %v3607
      %v3609 = vpop.f32.mrb[0].mxu0
      %3610 = vmatprep.mubr.f32.mxu0 0.0
      %3611 = vmatmul.mubr.f32.gmra.mrb[0].mxu0 %v3416
      %v3612 = vpop.f32.mrb[0].mxu0
      %v3613 = vadd.f32 0.0, %v3612
      %v3614 = vpop.f32.mrb[0].mxu0
      %3615 = vmatprep.mubr.f32.mxu0 0.0
      %3616 = vmatmul.mubr.f32.gmra.mrb[0].mxu0 %v3419
      %v3617 = vpop.f32.mrb[0].mxu0
      %v3618 = vadd.f32 0.0, %v3617
      %v3619 = vpop.f32.mrb[0].mxu0
      %3620 = vmatprep.mubr.f32.mxu0 0.0
      %3621 = vmatmul.mubr.f32.gmra.mrb[0].mxu0 %v3422
      %v3622 = vpop.f32.mrb[0].mxu0
      %v3623 = vadd.f32 0.0, %v3622
      %v3624 = vpop.f32.mrb[0].mxu0
      %3625 = vmatprep.mubr.f32.mxu0 0.0
      %3626 = vmatmul.mubr.f32.gmra.mrb[0].mxu0 %v3425
      %v3627 = vpop.f32.mrb[0].mxu0
      %v3628 = vadd.f32 0.0, %v3627
      %v3629 = vpop.f32.mrb[0].mxu0
      %3630 = vmatprep.mubr.f32.mxu0 0.0
      %3631 = vmatmul.mubr.f32.gmra.mrb[0].mxu0 %v3428
      %v3632 = vpop.f32.mrb[0].mxu0
      %v3633 = vadd.f32 0.0, %v3632
      %v3634 = vpop.f32.mrb[0].mxu0
      %3635 = vmatprep.mubr.f32.mxu0 0.0
      %3636 = vmatmul.mubr.f32.gmra.mrb[0].mxu0 %v3431
      %v3637 = vpop.f32.mrb[0].mxu0
      %v3638 = vadd.f32 0.0, %v3637
      %v3639 = vpop.f32.mrb[0].mxu0
      %3640 = vmatprep.mubr.f32.mxu0 0.0
      %3641 = vmatmul.mubr.f32.gmra.mrb[0].mxu0 %v3434
      %v3642 = vpop.f32.mrb[0].mxu0
      %v3643 = vadd.f32 0.0, %v3642
      %v3644 = vpop.f32.mrb[0].mxu0
      %3645 = vmatprep.mubr.f32.mxu0 0.0
      %3646 = vmatmul.mubr.f32.gmra.mrb[0].mxu0 %v3437
      %v3647 = vpop.f32.mrb[0].mxu0
      %v3648 = vadd.f32 0.0, %v3647
      %v3649 = vpop.f32.mrb[0].mxu0
      %3650 = vmatprep.mubr.f32.mxu0 0.0
      %3651 = vmatmul.mubr.f32.gmra.mrb[0].mxu0 %v3440
      %v3652 = vpop.f32.mrb[0].mxu0
      %v3653 = vadd.f32 0.0, %v3652
      %v3654 = vpop.f32.mrb[0].mxu0
      %3655 = vmatprep.mubr.f32.mxu0 0.0
      %3656 = vmatmul.mubr.f32.gmra.mrb[0].mxu0 %v3443
      %v3657 = vpop.f32.mrb[0].mxu0
      %v3658 = vadd.f32 0.0, %v3657
      %v3659 = vpop.f32.mrb[0].mxu0
      %3660 = vmatprep.mubr.f32.mxu0 0.0
      %3661 = vmatmul.mubr.f32.gmra.mrb[0].mxu0 %v3446
      %v3662 = vpop.f32.mrb[0].mxu0
      %v3663 = vadd.f32 0.0, %v3662
      %v3664 = vpop.f32.mrb[0].mxu0
      %3665 = vmatprep.mubr.f32.mxu0 0.0
      %3666 = vmatmul.mubr.f32.gmra.mrb[0].mxu0 %v3449
      %v3667 = vpop.f32.mrb[0].mxu0
      %v3668 = vadd.f32 0.0, %v3667
      %v3669 = vpop.f32.mrb[0].mxu0
      %3670 = vmatprep.mubr.f32.mxu0 0.0
      %3671 = vmatmul.mubr.f32.gmra.mrb[0].mxu0 %v3452
      %v3672 = vpop.f32.mrb[0].mxu0
      %v3673 = vadd.f32 0.0, %v3672
      %v3674 = vpop.f32.mrb[0].mxu0
      %3675 = vmatprep.mubr.f32.mxu0 0.0
      %3676 = vmatmul.mubr.f32.gmra.mrb[0].mxu0 %v3455
      %v3677 = vpop.f32.mrb[0].mxu0
      %v3678 = vadd.f32 0.0, %v3677
      %v3679 = vpop.f32.mrb[0].mxu0
      %3680 = vmatprep.mubr.f32.mxu0 0.0
      %3681 = vmatmul.mubr.f32.gmra.mrb[0].mxu0 %v3458
      %v3682 = vpop.f32.mrb[0].mxu0
      %v3683 = vadd.f32 0.0, %v3682
      %v3684 = vpop.f32.mrb[0].mxu0
      %3685 = vmatprep.mubr.f32.mxu0 0.0
      %3686 = vmatmul.mubr.f32.gmra.mrb[0].mxu0 %v3461
      %v3687 = vpop.f32.mrb[0].mxu0
      %v3688 = vadd.f32 0.0, %v3687
      %v3689 = vpop.f32.mrb[0].mxu0
      %3690 = vdwg.mxu0
      %v3691 = vadd.f32 %v3301, %v3533
      %v3692 = vadd.f32 %v3302, %v3538
      %v3693 = vadd.f32 %v3303, %v3543
      %v3694 = vadd.f32 %v3304, %v3548
      %v3695 = vadd.f32 %v3305, %v3553
      %v3696 = vadd.f32 %v3306, %v3558
      %v3697 = vadd.f32 %v3307, %v3563
      %v3698 = vadd.f32 %v3308, %v3568
      %v3699 = vadd.f32 %v3309, %v3573
      %v3700 = vadd.f32 %v3310, %v3578
      %v3701 = vadd.f32 %v3311, %v3583
      %v3702 = vadd.f32 %v3312, %v3588
      %v3703 = vadd.f32 %v3313, %v3593
      %v3704 = vadd.f32 %v3314, %v3598
      %v3705 = vadd.f32 %v3315, %v3603
      %v3706 = vadd.f32 %v3316, %v3608
      %v3707 = vadd.f32 %v3317, %v3613
      %v3708 = vadd.f32 %v3318, %v3618
      %v3709 = vadd.f32 %v3319, %v3623
      %v3710 = vadd.f32 %v3320, %v3628
      %v3711 = vadd.f32 %v3321, %v3633
      %v3712 = vadd.f32 %v3322, %v3638
      %v3713 = vadd.f32 %v3323, %v3643
      %v3714 = vadd.f32 %v3324, %v3648
      %v3715 = vadd.f32 %v3325, %v3653
      %v3716 = vadd.f32 %v3326, %v3658
      %v3717 = vadd.f32 %v3327, %v3663
      %v3718 = vadd.f32 %v3328, %v3668
      %v3719 = vadd.f32 %v3329, %v3673
      %v3720 = vadd.f32 %v3330, %v3678
      %v3721 = vadd.f32 %v3331, %v3683
      %v3722 = vadd.f32 %v3332, %v3688
      %3723 = vst [vmem:[%s194] sm:$0xff] %v3691
      %3724 = vst [vmem:[%s194 + $0x8] sm:$0xff] %v3692
      %3725 = vst [vmem:[%s194 + $0x10] sm:$0xff] %v3693
      %3726 = vst [vmem:[%s194 + $0x18] sm:$0xff] %v3694
      %3727 = vst [vmem:[%s194 + $0x20] sm:$0xff] %v3695
      %3728 = vst [vmem:[%s194 + $0x28] sm:$0xff] %v3696
      %3729 = vst [vmem:[%s194 + $0x30] sm:$0xff] %v3697
      %3730 = vst [vmem:[%s194 + $0x38] sm:$0xff] %v3698
      %3731 = vst [vmem:[%s194 + $0x40] sm:$0xff] %v3699
      %3732 = vst [vmem:[%s194 + $0x48] sm:$0xff] %v3700
      %3733 = vst [vmem:[%s194 + $0x50] sm:$0xff] %v3701
      %3734 = vst [vmem:[%s194 + $0x58] sm:$0xff] %v3702
      %3735 = vst [vmem:[%s194 + $0x60] sm:$0xff] %v3703
      %3736 = vst [vmem:[%s194 + $0x68] sm:$0xff] %v3704
      %3737 = vst [vmem:[%s194 + $0x70] sm:$0xff] %v3705
      %3738 = vst [vmem:[%s194 + $0x78] sm:$0xff] %v3706
      %3739 = vst [vmem:[%s194 + $0x80] sm:$0xff] %v3707
      %3740 = vst [vmem:[%s194 + $0x88] sm:$0xff] %v3708
      %3741 = vst [vmem:[%s194 + $0x90] sm:$0xff] %v3709
      %3742 = vst [vmem:[%s194 + $0x98] sm:$0xff] %v3710
      %3743 = vst [vmem:[%s194 + $0xa0] sm:$0xff] %v3711
      %3744 = vst [vmem:[%s194 + $0xa8] sm:$0xff] %v3712
      %3745 = vst [vmem:[%s194 + $0xb0] sm:$0xff] %v3713
      %3746 = vst [vmem:[%s194 + $0xb8] sm:$0xff] %v3714
      %3747 = vst [vmem:[%s194 + $0xc0] sm:$0xff] %v3715
      %3748 = vst [vmem:[%s194 + $0xc8] sm:$0xff] %v3716
      %3749 = vst [vmem:[%s194 + $0xd0] sm:$0xff] %v3717
      %3750 = vst [vmem:[%s194 + $0xd8] sm:$0xff] %v3718
      %3751 = vst [vmem:[%s194 + $0xe0] sm:$0xff] %v3719
      %3752 = vst [vmem:[%s194 + $0xe8] sm:$0xff] %v3720
      %3753 = vst [vmem:[%s194 + $0xf0] sm:$0xff] %v3721
      %3754 = vst [vmem:[%s194 + $0xf8] sm:$0xff] %v3722
      %s3755 = smul.u32 16, %s19
      %p3756 = scmp.lt.s32.totalorder %s18, 1
      %s3757 = scalar_select %p3756, %s18, 1
      %p3758 = scmp.lt.s32.totalorder %s3755, 15
      %s3759 = scalar_select %p3758, %s3755, 15
      %s3760 = smul.addr %s3759, 2
      %s3761 = smul.addr %s3757, 32
      %s3762 = sadd.s32 %s3760, %s3761
      %s3763 = smul.addr %s3762, 8
      %s3764 = scalar_lea.vmem %s3, %s3763
      // Predicated region
      $region33: #{_equal_conv2d_forward.1} parent=31 // pred_check
        %p3765 = pneg %p114
      $region34: #{_equal_conv2d_forward.1} parent=31 // pred_check_branch
        %3767 = sbr.rel (%p3765) target = $region36
      $region35: #{_equal_conv2d_forward.1} parent=31 // pred_region
        %s3768 = smul.u32 16, %s19
      $region36: #{_equal_conv2d_forward.1} parent=31 // pred_fallthru
        _
    $region32: #{_equal_conv2d_forward.1} parent=5 // pred_fallthru
      _
    %p3769 = scmp.le.s32.totalorder 2, %s9
    // Predicated region
    $region37: #{_equal_conv2d_forward.1} parent=5 // pred_check
      %p3770 = pneg %p3769
    $region38: #{_equal_conv2d_forward.1} parent=5 // pred_check_branch
      %3772 = sbr.rel (%p3770) target = $region40
    $region39: #{_equal_conv2d_forward.1} parent=5 // pred_region
      %s3773 = ssub.s32 %s9, 2
      // Predicated region
      $region41: #{_equal_conv2d_forward.1} parent=39 // pred_check
        %p3774 = pneg %p120
      $region42: #{_equal_conv2d_forward.1} parent=39 // pred_check_branch
        %3776 = sbr.rel (%p3774) target = $region44
      $region43: #{_equal_conv2d_forward.1} parent=39 // pred_region
        %s3777 = smul.u32 16, %s21
        %p3778 = scmp.lt.s32.totalorder %s20, 1
        %s3779 = scalar_select %p3778, %s20, 1
        %p3780 = scmp.lt.s32.totalorder %s3777, 15
        %s3781 = scalar_select %p3780, %s3777, 15
        %s3782 = smul.addr %s3781, 2
        %s3783 = smul.addr %s3779, 32
        %s3784 = sadd.s32 %s3782, %s3783
        %s3785 = smul.addr %s3784, 8
        %s3786 = scalar_lea.vmem %s3, %s3785
      $region44: #{_equal_conv2d_forward.1} parent=39 // pred_fallthru
        _
    $region40: #{_equal_conv2d_forward.1} parent=5 // pred_fallthru
      _
  $region6: #{_equal_conv2d_forward.1} parent=0 // loop_footer
    %s13 = sadd.s32 1, %s9
  $region7: #{_equal_conv2d_forward.1} parent=0 // loop_footer_branch
    %8 = sbr.rel target = $region3
  $region8: #{_equal_conv2d_forward.1} parent=0 // loop_exit
    _

</llo_original>
